<compile_context>
chip_gen: v6e
topology: v6e:2x2x1
jax: 0.10.0
libtpu: 0.0.40
codegen_flags: <defaults>
</compile_context>

<pallas_src>
import jax
import jax.numpy as jnp
from jax.experimental import pallas as pl
from jax.experimental.pallas import tpu as pltpu

INPUT_SIZE = 26
LSTM_HIDDEN = 64
LSTM_LAYER = 2
OUTPUT_SIZE = 1

H = LSTM_HIDDEN          # real hidden size
HP = 128                 # lane-padded hidden size (one 128-lane block per gate)
OUT_PAD = 128            # lane-padded classifier output width

# Kernel gate layout is [i | f | o | g]; original (PyTorch) layout is (i, f, g, o).
GATE_ORDER = (0, 1, 3, 2)


def lstm_kernel(x_ref, wih0_ref, whh0_ref, b0_ref, wih1_ref, whh1_ref,
                b1_ref, wc_ref, bc_ref, out_ref, xproj_ref):
    TB = x_ref.shape[0]            # T * B_pad (time-major, batch inner)
    B = out_ref.shape[0]           # padded batch (multiple of 8)
    T = TB // B
    Hp = whh0_ref.shape[0]         # 128
    G = 4 * Hp

    # (1) Layer-0 input projection for ALL timesteps as one tall matmul
    #     (T*B, I) @ (I, 4*Hp) + bias into VMEM scratch (no recurrence in it).
    xproj_ref[...] = (
        jnp.dot(x_ref[...], wih0_ref[...], preferred_element_type=jnp.float32)
        + b0_ref[...])

    # (2) Hoist the layer-1 bias broadcast above the (unrolled) time loop —
    #     JAX does not CSE broadcast_in_dim inside loops.
    b1b = jnp.broadcast_to(b1_ref[...], (B, G))

    def gates_to_hc(g, c):
        # Gate layout [i|f|o|g]: one batched sigmoid over the first 3 lane
        # blocks + one tanh -> 3 transcendental launches per cell instead of 5.
        s = jax.nn.sigmoid(g[:, :3 * Hp])
        i_g = s[:, 0 * Hp:1 * Hp]
        f_g = s[:, 1 * Hp:2 * Hp]
        o_g = s[:, 2 * Hp:3 * Hp]
        g_g = jnp.tanh(g[:, 3 * Hp:])
        c_new = f_g * c + i_g * g_g
        h_new = o_g * jnp.tanh(c_new)
        return h_new, c_new

    def step(t, carry):
        h0, c0, h1, c1 = carry
        # Layer 0: only the recurrent matmul remains (input proj precomputed).
        row = pl.multiple_of(t * B, B)
        g0 = xproj_ref[pl.ds(row, B), :] + jnp.dot(
            h0, whh0_ref[...], preferred_element_type=jnp.float32)
        h0n, c0n = gates_to_hc(g0, c0)
        # Layer 1: two accumulating dots (no concat).  h1 @ W_hh1 depends only
        # on the previous step, so the scheduler can overlap it with layer 0.
        g1 = (jnp.dot(h1, whh1_ref[...], preferred_element_type=jnp.float32)
              + jnp.dot(h0n, wih1_ref[...], preferred_element_type=jnp.float32)
              + b1b)
        h1n, c1n = gates_to_hc(g1, c1)
        return h0n, c0n, h1n, c1n

    z = jnp.zeros((B, Hp), jnp.float32)
    # T is static (8 here) -> fully unroll for cross-iteration scheduling
    # visibility and zero loop-carry overhead.  (Fall back to unroll=4 for
    # long sequences if vreg pressure shows spills.)
    _, _, h1, _ = jax.lax.fori_loop(0, T, step, (z, z, z, z), unroll=True)

    # Classifier on the last layer-1 hidden state; output padded to 128 lanes
    # so the store is a full, unmasked vreg write (wrapper slices column 0).
    out_ref[...] = (jnp.dot(h1, wc_ref[...], preferred_element_type=jnp.float32)
                    + bc_ref[...]).astype(out_ref.dtype)


def cpg_predictor_forward(x, params):
    """x: (B, T, INPUT_SIZE) float32 -> logits (B,) float32."""
    B, T, I = x.shape
    wih0, whh0, b0, wih1, whh1, b1, wc, bc = params

    B_pad = max(8, ((B + 7) // 8) * 8)

    # --- pad parameters: each gate gets its own 128-lane block, reordered to
    #     the kernel's [i|f|o|g] layout (original layout is (i,f,g,o)) --------
    def pad_gate_cols(w):
        parts = [jnp.pad(w[:, g * H:(g + 1) * H], ((0, 0), (0, HP - H)))
                 for g in GATE_ORDER]
        return jnp.concatenate(parts, axis=-1)

    def pad_rows(w):
        return jnp.pad(w, ((0, HP - w.shape[0]), (0, 0)))

    wih0_p = pad_gate_cols(wih0)                        # (I, 4HP)
    whh0_p = pad_rows(pad_gate_cols(whh0))              # (HP, 4HP)
    b0_p = pad_gate_cols(b0)                            # (1, 4HP)
    wih1_p = pad_rows(pad_gate_cols(wih1))              # (HP, 4HP)
    whh1_p = pad_rows(pad_gate_cols(whh1))              # (HP, 4HP)
    b1_p = pad_gate_cols(b1)                            # (1, 4HP)
    wc_p = jnp.zeros((HP, OUT_PAD), jnp.float32).at[:H, :OUTPUT_SIZE].set(wc)
    bc_p = jnp.zeros((1, OUT_PAD), jnp.float32).at[:, :OUTPUT_SIZE].set(bc)

    # --- batch-pad and flatten time-major: (T*B_pad, I) ---------------------
    x_pad = jnp.pad(x, ((0, B_pad - B), (0, 0), (0, 0)))
    x_flat = jnp.transpose(x_pad, (1, 0, 2)).reshape(T * B_pad, I)

    out = pl.pallas_call(
        lstm_kernel,
        out_shape=jax.ShapeDtypeStruct((B_pad, OUT_PAD), jnp.float32),
        grid_spec=pltpu.PrefetchScalarGridSpec(
            num_scalar_prefetch=0,
            grid=(1,),
            in_specs=[
                pl.BlockSpec(x_flat.shape, lambda i: (0, 0)),
                pl.BlockSpec(wih0_p.shape, lambda i: (0, 0)),
                pl.BlockSpec(whh0_p.shape, lambda i: (0, 0)),
                pl.BlockSpec(b0_p.shape, lambda i: (0, 0)),
                pl.BlockSpec(wih1_p.shape, lambda i: (0, 0)),
                pl.BlockSpec(whh1_p.shape, lambda i: (0, 0)),
                pl.BlockSpec(b1_p.shape, lambda i: (0, 0)),
                pl.BlockSpec(wc_p.shape, lambda i: (0, 0)),
                pl.BlockSpec(bc_p.shape, lambda i: (0, 0)),
            ],
            out_specs=pl.BlockSpec((B_pad, OUT_PAD), lambda i: (0, 0)),
            scratch_shapes=[pltpu.VMEM((T * B_pad, 4 * HP), jnp.float32)],
        ),
        compiler_params=pltpu.CompilerParams(
            dimension_semantics=("arbitrary",)),
    )(x_flat, wih0_p, whh0_p, b0_p, wih1_p, whh1_p, b1_p, wc_p, bc_p)
    return out[:B, 0]


def reference_forward(x, params):
    """Pure-JAX reference matching torch.nn.LSTM(batch_first) + Linear."""
    wih0, whh0, b0, wih1, whh1, b1, wc, bc = params
    B = x.shape[0]

    def cell(x_in, h, c, wih, whh, b):
        gates = x_in @ wih + h @ whh + b
        i = jax.nn.sigmoid(gates[:, 0 * H:1 * H])
        f = jax.nn.sigmoid(gates[:, 1 * H:2 * H])
        g = jnp.tanh(gates[:, 2 * H:3 * H])
        o = jax.nn.sigmoid(gates[:, 3 * H:4 * H])
        c = f * c + i * g
        h = o * jnp.tanh(c)
        return h, c

    z = jnp.zeros((B, H), jnp.float32)

    def step(carry, x_t):
        h0, c0, h1, c1 = carry
        h0, c0 = cell(x_t, h0, c0, wih0, whh0, b0)
        h1, c1 = cell(h0, h1, c1, wih1, whh1, b1)
        return (h0, c0, h1, c1), None

    (h0, c0, h1, c1), _ = jax.lax.scan(step, (z, z, z, z),
                                       jnp.transpose(x, (1, 0, 2)))
    return (h1 @ wc + bc)[:, 0]


def init_params(key):
    """Deterministic init mimicking PyTorch's U(-1/sqrt(H), 1/sqrt(H))."""
    scale = 1.0 / float(jnp.sqrt(jnp.float32(H)))
    keys = jax.random.split(key, 10)

    def u(k, shape):
        return jax.random.uniform(k, shape, jnp.float32, -scale, scale)

    wih0 = u(keys[0], (INPUT_SIZE, 4 * H))                  # weight_ih_l0^T
    whh0 = u(keys[1], (H, 4 * H))                           # weight_hh_l0^T
    b0 = u(keys[2], (1, 4 * H)) + u(keys[3], (1, 4 * H))    # b_ih + b_hh
    wih1 = u(keys[4], (H, 4 * H))                           # weight_ih_l1^T
    whh1 = u(keys[5], (H, 4 * H))                           # weight_hh_l1^T
    b1 = u(keys[6], (1, 4 * H)) + u(keys[7], (1, 4 * H))
    wc = u(keys[8], (H, OUTPUT_SIZE))                       # classifier weight^T
    bc = u(keys[9], (1, OUTPUT_SIZE))                       # classifier bias
    return (wih0, whh0, b0, wih1, whh1, b1, wc, bc)


if __name__ == "__main__":
    key = jax.random.PRNGKey(0)
    k_x, k_p = jax.random.split(key)

    B, T = 2, 8
    x = jax.random.normal(k_x, (B, T, INPUT_SIZE), jnp.float32)
    params = init_params(k_p)

    logits = cpg_predictor_forward(x, params)
    logits = jax.block_until_ready(logits)

    ref = jax.block_until_ready(reference_forward(x, params))
    assert logits.shape == (B,)
    assert jnp.allclose(logits, ref, atol=1e-4, rtol=1e-4), (logits, ref)

    print("KERNEL_OK")
</pallas_src>

<mosaic_0001>
module attributes {stable_mosaic.version = 11 : i64} {
  func.func @lstm_kernel(%arg0: i32, %arg1: memref<64x26xf32, #tpu.memory_space<vmem>>, %arg2: memref<26x512xf32, #tpu.memory_space<vmem>>, %arg3: memref<128x512xf32, #tpu.memory_space<vmem>>, %arg4: memref<1x512xf32, #tpu.memory_space<vmem>>, %arg5: memref<128x512xf32, #tpu.memory_space<vmem>>, %arg6: memref<128x512xf32, #tpu.memory_space<vmem>>, %arg7: memref<1x512xf32, #tpu.memory_space<vmem>>, %arg8: memref<128x128xf32, #tpu.memory_space<vmem>>, %arg9: memref<1x128xf32, #tpu.memory_space<vmem>>, %arg10: memref<8x128xf32, #tpu.memory_space<vmem>>, %arg11: memref<64x512xf32, #tpu.memory_space<vmem>>) attributes {dimension_semantics = [#tpu.dimension_semantics<arbitrary>], iteration_bounds = array<i64: 1>, scalar_prefetch = 0 : i64, scratch_operands = 1 : i64, tpu.core_type = #tpu.core_type<tc>, window_params = [{pipeline_mode = #tpu.pipeline_mode<synchronous>, transform_indices = @transform_0, window_bounds = array<i64: 64, 26>}, {pipeline_mode = #tpu.pipeline_mode<synchronous>, transform_indices = @transform_1, window_bounds = array<i64: 26, 512>}, {pipeline_mode = #tpu.pipeline_mode<synchronous>, transform_indices = @transform_2, window_bounds = array<i64: 128, 512>}, {pipeline_mode = #tpu.pipeline_mode<synchronous>, transform_indices = @transform_3, window_bounds = array<i64: 1, 512>}, {pipeline_mode = #tpu.pipeline_mode<synchronous>, transform_indices = @transform_4, window_bounds = array<i64: 128, 512>}, {pipeline_mode = #tpu.pipeline_mode<synchronous>, transform_indices = @transform_5, window_bounds = array<i64: 128, 512>}, {pipeline_mode = #tpu.pipeline_mode<synchronous>, transform_indices = @transform_6, window_bounds = array<i64: 1, 512>}, {pipeline_mode = #tpu.pipeline_mode<synchronous>, transform_indices = @transform_7, window_bounds = array<i64: 128, 128>}, {pipeline_mode = #tpu.pipeline_mode<synchronous>, transform_indices = @transform_8, window_bounds = array<i64: 1, 128>}, {pipeline_mode = #tpu.pipeline_mode<synchronous>, transform_indices = @transform_9, window_bounds = array<i64: 8, 128>}]} {
    %c0 = arith.constant 0 : index
    %c0_0 = arith.constant 0 : index
    %0 = vector.load %arg1[%c0, %c0_0] : memref<64x26xf32, #tpu.memory_space<vmem>>, vector<64x26xf32>
    %c0_1 = arith.constant 0 : index
    %c0_2 = arith.constant 0 : index
    %1 = vector.load %arg2[%c0_1, %c0_2] : memref<26x512xf32, #tpu.memory_space<vmem>>, vector<26x512xf32>
    %cst = arith.constant dense<0.000000e+00> : vector<64x512xf32>
    %2 = tpu.matmul %0, %1, %cst {dimension_numbers = #tpu.dot_dimension_numbers<[1], [0], [0], [1], [0, 0, 1, 1], [], []>} : vector<64x26xf32>, vector<26x512xf32>, vector<64x512xf32> -> vector<64x512xf32>
    %c0_3 = arith.constant 0 : index
    %c0_4 = arith.constant 0 : index
    %3 = vector.load %arg4[%c0_3, %c0_4] : memref<1x512xf32, #tpu.memory_space<vmem>>, vector<1x512xf32>
    %4 = vector.broadcast %3 : vector<1x512xf32> to vector<64x512xf32>
    %5 = arith.addf %2, %4 : vector<64x512xf32>
    %c0_5 = arith.constant 0 : index
    %c0_6 = arith.constant 0 : index
    %6 = vector.load %arg11[%c0_5, %c0_6] : memref<64x512xf32, #tpu.memory_space<vmem>>, vector<64x512xf32>
    tpu.vector_store %arg11[%c0_5, %c0_6], %5 {strides = array<i32>} : memref<64x512xf32, #tpu.memory_space<vmem>>, vector<64x512xf32>,
    %c0_7 = arith.constant 0 : index
    %c0_8 = arith.constant 0 : index
    %7 = vector.load %arg7[%c0_7, %c0_8] : memref<1x512xf32, #tpu.memory_space<vmem>>, vector<1x512xf32>
    %8 = vector.shape_cast %7 : vector<1x512xf32> to vector<1x512xf32>
    %9 = vector.broadcast %8 : vector<1x512xf32> to vector<8x512xf32>
    %cst_9 = arith.constant 0.000000e+00 : f32
    %10 = vector.broadcast %cst_9 : f32 to vector<8x128xf32>
    %c0_i32 = arith.constant 0 : i32
    %c8_i32 = arith.constant 8 : i32
    %11 = arith.muli %c0_i32, %c8_i32 : i32
    %12 = tpu.assume_multiple %11, 8 : i32
    %13 = arith.index_cast %12 : i32 to index
    %c0_10 = arith.constant 0 : index
    %14 = vector.load %arg11[%13, %c0_10] : memref<64x512xf32, #tpu.memory_space<vmem>>, vector<8x512xf32>
    %c0_11 = arith.constant 0 : index
    %c0_12 = arith.constant 0 : index
    %15 = vector.load %arg3[%c0_11, %c0_12] : memref<128x512xf32, #tpu.memory_space<vmem>>, vector<128x512xf32>
    %cst_13 = arith.constant dense<0.000000e+00> : vector<8x512xf32>
    %16 = tpu.matmul %10, %15, %cst_13 {dimension_numbers = #tpu.dot_dimension_numbers<[1], [0], [0], [1], [0, 0, 1, 1], [], []>} : vector<8x128xf32>, vector<128x512xf32>, vector<8x512xf32> -> vector<8x512xf32>
    %17 = arith.addf %14, %16 : vector<8x512xf32>
    %18 = vector.extract_strided_slice %17 {offsets = [0, 0], sizes = [8, 384], strides = [1, 1]} : vector<8x512xf32> to vector<8x384xf32>
    %19 = arith.negf %18 : vector<8x384xf32>
    %20 = math.exp %19 : vector<8x384xf32>
    %cst_14 = arith.constant 1.000000e+00 : f32
    %21 = vector.broadcast %cst_14 : f32 to vector<8x384xf32>
    %22 = arith.addf %21, %20 : vector<8x384xf32>
    %23 = arith.divf %21, %22 : vector<8x384xf32>
    %24 = vector.extract_strided_slice %23 {offsets = [0, 0], sizes = [8, 128], strides = [1, 1]} : vector<8x384xf32> to vector<8x128xf32>
    %25 = vector.extract_strided_slice %23 {offsets = [0, 128], sizes = [8, 128], strides = [1, 1]} : vector<8x384xf32> to vector<8x128xf32>
    %26 = vector.extract_strided_slice %23 {offsets = [0, 256], sizes = [8, 128], strides = [1, 1]} : vector<8x384xf32> to vector<8x128xf32>
    %27 = vector.extract_strided_slice %17 {offsets = [0, 384], sizes = [8, 128], strides = [1, 1]} : vector<8x512xf32> to vector<8x128xf32>
    %28 = math.tanh %27 : vector<8x128xf32>
    %29 = arith.mulf %25, %10 : vector<8x128xf32>
    %30 = arith.mulf %24, %28 : vector<8x128xf32>
    %31 = arith.addf %29, %30 : vector<8x128xf32>
    %32 = math.tanh %31 : vector<8x128xf32>
    %33 = arith.mulf %26, %32 : vector<8x128xf32>
    %c0_15 = arith.constant 0 : index
    %c0_16 = arith.constant 0 : index
    %34 = vector.load %arg6[%c0_15, %c0_16] : memref<128x512xf32, #tpu.memory_space<vmem>>, vector<128x512xf32>
    %cst_17 = arith.constant dense<0.000000e+00> : vector<8x512xf32>
    %35 = tpu.matmul %10, %34, %cst_17 {dimension_numbers = #tpu.dot_dimension_numbers<[1], [0], [0], [1], [0, 0, 1, 1], [], []>} : vector<8x128xf32>, vector<128x512xf32>, vector<8x512xf32> -> vector<8x512xf32>
    %c0_18 = arith.constant 0 : index
    %c0_19 = arith.constant 0 : index
    %36 = vector.load %arg5[%c0_18, %c0_19] : memref<128x512xf32, #tpu.memory_space<vmem>>, vector<128x512xf32>
    %cst_20 = arith.constant dense<0.000000e+00> : vector<8x512xf32>
    %37 = tpu.matmul %33, %36, %cst_20 {dimension_numbers = #tpu.dot_dimension_numbers<[1], [0], [0], [1], [0, 0, 1, 1], [], []>} : vector<8x128xf32>, vector<128x512xf32>, vector<8x512xf32> -> vector<8x512xf32>
    %38 = arith.addf %35, %37 : vector<8x512xf32>
    %39 = arith.addf %38, %9 : vector<8x512xf32>
    %40 = vector.extract_strided_slice %39 {offsets = [0, 0], sizes = [8, 384], strides = [1, 1]} : vector<8x512xf32> to vector<8x384xf32>
    %41 = arith.negf %40 : vector<8x384xf32>
    %42 = math.exp %41 : vector<8x384xf32>
    %cst_21 = arith.constant 1.000000e+00 : f32
    %43 = vector.broadcast %cst_21 : f32 to vector<8x384xf32>
    %44 = arith.addf %43, %42 : vector<8x384xf32>
    %45 = arith.divf %43, %44 : vector<8x384xf32>
    %46 = vector.extract_strided_slice %45 {offsets = [0, 0], sizes = [8, 128], strides = [1, 1]} : vector<8x384xf32> to vector<8x128xf32>
    %47 = vector.extract_strided_slice %45 {offsets = [0, 128], sizes = [8, 128], strides = [1, 1]} : vector<8x384xf32> to vector<8x128xf32>
    %48 = vector.extract_strided_slice %45 {offsets = [0, 256], sizes = [8, 128], strides = [1, 1]} : vector<8x384xf32> to vector<8x128xf32>
    %49 = vector.extract_strided_slice %39 {offsets = [0, 384], sizes = [8, 128], strides = [1, 1]} : vector<8x512xf32> to vector<8x128xf32>
    %50 = math.tanh %49 : vector<8x128xf32>
    %51 = arith.mulf %47, %10 : vector<8x128xf32>
    %52 = arith.mulf %46, %50 : vector<8x128xf32>
    %53 = arith.addf %51, %52 : vector<8x128xf32>
    %54 = math.tanh %53 : vector<8x128xf32>
    %55 = arith.mulf %48, %54 : vector<8x128xf32>
    %c1_i32 = arith.constant 1 : i32
    %c8_i32_22 = arith.constant 8 : i32
    %56 = arith.muli %c1_i32, %c8_i32_22 : i32
    %57 = tpu.assume_multiple %56, 8 : i32
    %58 = arith.index_cast %57 : i32 to index
    %c0_23 = arith.constant 0 : index
    %59 = vector.load %arg11[%58, %c0_23] : memref<64x512xf32, #tpu.memory_space<vmem>>, vector<8x512xf32>
    %c0_24 = arith.constant 0 : index
    %c0_25 = arith.constant 0 : index
    %60 = vector.load %arg3[%c0_24, %c0_25] : memref<128x512xf32, #tpu.memory_space<vmem>>, vector<128x512xf32>
    %cst_26 = arith.constant dense<0.000000e+00> : vector<8x512xf32>
    %61 = tpu.matmul %33, %60, %cst_26 {dimension_numbers = #tpu.dot_dimension_numbers<[1], [0], [0], [1], [0, 0, 1, 1], [], []>} : vector<8x128xf32>, vector<128x512xf32>, vector<8x512xf32> -> vector<8x512xf32>
    %62 = arith.addf %59, %61 : vector<8x512xf32>
    %63 = vector.extract_strided_slice %62 {offsets = [0, 0], sizes = [8, 384], strides = [1, 1]} : vector<8x512xf32> to vector<8x384xf32>
    %64 = arith.negf %63 : vector<8x384xf32>
    %65 = math.exp %64 : vector<8x384xf32>
    %cst_27 = arith.constant 1.000000e+00 : f32
    %66 = vector.broadcast %cst_27 : f32 to vector<8x384xf32>
    %67 = arith.addf %66, %65 : vector<8x384xf32>
    %68 = arith.divf %66, %67 : vector<8x384xf32>
    %69 = vector.extract_strided_slice %68 {offsets = [0, 0], sizes = [8, 128], strides = [1, 1]} : vector<8x384xf32> to vector<8x128xf32>
    %70 = vector.extract_strided_slice %68 {offsets = [0, 128], sizes = [8, 128], strides = [1, 1]} : vector<8x384xf32> to vector<8x128xf32>
    %71 = vector.extract_strided_slice %68 {offsets = [0, 256], sizes = [8, 128], strides = [1, 1]} : vector<8x384xf32> to vector<8x128xf32>
    %72 = vector.extract_strided_slice %62 {offsets = [0, 384], sizes = [8, 128], strides = [1, 1]} : vector<8x512xf32> to vector<8x128xf32>
    %73 = math.tanh %72 : vector<8x128xf32>
    %74 = arith.mulf %70, %31 : vector<8x128xf32>
    %75 = arith.mulf %69, %73 : vector<8x128xf32>
    %76 = arith.addf %74, %75 : vector<8x128xf32>
    %77 = math.tanh %76 : vector<8x128xf32>
    %78 = arith.mulf %71, %77 : vector<8x128xf32>
    %c0_28 = arith.constant 0 : index
    %c0_29 = arith.constant 0 : index
    %79 = vector.load %arg6[%c0_28, %c0_29] : memref<128x512xf32, #tpu.memory_space<vmem>>, vector<128x512xf32>
    %cst_30 = arith.constant dense<0.000000e+00> : vector<8x512xf32>
    %80 = tpu.matmul %55, %79, %cst_30 {dimension_numbers = #tpu.dot_dimension_numbers<[1], [0], [0], [1], [0, 0, 1, 1], [], []>} : vector<8x128xf32>, vector<128x512xf32>, vector<8x512xf32> -> vector<8x512xf32>
    %c0_31 = arith.constant 0 : index
    %c0_32 = arith.constant 0 : index
    %81 = vector.load %arg5[%c0_31, %c0_32] : memref<128x512xf32, #tpu.memory_space<vmem>>, vector<128x512xf32>
    %cst_33 = arith.constant dense<0.000000e+00> : vector<8x512xf32>
    %82 = tpu.matmul %78, %81, %cst_33 {dimension_numbers = #tpu.dot_dimension_numbers<[1], [0], [0], [1], [0, 0, 1, 1], [], []>} : vector<8x128xf32>, vector<128x512xf32>, vector<8x512xf32> -> vector<8x512xf32>
    %83 = arith.addf %80, %82 : vector<8x512xf32>
    %84 = arith.addf %83, %9 : vector<8x512xf32>
    %85 = vector.extract_strided_slice %84 {offsets = [0, 0], sizes = [8, 384], strides = [1, 1]} : vector<8x512xf32> to vector<8x384xf32>
    %86 = arith.negf %85 : vector<8x384xf32>
    %87 = math.exp %86 : vector<8x384xf32>
    %cst_34 = arith.constant 1.000000e+00 : f32
    %88 = vector.broadcast %cst_34 : f32 to vector<8x384xf32>
    %89 = arith.addf %88, %87 : vector<8x384xf32>
    %90 = arith.divf %88, %89 : vector<8x384xf32>
    %91 = vector.extract_strided_slice %90 {offsets = [0, 0], sizes = [8, 128], strides = [1, 1]} : vector<8x384xf32> to vector<8x128xf32>
    %92 = vector.extract_strided_slice %90 {offsets = [0, 128], sizes = [8, 128], strides = [1, 1]} : vector<8x384xf32> to vector<8x128xf32>
    %93 = vector.extract_strided_slice %90 {offsets = [0, 256], sizes = [8, 128], strides = [1, 1]} : vector<8x384xf32> to vector<8x128xf32>
    %94 = vector.extract_strided_slice %84 {offsets = [0, 384], sizes = [8, 128], strides = [1, 1]} : vector<8x512xf32> to vector<8x128xf32>
    %95 = math.tanh %94 : vector<8x128xf32>
    %96 = arith.mulf %92, %53 : vector<8x128xf32>
    %97 = arith.mulf %91, %95 : vector<8x128xf32>
    %98 = arith.addf %96, %97 : vector<8x128xf32>
    %99 = math.tanh %98 : vector<8x128xf32>
    %100 = arith.mulf %93, %99 : vector<8x128xf32>
    %c2_i32 = arith.constant 2 : i32
    %c8_i32_35 = arith.constant 8 : i32
    %101 = arith.muli %c2_i32, %c8_i32_35 : i32
    %102 = tpu.assume_multiple %101, 8 : i32
    %103 = arith.index_cast %102 : i32 to index
    %c0_36 = arith.constant 0 : index
    %104 = vector.load %arg11[%103, %c0_36] : memref<64x512xf32, #tpu.memory_space<vmem>>, vector<8x512xf32>
    %c0_37 = arith.constant 0 : index
    %c0_38 = arith.constant 0 : index
    %105 = vector.load %arg3[%c0_37, %c0_38] : memref<128x512xf32, #tpu.memory_space<vmem>>, vector<128x512xf32>
    %cst_39 = arith.constant dense<0.000000e+00> : vector<8x512xf32>
    %106 = tpu.matmul %78, %105, %cst_39 {dimension_numbers = #tpu.dot_dimension_numbers<[1], [0], [0], [1], [0, 0, 1, 1], [], []>} : vector<8x128xf32>, vector<128x512xf32>, vector<8x512xf32> -> vector<8x512xf32>
    %107 = arith.addf %104, %106 : vector<8x512xf32>
    %108 = vector.extract_strided_slice %107 {offsets = [0, 0], sizes = [8, 384], strides = [1, 1]} : vector<8x512xf32> to vector<8x384xf32>
    %109 = arith.negf %108 : vector<8x384xf32>
    %110 = math.exp %109 : vector<8x384xf32>
    %cst_40 = arith.constant 1.000000e+00 : f32
    %111 = vector.broadcast %cst_40 : f32 to vector<8x384xf32>
    %112 = arith.addf %111, %110 : vector<8x384xf32>
    %113 = arith.divf %111, %112 : vector<8x384xf32>
    %114 = vector.extract_strided_slice %113 {offsets = [0, 0], sizes = [8, 128], strides = [1, 1]} : vector<8x384xf32> to vector<8x128xf32>
    %115 = vector.extract_strided_slice %113 {offsets = [0, 128], sizes = [8, 128], strides = [1, 1]} : vector<8x384xf32> to vector<8x128xf32>
    %116 = vector.extract_strided_slice %113 {offsets = [0, 256], sizes = [8, 128], strides = [1, 1]} : vector<8x384xf32> to vector<8x128xf32>
    %117 = vector.extract_strided_slice %107 {offsets = [0, 384], sizes = [8, 128], strides = [1, 1]} : vector<8x512xf32> to vector<8x128xf32>
    %118 = math.tanh %117 : vector<8x128xf32>
    %119 = arith.mulf %115, %76 : vector<8x128xf32>
    %120 = arith.mulf %114, %118 : vector<8x128xf32>
    %121 = arith.addf %119, %120 : vector<8x128xf32>
    %122 = math.tanh %121 : vector<8x128xf32>
    %123 = arith.mulf %116, %122 : vector<8x128xf32>
    %c0_41 = arith.constant 0 : index
    %c0_42 = arith.constant 0 : index
    %124 = vector.load %arg6[%c0_41, %c0_42] : memref<128x512xf32, #tpu.memory_space<vmem>>, vector<128x512xf32>
    %cst_43 = arith.constant dense<0.000000e+00> : vector<8x512xf32>
    %125 = tpu.matmul %100, %124, %cst_43 {dimension_numbers = #tpu.dot_dimension_numbers<[1], [0], [0], [1], [0, 0, 1, 1], [], []>} : vector<8x128xf32>, vector<128x512xf32>, vector<8x512xf32> -> vector<8x512xf32>
    %c0_44 = arith.constant 0 : index
    %c0_45 = arith.constant 0 : index
    %126 = vector.load %arg5[%c0_44, %c0_45] : memref<128x512xf32, #tpu.memory_space<vmem>>, vector<128x512xf32>
    %cst_46 = arith.constant dense<0.000000e+00> : vector<8x512xf32>
    %127 = tpu.matmul %123, %126, %cst_46 {dimension_numbers = #tpu.dot_dimension_numbers<[1], [0], [0], [1], [0, 0, 1, 1], [], []>} : vector<8x128xf32>, vector<128x512xf32>, vector<8x512xf32> -> vector<8x512xf32>
    %128 = arith.addf %125, %127 : vector<8x512xf32>
    %129 = arith.addf %128, %9 : vector<8x512xf32>
    %130 = vector.extract_strided_slice %129 {offsets = [0, 0], sizes = [8, 384], strides = [1, 1]} : vector<8x512xf32> to vector<8x384xf32>
    %131 = arith.negf %130 : vector<8x384xf32>
    %132 = math.exp %131 : vector<8x384xf32>
    %cst_47 = arith.constant 1.000000e+00 : f32
    %133 = vector.broadcast %cst_47 : f32 to vector<8x384xf32>
    %134 = arith.addf %133, %132 : vector<8x384xf32>
    %135 = arith.divf %133, %134 : vector<8x384xf32>
    %136 = vector.extract_strided_slice %135 {offsets = [0, 0], sizes = [8, 128], strides = [1, 1]} : vector<8x384xf32> to vector<8x128xf32>
    %137 = vector.extract_strided_slice %135 {offsets = [0, 128], sizes = [8, 128], strides = [1, 1]} : vector<8x384xf32> to vector<8x128xf32>
    %138 = vector.extract_strided_slice %135 {offsets = [0, 256], sizes = [8, 128], strides = [1, 1]} : vector<8x384xf32> to vector<8x128xf32>
    %139 = vector.extract_strided_slice %129 {offsets = [0, 384], sizes = [8, 128], strides = [1, 1]} : vector<8x512xf32> to vector<8x128xf32>
    %140 = math.tanh %139 : vector<8x128xf32>
    %141 = arith.mulf %137, %98 : vector<8x128xf32>
    %142 = arith.mulf %136, %140 : vector<8x128xf32>
    %143 = arith.addf %141, %142 : vector<8x128xf32>
    %144 = math.tanh %143 : vector<8x128xf32>
    %145 = arith.mulf %138, %144 : vector<8x128xf32>
    %c3_i32 = arith.constant 3 : i32
    %c8_i32_48 = arith.constant 8 : i32
    %146 = arith.muli %c3_i32, %c8_i32_48 : i32
    %147 = tpu.assume_multiple %146, 8 : i32
    %148 = arith.index_cast %147 : i32 to index
    %c0_49 = arith.constant 0 : index
    %149 = vector.load %arg11[%148, %c0_49] : memref<64x512xf32, #tpu.memory_space<vmem>>, vector<8x512xf32>
    %c0_50 = arith.constant 0 : index
    %c0_51 = arith.constant 0 : index
    %150 = vector.load %arg3[%c0_50, %c0_51] : memref<128x512xf32, #tpu.memory_space<vmem>>, vector<128x512xf32>
    %cst_52 = arith.constant dense<0.000000e+00> : vector<8x512xf32>
    %151 = tpu.matmul %123, %150, %cst_52 {dimension_numbers = #tpu.dot_dimension_numbers<[1], [0], [0], [1], [0, 0, 1, 1], [], []>} : vector<8x128xf32>, vector<128x512xf32>, vector<8x512xf32> -> vector<8x512xf32>
    %152 = arith.addf %149, %151 : vector<8x512xf32>
    %153 = vector.extract_strided_slice %152 {offsets = [0, 0], sizes = [8, 384], strides = [1, 1]} : vector<8x512xf32> to vector<8x384xf32>
    %154 = arith.negf %153 : vector<8x384xf32>
    %155 = math.exp %154 : vector<8x384xf32>
    %cst_53 = arith.constant 1.000000e+00 : f32
    %156 = vector.broadcast %cst_53 : f32 to vector<8x384xf32>
    %157 = arith.addf %156, %155 : vector<8x384xf32>
    %158 = arith.divf %156, %157 : vector<8x384xf32>
    %159 = vector.extract_strided_slice %158 {offsets = [0, 0], sizes = [8, 128], strides = [1, 1]} : vector<8x384xf32> to vector<8x128xf32>
    %160 = vector.extract_strided_slice %158 {offsets = [0, 128], sizes = [8, 128], strides = [1, 1]} : vector<8x384xf32> to vector<8x128xf32>
    %161 = vector.extract_strided_slice %158 {offsets = [0, 256], sizes = [8, 128], strides = [1, 1]} : vector<8x384xf32> to vector<8x128xf32>
    %162 = vector.extract_strided_slice %152 {offsets = [0, 384], sizes = [8, 128], strides = [1, 1]} : vector<8x512xf32> to vector<8x128xf32>
    %163 = math.tanh %162 : vector<8x128xf32>
    %164 = arith.mulf %160, %121 : vector<8x128xf32>
    %165 = arith.mulf %159, %163 : vector<8x128xf32>
    %166 = arith.addf %164, %165 : vector<8x128xf32>
    %167 = math.tanh %166 : vector<8x128xf32>
    %168 = arith.mulf %161, %167 : vector<8x128xf32>
    %c0_54 = arith.constant 0 : index
    %c0_55 = arith.constant 0 : index
    %169 = vector.load %arg6[%c0_54, %c0_55] : memref<128x512xf32, #tpu.memory_space<vmem>>, vector<128x512xf32>
    %cst_56 = arith.constant dense<0.000000e+00> : vector<8x512xf32>
    %170 = tpu.matmul %145, %169, %cst_56 {dimension_numbers = #tpu.dot_dimension_numbers<[1], [0], [0], [1], [0, 0, 1, 1], [], []>} : vector<8x128xf32>, vector<128x512xf32>, vector<8x512xf32> -> vector<8x512xf32>
    %c0_57 = arith.constant 0 : index
    %c0_58 = arith.constant 0 : index
    %171 = vector.load %arg5[%c0_57, %c0_58] : memref<128x512xf32, #tpu.memory_space<vmem>>, vector<128x512xf32>
    %cst_59 = arith.constant dense<0.000000e+00> : vector<8x512xf32>
    %172 = tpu.matmul %168, %171, %cst_59 {dimension_numbers = #tpu.dot_dimension_numbers<[1], [0], [0], [1], [0, 0, 1, 1], [], []>} : vector<8x128xf32>, vector<128x512xf32>, vector<8x512xf32> -> vector<8x512xf32>
    %173 = arith.addf %170, %172 : vector<8x512xf32>
    %174 = arith.addf %173, %9 : vector<8x512xf32>
    %175 = vector.extract_strided_slice %174 {offsets = [0, 0], sizes = [8, 384], strides = [1, 1]} : vector<8x512xf32> to vector<8x384xf32>
    %176 = arith.negf %175 : vector<8x384xf32>
    %177 = math.exp %176 : vector<8x384xf32>
    %cst_60 = arith.constant 1.000000e+00 : f32
    %178 = vector.broadcast %cst_60 : f32 to vector<8x384xf32>
    %179 = arith.addf %178, %177 : vector<8x384xf32>
    %180 = arith.divf %178, %179 : vector<8x384xf32>
    %181 = vector.extract_strided_slice %180 {offsets = [0, 0], sizes = [8, 128], strides = [1, 1]} : vector<8x384xf32> to vector<8x128xf32>
    %182 = vector.extract_strided_slice %180 {offsets = [0, 128], sizes = [8, 128], strides = [1, 1]} : vector<8x384xf32> to vector<8x128xf32>
    %183 = vector.extract_strided_slice %180 {offsets = [0, 256], sizes = [8, 128], strides = [1, 1]} : vector<8x384xf32> to vector<8x128xf32>
    %184 = vector.extract_strided_slice %174 {offsets = [0, 384], sizes = [8, 128], strides = [1, 1]} : vector<8x512xf32> to vector<8x128xf32>
    %185 = math.tanh %184 : vector<8x128xf32>
    %186 = arith.mulf %182, %143 : vector<8x128xf32>
    %187 = arith.mulf %181, %185 : vector<8x128xf32>
    %188 = arith.addf %186, %187 : vector<8x128xf32>
    %189 = math.tanh %188 : vector<8x128xf32>
    %190 = arith.mulf %183, %189 : vector<8x128xf32>
    %c4_i32 = arith.constant 4 : i32
    %c8_i32_61 = arith.constant 8 : i32
    %191 = arith.muli %c4_i32, %c8_i32_61 : i32
    %192 = tpu.assume_multiple %191, 8 : i32
    %193 = arith.index_cast %192 : i32 to index
    %c0_62 = arith.constant 0 : index
    %194 = vector.load %arg11[%193, %c0_62] : memref<64x512xf32, #tpu.memory_space<vmem>>, vector<8x512xf32>
    %c0_63 = arith.constant 0 : index
    %c0_64 = arith.constant 0 : index
    %195 = vector.load %arg3[%c0_63, %c0_64] : memref<128x512xf32, #tpu.memory_space<vmem>>, vector<128x512xf32>
    %cst_65 = arith.constant dense<0.000000e+00> : vector<8x512xf32>
    %196 = tpu.matmul %168, %195, %cst_65 {dimension_numbers = #tpu.dot_dimension_numbers<[1], [0], [0], [1], [0, 0, 1, 1], [], []>} : vector<8x128xf32>, vector<128x512xf32>, vector<8x512xf32> -> vector<8x512xf32>
    %197 = arith.addf %194, %196 : vector<8x512xf32>
    %198 = vector.extract_strided_slice %197 {offsets = [0, 0], sizes = [8, 384], strides = [1, 1]} : vector<8x512xf32> to vector<8x384xf32>
    %199 = arith.negf %198 : vector<8x384xf32>
    %200 = math.exp %199 : vector<8x384xf32>
    %cst_66 = arith.constant 1.000000e+00 : f32
    %201 = vector.broadcast %cst_66 : f32 to vector<8x384xf32>
    %202 = arith.addf %201, %200 : vector<8x384xf32>
    %203 = arith.divf %201, %202 : vector<8x384xf32>
    %204 = vector.extract_strided_slice %203 {offsets = [0, 0], sizes = [8, 128], strides = [1, 1]} : vector<8x384xf32> to vector<8x128xf32>
    %205 = vector.extract_strided_slice %203 {offsets = [0, 128], sizes = [8, 128], strides = [1, 1]} : vector<8x384xf32> to vector<8x128xf32>
    %206 = vector.extract_strided_slice %203 {offsets = [0, 256], sizes = [8, 128], strides = [1, 1]} : vector<8x384xf32> to vector<8x128xf32>
    %207 = vector.extract_strided_slice %197 {offsets = [0, 384], sizes = [8, 128], strides = [1, 1]} : vector<8x512xf32> to vector<8x128xf32>
    %208 = math.tanh %207 : vector<8x128xf32>
    %209 = arith.mulf %205, %166 : vector<8x128xf32>
    %210 = arith.mulf %204, %208 : vector<8x128xf32>
    %211 = arith.addf %209, %210 : vector<8x128xf32>
    %212 = math.tanh %211 : vector<8x128xf32>
    %213 = arith.mulf %206, %212 : vector<8x128xf32>
    %c0_67 = arith.constant 0 : index
    %c0_68 = arith.constant 0 : index
    %214 = vector.load %arg6[%c0_67, %c0_68] : memref<128x512xf32, #tpu.memory_space<vmem>>, vector<128x512xf32>
    %cst_69 = arith.constant dense<0.000000e+00> : vector<8x512xf32>
    %215 = tpu.matmul %190, %214, %cst_69 {dimension_numbers = #tpu.dot_dimension_numbers<[1], [0], [0], [1], [0, 0, 1, 1], [], []>} : vector<8x128xf32>, vector<128x512xf32>, vector<8x512xf32> -> vector<8x512xf32>
    %c0_70 = arith.constant 0 : index
    %c0_71 = arith.constant 0 : index
    %216 = vector.load %arg5[%c0_70, %c0_71] : memref<128x512xf32, #tpu.memory_space<vmem>>, vector<128x512xf32>
    %cst_72 = arith.constant dense<0.000000e+00> : vector<8x512xf32>
    %217 = tpu.matmul %213, %216, %cst_72 {dimension_numbers = #tpu.dot_dimension_numbers<[1], [0], [0], [1], [0, 0, 1, 1], [], []>} : vector<8x128xf32>, vector<128x512xf32>, vector<8x512xf32> -> vector<8x512xf32>
    %218 = arith.addf %215, %217 : vector<8x512xf32>
    %219 = arith.addf %218, %9 : vector<8x512xf32>
    %220 = vector.extract_strided_slice %219 {offsets = [0, 0], sizes = [8, 384], strides = [1, 1]} : vector<8x512xf32> to vector<8x384xf32>
    %221 = arith.negf %220 : vector<8x384xf32>
    %222 = math.exp %221 : vector<8x384xf32>
    %cst_73 = arith.constant 1.000000e+00 : f32
    %223 = vector.broadcast %cst_73 : f32 to vector<8x384xf32>
    %224 = arith.addf %223, %222 : vector<8x384xf32>
    %225 = arith.divf %223, %224 : vector<8x384xf32>
    %226 = vector.extract_strided_slice %225 {offsets = [0, 0], sizes = [8, 128], strides = [1, 1]} : vector<8x384xf32> to vector<8x128xf32>
    %227 = vector.extract_strided_slice %225 {offsets = [0, 128], sizes = [8, 128], strides = [1, 1]} : vector<8x384xf32> to vector<8x128xf32>
    %228 = vector.extract_strided_slice %225 {offsets = [0, 256], sizes = [8, 128], strides = [1, 1]} : vector<8x384xf32> to vector<8x128xf32>
    %229 = vector.extract_strided_slice %219 {offsets = [0, 384], sizes = [8, 128], strides = [1, 1]} : vector<8x512xf32> to vector<8x128xf32>
    %230 = math.tanh %229 : vector<8x128xf32>
    %231 = arith.mulf %227, %188 : vector<8x128xf32>
    %232 = arith.mulf %226, %230 : vector<8x128xf32>
    %233 = arith.addf %231, %232 : vector<8x128xf32>
    %234 = math.tanh %233 : vector<8x128xf32>
    %235 = arith.mulf %228, %234 : vector<8x128xf32>
    %c5_i32 = arith.constant 5 : i32
    %c8_i32_74 = arith.constant 8 : i32
    %236 = arith.muli %c5_i32, %c8_i32_74 : i32
    %237 = tpu.assume_multiple %236, 8 : i32
    %238 = arith.index_cast %237 : i32 to index
    %c0_75 = arith.constant 0 : index
    %239 = vector.load %arg11[%238, %c0_75] : memref<64x512xf32, #tpu.memory_space<vmem>>, vector<8x512xf32>
    %c0_76 = arith.constant 0 : index
    %c0_77 = arith.constant 0 : index
    %240 = vector.load %arg3[%c0_76, %c0_77] : memref<128x512xf32, #tpu.memory_space<vmem>>, vector<128x512xf32>
    %cst_78 = arith.constant dense<0.000000e+00> : vector<8x512xf32>
    %241 = tpu.matmul %213, %240, %cst_78 {dimension_numbers = #tpu.dot_dimension_numbers<[1], [0], [0], [1], [0, 0, 1, 1], [], []>} : vector<8x128xf32>, vector<128x512xf32>, vector<8x512xf32> -> vector<8x512xf32>
    %242 = arith.addf %239, %241 : vector<8x512xf32>
    %243 = vector.extract_strided_slice %242 {offsets = [0, 0], sizes = [8, 384], strides = [1, 1]} : vector<8x512xf32> to vector<8x384xf32>
    %244 = arith.negf %243 : vector<8x384xf32>
    %245 = math.exp %244 : vector<8x384xf32>
    %cst_79 = arith.constant 1.000000e+00 : f32
    %246 = vector.broadcast %cst_79 : f32 to vector<8x384xf32>
    %247 = arith.addf %246, %245 : vector<8x384xf32>
    %248 = arith.divf %246, %247 : vector<8x384xf32>
    %249 = vector.extract_strided_slice %248 {offsets = [0, 0], sizes = [8, 128], strides = [1, 1]} : vector<8x384xf32> to vector<8x128xf32>
    %250 = vector.extract_strided_slice %248 {offsets = [0, 128], sizes = [8, 128], strides = [1, 1]} : vector<8x384xf32> to vector<8x128xf32>
    %251 = vector.extract_strided_slice %248 {offsets = [0, 256], sizes = [8, 128], strides = [1, 1]} : vector<8x384xf32> to vector<8x128xf32>
    %252 = vector.extract_strided_slice %242 {offsets = [0, 384], sizes = [8, 128], strides = [1, 1]} : vector<8x512xf32> to vector<8x128xf32>
    %253 = math.tanh %252 : vector<8x128xf32>
    %254 = arith.mulf %250, %211 : vector<8x128xf32>
    %255 = arith.mulf %249, %253 : vector<8x128xf32>
    %256 = arith.addf %254, %255 : vector<8x128xf32>
    %257 = math.tanh %256 : vector<8x128xf32>
    %258 = arith.mulf %251, %257 : vector<8x128xf32>
    %c0_80 = arith.constant 0 : index
    %c0_81 = arith.constant 0 : index
    %259 = vector.load %arg6[%c0_80, %c0_81] : memref<128x512xf32, #tpu.memory_space<vmem>>, vector<128x512xf32>
    %cst_82 = arith.constant dense<0.000000e+00> : vector<8x512xf32>
    %260 = tpu.matmul %235, %259, %cst_82 {dimension_numbers = #tpu.dot_dimension_numbers<[1], [0], [0], [1], [0, 0, 1, 1], [], []>} : vector<8x128xf32>, vector<128x512xf32>, vector<8x512xf32> -> vector<8x512xf32>
    %c0_83 = arith.constant 0 : index
    %c0_84 = arith.constant 0 : index
    %261 = vector.load %arg5[%c0_83, %c0_84] : memref<128x512xf32, #tpu.memory_space<vmem>>, vector<128x512xf32>
    %cst_85 = arith.constant dense<0.000000e+00> : vector<8x512xf32>
    %262 = tpu.matmul %258, %261, %cst_85 {dimension_numbers = #tpu.dot_dimension_numbers<[1], [0], [0], [1], [0, 0, 1, 1], [], []>} : vector<8x128xf32>, vector<128x512xf32>, vector<8x512xf32> -> vector<8x512xf32>
    %263 = arith.addf %260, %262 : vector<8x512xf32>
    %264 = arith.addf %263, %9 : vector<8x512xf32>
    %265 = vector.extract_strided_slice %264 {offsets = [0, 0], sizes = [8, 384], strides = [1, 1]} : vector<8x512xf32> to vector<8x384xf32>
    %266 = arith.negf %265 : vector<8x384xf32>
    %267 = math.exp %266 : vector<8x384xf32>
    %cst_86 = arith.constant 1.000000e+00 : f32
    %268 = vector.broadcast %cst_86 : f32 to vector<8x384xf32>
    %269 = arith.addf %268, %267 : vector<8x384xf32>
    %270 = arith.divf %268, %269 : vector<8x384xf32>
    %271 = vector.extract_strided_slice %270 {offsets = [0, 0], sizes = [8, 128], strides = [1, 1]} : vector<8x384xf32> to vector<8x128xf32>
    %272 = vector.extract_strided_slice %270 {offsets = [0, 128], sizes = [8, 128], strides = [1, 1]} : vector<8x384xf32> to vector<8x128xf32>
    %273 = vector.extract_strided_slice %270 {offsets = [0, 256], sizes = [8, 128], strides = [1, 1]} : vector<8x384xf32> to vector<8x128xf32>
    %274 = vector.extract_strided_slice %264 {offsets = [0, 384], sizes = [8, 128], strides = [1, 1]} : vector<8x512xf32> to vector<8x128xf32>
    %275 = math.tanh %274 : vector<8x128xf32>
    %276 = arith.mulf %272, %233 : vector<8x128xf32>
    %277 = arith.mulf %271, %275 : vector<8x128xf32>
    %278 = arith.addf %276, %277 : vector<8x128xf32>
    %279 = math.tanh %278 : vector<8x128xf32>
    %280 = arith.mulf %273, %279 : vector<8x128xf32>
    %c6_i32 = arith.constant 6 : i32
    %c8_i32_87 = arith.constant 8 : i32
    %281 = arith.muli %c6_i32, %c8_i32_87 : i32
    %282 = tpu.assume_multiple %281, 8 : i32
    %283 = arith.index_cast %282 : i32 to index
    %c0_88 = arith.constant 0 : index
    %284 = vector.load %arg11[%283, %c0_88] : memref<64x512xf32, #tpu.memory_space<vmem>>, vector<8x512xf32>
    %c0_89 = arith.constant 0 : index
    %c0_90 = arith.constant 0 : index
    %285 = vector.load %arg3[%c0_89, %c0_90] : memref<128x512xf32, #tpu.memory_space<vmem>>, vector<128x512xf32>
    %cst_91 = arith.constant dense<0.000000e+00> : vector<8x512xf32>
    %286 = tpu.matmul %258, %285, %cst_91 {dimension_numbers = #tpu.dot_dimension_numbers<[1], [0], [0], [1], [0, 0, 1, 1], [], []>} : vector<8x128xf32>, vector<128x512xf32>, vector<8x512xf32> -> vector<8x512xf32>
    %287 = arith.addf %284, %286 : vector<8x512xf32>
    %288 = vector.extract_strided_slice %287 {offsets = [0, 0], sizes = [8, 384], strides = [1, 1]} : vector<8x512xf32> to vector<8x384xf32>
    %289 = arith.negf %288 : vector<8x384xf32>
    %290 = math.exp %289 : vector<8x384xf32>
    %cst_92 = arith.constant 1.000000e+00 : f32
    %291 = vector.broadcast %cst_92 : f32 to vector<8x384xf32>
    %292 = arith.addf %291, %290 : vector<8x384xf32>
    %293 = arith.divf %291, %292 : vector<8x384xf32>
    %294 = vector.extract_strided_slice %293 {offsets = [0, 0], sizes = [8, 128], strides = [1, 1]} : vector<8x384xf32> to vector<8x128xf32>
    %295 = vector.extract_strided_slice %293 {offsets = [0, 128], sizes = [8, 128], strides = [1, 1]} : vector<8x384xf32> to vector<8x128xf32>
    %296 = vector.extract_strided_slice %293 {offsets = [0, 256], sizes = [8, 128], strides = [1, 1]} : vector<8x384xf32> to vector<8x128xf32>
    %297 = vector.extract_strided_slice %287 {offsets = [0, 384], sizes = [8, 128], strides = [1, 1]} : vector<8x512xf32> to vector<8x128xf32>
    %298 = math.tanh %297 : vector<8x128xf32>
    %299 = arith.mulf %295, %256 : vector<8x128xf32>
    %300 = arith.mulf %294, %298 : vector<8x128xf32>
    %301 = arith.addf %299, %300 : vector<8x128xf32>
    %302 = math.tanh %301 : vector<8x128xf32>
    %303 = arith.mulf %296, %302 : vector<8x128xf32>
    %c0_93 = arith.constant 0 : index
    %c0_94 = arith.constant 0 : index
    %304 = vector.load %arg6[%c0_93, %c0_94] : memref<128x512xf32, #tpu.memory_space<vmem>>, vector<128x512xf32>
    %cst_95 = arith.constant dense<0.000000e+00> : vector<8x512xf32>
    %305 = tpu.matmul %280, %304, %cst_95 {dimension_numbers = #tpu.dot_dimension_numbers<[1], [0], [0], [1], [0, 0, 1, 1], [], []>} : vector<8x128xf32>, vector<128x512xf32>, vector<8x512xf32> -> vector<8x512xf32>
    %c0_96 = arith.constant 0 : index
    %c0_97 = arith.constant 0 : index
    %306 = vector.load %arg5[%c0_96, %c0_97] : memref<128x512xf32, #tpu.memory_space<vmem>>, vector<128x512xf32>
    %cst_98 = arith.constant dense<0.000000e+00> : vector<8x512xf32>
    %307 = tpu.matmul %303, %306, %cst_98 {dimension_numbers = #tpu.dot_dimension_numbers<[1], [0], [0], [1], [0, 0, 1, 1], [], []>} : vector<8x128xf32>, vector<128x512xf32>, vector<8x512xf32> -> vector<8x512xf32>
    %308 = arith.addf %305, %307 : vector<8x512xf32>
    %309 = arith.addf %308, %9 : vector<8x512xf32>
    %310 = vector.extract_strided_slice %309 {offsets = [0, 0], sizes = [8, 384], strides = [1, 1]} : vector<8x512xf32> to vector<8x384xf32>
    %311 = arith.negf %310 : vector<8x384xf32>
    %312 = math.exp %311 : vector<8x384xf32>
    %cst_99 = arith.constant 1.000000e+00 : f32
    %313 = vector.broadcast %cst_99 : f32 to vector<8x384xf32>
    %314 = arith.addf %313, %312 : vector<8x384xf32>
    %315 = arith.divf %313, %314 : vector<8x384xf32>
    %316 = vector.extract_strided_slice %315 {offsets = [0, 0], sizes = [8, 128], strides = [1, 1]} : vector<8x384xf32> to vector<8x128xf32>
    %317 = vector.extract_strided_slice %315 {offsets = [0, 128], sizes = [8, 128], strides = [1, 1]} : vector<8x384xf32> to vector<8x128xf32>
    %318 = vector.extract_strided_slice %315 {offsets = [0, 256], sizes = [8, 128], strides = [1, 1]} : vector<8x384xf32> to vector<8x128xf32>
    %319 = vector.extract_strided_slice %309 {offsets = [0, 384], sizes = [8, 128], strides = [1, 1]} : vector<8x512xf32> to vector<8x128xf32>
    %320 = math.tanh %319 : vector<8x128xf32>
    %321 = arith.mulf %317, %278 : vector<8x128xf32>
    %322 = arith.mulf %316, %320 : vector<8x128xf32>
    %323 = arith.addf %321, %322 : vector<8x128xf32>
    %324 = math.tanh %323 : vector<8x128xf32>
    %325 = arith.mulf %318, %324 : vector<8x128xf32>
    %c7_i32 = arith.constant 7 : i32
    %c8_i32_100 = arith.constant 8 : i32
    %326 = arith.muli %c7_i32, %c8_i32_100 : i32
    %327 = tpu.assume_multiple %326, 8 : i32
    %328 = arith.index_cast %327 : i32 to index
    %c0_101 = arith.constant 0 : index
    %329 = vector.load %arg11[%328, %c0_101] : memref<64x512xf32, #tpu.memory_space<vmem>>, vector<8x512xf32>
    %c0_102 = arith.constant 0 : index
    %c0_103 = arith.constant 0 : index
    %330 = vector.load %arg3[%c0_102, %c0_103] : memref<128x512xf32, #tpu.memory_space<vmem>>, vector<128x512xf32>
    %cst_104 = arith.constant dense<0.000000e+00> : vector<8x512xf32>
    %331 = tpu.matmul %303, %330, %cst_104 {dimension_numbers = #tpu.dot_dimension_numbers<[1], [0], [0], [1], [0, 0, 1, 1], [], []>} : vector<8x128xf32>, vector<128x512xf32>, vector<8x512xf32> -> vector<8x512xf32>
    %332 = arith.addf %329, %331 : vector<8x512xf32>
    %333 = vector.extract_strided_slice %332 {offsets = [0, 0], sizes = [8, 384], strides = [1, 1]} : vector<8x512xf32> to vector<8x384xf32>
    %334 = arith.negf %333 : vector<8x384xf32>
    %335 = math.exp %334 : vector<8x384xf32>
    %cst_105 = arith.constant 1.000000e+00 : f32
    %336 = vector.broadcast %cst_105 : f32 to vector<8x384xf32>
    %337 = arith.addf %336, %335 : vector<8x384xf32>
    %338 = arith.divf %336, %337 : vector<8x384xf32>
    %339 = vector.extract_strided_slice %338 {offsets = [0, 0], sizes = [8, 128], strides = [1, 1]} : vector<8x384xf32> to vector<8x128xf32>
    %340 = vector.extract_strided_slice %338 {offsets = [0, 128], sizes = [8, 128], strides = [1, 1]} : vector<8x384xf32> to vector<8x128xf32>
    %341 = vector.extract_strided_slice %338 {offsets = [0, 256], sizes = [8, 128], strides = [1, 1]} : vector<8x384xf32> to vector<8x128xf32>
    %342 = vector.extract_strided_slice %332 {offsets = [0, 384], sizes = [8, 128], strides = [1, 1]} : vector<8x512xf32> to vector<8x128xf32>
    %343 = math.tanh %342 : vector<8x128xf32>
    %344 = arith.mulf %340, %301 : vector<8x128xf32>
    %345 = arith.mulf %339, %343 : vector<8x128xf32>
    %346 = arith.addf %344, %345 : vector<8x128xf32>
    %347 = math.tanh %346 : vector<8x128xf32>
    %348 = arith.mulf %341, %347 : vector<8x128xf32>
    %c0_106 = arith.constant 0 : index
    %c0_107 = arith.constant 0 : index
    %349 = vector.load %arg6[%c0_106, %c0_107] : memref<128x512xf32, #tpu.memory_space<vmem>>, vector<128x512xf32>
    %cst_108 = arith.constant dense<0.000000e+00> : vector<8x512xf32>
    %350 = tpu.matmul %325, %349, %cst_108 {dimension_numbers = #tpu.dot_dimension_numbers<[1], [0], [0], [1], [0, 0, 1, 1], [], []>} : vector<8x128xf32>, vector<128x512xf32>, vector<8x512xf32> -> vector<8x512xf32>
    %c0_109 = arith.constant 0 : index
    %c0_110 = arith.constant 0 : index
    %351 = vector.load %arg5[%c0_109, %c0_110] : memref<128x512xf32, #tpu.memory_space<vmem>>, vector<128x512xf32>
    %cst_111 = arith.constant dense<0.000000e+00> : vector<8x512xf32>
    %352 = tpu.matmul %348, %351, %cst_111 {dimension_numbers = #tpu.dot_dimension_numbers<[1], [0], [0], [1], [0, 0, 1, 1], [], []>} : vector<8x128xf32>, vector<128x512xf32>, vector<8x512xf32> -> vector<8x512xf32>
    %353 = arith.addf %350, %352 : vector<8x512xf32>
    %354 = arith.addf %353, %9 : vector<8x512xf32>
    %355 = vector.extract_strided_slice %354 {offsets = [0, 0], sizes = [8, 384], strides = [1, 1]} : vector<8x512xf32> to vector<8x384xf32>
    %356 = arith.negf %355 : vector<8x384xf32>
    %357 = math.exp %356 : vector<8x384xf32>
    %cst_112 = arith.constant 1.000000e+00 : f32
    %358 = vector.broadcast %cst_112 : f32 to vector<8x384xf32>
    %359 = arith.addf %358, %357 : vector<8x384xf32>
    %360 = arith.divf %358, %359 : vector<8x384xf32>
    %361 = vector.extract_strided_slice %360 {offsets = [0, 0], sizes = [8, 128], strides = [1, 1]} : vector<8x384xf32> to vector<8x128xf32>
    %362 = vector.extract_strided_slice %360 {offsets = [0, 128], sizes = [8, 128], strides = [1, 1]} : vector<8x384xf32> to vector<8x128xf32>
    %363 = vector.extract_strided_slice %360 {offsets = [0, 256], sizes = [8, 128], strides = [1, 1]} : vector<8x384xf32> to vector<8x128xf32>
    %364 = vector.extract_strided_slice %354 {offsets = [0, 384], sizes = [8, 128], strides = [1, 1]} : vector<8x512xf32> to vector<8x128xf32>
    %365 = math.tanh %364 : vector<8x128xf32>
    %366 = arith.mulf %362, %323 : vector<8x128xf32>
    %367 = arith.mulf %361, %365 : vector<8x128xf32>
    %368 = arith.addf %366, %367 : vector<8x128xf32>
    %369 = math.tanh %368 : vector<8x128xf32>
    %370 = arith.mulf %363, %369 : vector<8x128xf32>
    %c8_i32_113 = arith.constant 8 : i32
    %c0_114 = arith.constant 0 : index
    %c0_115 = arith.constant 0 : index
    %371 = vector.load %arg8[%c0_114, %c0_115] : memref<128x128xf32, #tpu.memory_space<vmem>>, vector<128x128xf32>
    %cst_116 = arith.constant dense<0.000000e+00> : vector<8x128xf32>
    %372 = tpu.matmul %370, %371, %cst_116 {dimension_numbers = #tpu.dot_dimension_numbers<[1], [0], [0], [1], [0, 0, 1, 1], [], []>} : vector<8x128xf32>, vector<128x128xf32>, vector<8x128xf32> -> vector<8x128xf32>
    %c0_117 = arith.constant 0 : index
    %c0_118 = arith.constant 0 : index
    %373 = vector.load %arg9[%c0_117, %c0_118] : memref<1x128xf32, #tpu.memory_space<vmem>>, vector<1x128xf32>
    %374 = vector.broadcast %373 : vector<1x128xf32> to vector<8x128xf32>
    %375 = arith.addf %372, %374 : vector<8x128xf32>
    %c0_119 = arith.constant 0 : index
    %c0_120 = arith.constant 0 : index
    %376 = vector.load %arg10[%c0_119, %c0_120] : memref<8x128xf32, #tpu.memory_space<vmem>>, vector<8x128xf32>
    tpu.vector_store %arg10[%c0_119, %c0_120], %375 {strides = array<i32>} : memref<8x128xf32, #tpu.memory_space<vmem>>, vector<8x128xf32>,
    return
  }
  func.func @transform_0(%arg0: i32) -> (i32, i32) {
    %c0_i32 = arith.constant 0 : i32
    %c0_i32_0 = arith.constant 0 : i32
    %c0_i32_1 = arith.constant 0 : i32
    return %c0_i32, %c0_i32_0 : i32, i32
  }
  func.func @transform_1(%arg0: i32) -> (i32, i32) {
    %c0_i32 = arith.constant 0 : i32
    %c0_i32_0 = arith.constant 0 : i32
    %c0_i32_1 = arith.constant 0 : i32
    return %c0_i32, %c0_i32_0 : i32, i32
  }
  func.func @transform_2(%arg0: i32) -> (i32, i32) {
    %c0_i32 = arith.constant 0 : i32
    %c0_i32_0 = arith.constant 0 : i32
    %c0_i32_1 = arith.constant 0 : i32
    return %c0_i32, %c0_i32_0 : i32, i32
  }
  func.func @transform_3(%arg0: i32) -> (i32, i32) {
    %c0_i32 = arith.constant 0 : i32
    %c0_i32_0 = arith.constant 0 : i32
    %c0_i32_1 = arith.constant 0 : i32
    return %c0_i32, %c0_i32_0 : i32, i32
  }
  func.func @transform_4(%arg0: i32) -> (i32, i32) {
    %c0_i32 = arith.constant 0 : i32
    %c0_i32_0 = arith.constant 0 : i32
    %c0_i32_1 = arith.constant 0 : i32
    return %c0_i32, %c0_i32_0 : i32, i32
  }
  func.func @transform_5(%arg0: i32) -> (i32, i32) {
    %c0_i32 = arith.constant 0 : i32
    %c0_i32_0 = arith.constant 0 : i32
    %c0_i32_1 = arith.constant 0 : i32
    return %c0_i32, %c0_i32_0 : i32, i32
  }
  func.func @transform_6(%arg0: i32) -> (i32, i32) {
    %c0_i32 = arith.constant 0 : i32
    %c0_i32_0 = arith.constant 0 : i32
    %c0_i32_1 = arith.constant 0 : i32
    return %c0_i32, %c0_i32_0 : i32, i32
  }
  func.func @transform_7(%arg0: i32) -> (i32, i32) {
    %c0_i32 = arith.constant 0 : i32
    %c0_i32_0 = arith.constant 0 : i32
    %c0_i32_1 = arith.constant 0 : i32
    return %c0_i32, %c0_i32_0 : i32, i32
  }
  func.func @transform_8(%arg0: i32) -> (i32, i32) {
    %c0_i32 = arith.constant 0 : i32
    %c0_i32_0 = arith.constant 0 : i32
    %c0_i32_1 = arith.constant 0 : i32
    return %c0_i32, %c0_i32_0 : i32, i32
  }
  func.func @transform_9(%arg0: i32) -> (i32, i32) {
    %c0_i32 = arith.constant 0 : i32
    %c0_i32_0 = arith.constant 0 : i32
    %c0_i32_1 = arith.constant 0 : i32
    return %c0_i32, %c0_i32_0 : i32, i32
  }
}

</mosaic_0001>

<llo_original>
// kernel: tpu_custom_call.1
$region0: #{tpu_custom_call.1}
  #allocation0 [shape = 'u32[]', space=smem, size = 0x4, offset = 0x4, fixed_abs, tag = 'smem constant byte address 0x4 - core index']
  #allocation1 [shape = 'u32[144,128]{1,0:T(1,128)}', space=vmem, size = 0x12000, scoped, tag = 'internal scratch']
  #allocation2 [shape = 'f32[64,512]{1,0:T(8,128)}', space=vmem, size = 0x20000, scoped, tag = 'scratch operand']
  %s0 = inlined_call_operand.vmem [shape: f32[64,26], index: 0, kind: input, shape index: {}]
  %s1 = inlined_call_operand.hbm [shape: f32[26,512], index: 1, kind: input, shape index: {}]
  %s2 = inlined_call_operand.hbm [shape: f32[128,512], index: 2, kind: input, shape index: {}]
  %s3 = inlined_call_operand.vmem [shape: f32[1,512], index: 3, kind: input, shape index: {}]
  %s4 = inlined_call_operand.hbm [shape: f32[128,512], index: 4, kind: input, shape index: {}]
  %s5 = inlined_call_operand.hbm [shape: f32[128,512], index: 5, kind: input, shape index: {}]
  %s6 = inlined_call_operand.vmem [shape: f32[1,512], index: 6, kind: input, shape index: {}]
  %s7 = inlined_call_operand.hbm [shape: f32[128,128], index: 7, kind: input, shape index: {}]
  %s8 = inlined_call_operand.vmem [shape: f32[1,128], index: 8, kind: input, shape index: {}]
  %s9 = inlined_call_operand.hbm [shape: f32[8,128], index: 9, kind: output, shape index: {}]
  %s10 = sld [smem:[#allocation0]]
  $region66: #{tpu_custom_call.1} parent=0
    _
  %s12 = ssub.s32 1, %s10
  %s13 = scalar_select 0, %s12, %s10
  $region1: #{tpu_custom_call.1} parent=0
    #allocation3 [shape = 'u8[65536]{0}', space=vmem, size = 0x10000, scoped, tag = 'input window, operand 1, single buffered']
    #allocation4 [shape = 's32[1]{0}', space=sflag, size = 0x4, scoped, tag = 'scoped memory for tpu_custom_call.1']
    #allocation5 [shape = 's32[1]{0}', space=sflag, size = 0x4, scoped, tag = 'scoped memory for tpu_custom_call.1']
    #allocation6 [shape = 'u8[262144]{0}', space=vmem, size = 0x40000, scoped, tag = 'input window, operand 2, single buffered']
    #allocation7 [shape = 's32[1]{0}', space=sflag, size = 0x4, scoped, tag = 'scoped memory for tpu_custom_call.1']
    #allocation8 [shape = 'u8[262144]{0}', space=vmem, size = 0x40000, scoped, tag = 'input window, operand 4, single buffered']
    #allocation9 [shape = 'u8[262144]{0}', space=vmem, size = 0x40000, scoped, tag = 'input window, operand 5, single buffered']
    #allocation10 [shape = 's32[1]{0}', space=sflag, size = 0x4, scoped, tag = 'scoped memory for tpu_custom_call.1']
    #allocation11 [shape = 'u8[65536]{0}', space=vmem, size = 0x10000, scoped, tag = 'input window, operand 7, single buffered']
    #allocation12 [shape = 'u8[4096]{0}', space=vmem, size = 0x1000, scoped, tag = 'output window, operand 0, single buffered']
    %14 = vsyncpa [#allocation4], 0
    %15 = vsyncpa [#allocation7], 0
    %16 = vsyncpa [#allocation10], 0
    %17 = vsyncpa [#allocation5], 0
    // Predicated region
    $region2: #{tpu_custom_call.1} parent=1 // pred_check
      _
    $region3: #{tpu_custom_call.1} parent=1 // pred_check_branch
      %19 = sbr.rel (0) target = $region5
    $region4: #{tpu_custom_call.1} parent=1 // pred_region
      _
    $region5: #{tpu_custom_call.1} parent=1 // pred_fallthru
      _
    // Predicated region
    $region6: #{tpu_custom_call.1} parent=1 // pred_check
      _
    $region7: #{tpu_custom_call.1} parent=1 // pred_check_branch
      %21 = sbr.rel (0) target = $region9
    $region8: #{tpu_custom_call.1} parent=1 // pred_region
      %s23 = ssub.s32 2048, 2048
      %24 = vsyncadd [#allocation4], %s23
      %s25 = sshll.u32 [#allocation3], 4
      %s26 = int_to_ptr.vmem [resolvable:$true] %s25
      %31 = dma.hbm_to_vmem [thread:$0]  %s1, 2048, %s26, [#allocation4], 512, 512, 32
    $region9: #{tpu_custom_call.1} parent=1 // pred_fallthru
      _
    // Predicated region
    $region10: #{tpu_custom_call.1} parent=1 // pred_check
      _
    $region11: #{tpu_custom_call.1} parent=1 // pred_check_branch
      %33 = sbr.rel (0) target = $region13
    $region12: #{tpu_custom_call.1} parent=1 // pred_region
      %s35 = ssub.s32 8192, 8192
      %36 = vsyncadd [#allocation7], %s35
      %s37 = sshll.u32 [#allocation6], 4
      %s38 = int_to_ptr.vmem [resolvable:$true] %s37
      %43 = dma.hbm_to_vmem [thread:$0]  %s2, 8192, %s38, [#allocation7], 512, 512, 32
    $region13: #{tpu_custom_call.1} parent=1 // pred_fallthru
      _
    // Predicated region
    $region14: #{tpu_custom_call.1} parent=1 // pred_check
      _
    $region15: #{tpu_custom_call.1} parent=1 // pred_check_branch
      %45 = sbr.rel (0) target = $region17
    $region16: #{tpu_custom_call.1} parent=1 // pred_region
      _
    $region17: #{tpu_custom_call.1} parent=1 // pred_fallthru
      _
    // Predicated region
    $region18: #{tpu_custom_call.1} parent=1 // pred_check
      _
    $region19: #{tpu_custom_call.1} parent=1 // pred_check_branch
      %47 = sbr.rel (0) target = $region21
    $region20: #{tpu_custom_call.1} parent=1 // pred_region
      %s49 = ssub.s32 8192, 8192
      %50 = vsyncadd [#allocation7], %s49
      %s51 = sshll.u32 [#allocation8], 4
      %s52 = int_to_ptr.vmem [resolvable:$true] %s51
      %57 = dma.hbm_to_vmem [thread:$0]  %s4, 8192, %s52, [#allocation7], 512, 512, 32
    $region21: #{tpu_custom_call.1} parent=1 // pred_fallthru
      _
    // Predicated region
    $region22: #{tpu_custom_call.1} parent=1 // pred_check
      _
    $region23: #{tpu_custom_call.1} parent=1 // pred_check_branch
      %59 = sbr.rel (0) target = $region25
    $region24: #{tpu_custom_call.1} parent=1 // pred_region
      %s61 = ssub.s32 8192, 8192
      %62 = vsyncadd [#allocation10], %s61
      %s63 = sshll.u32 [#allocation9], 4
      %s64 = int_to_ptr.vmem [resolvable:$true] %s63
      %69 = dma.hbm_to_vmem [thread:$0]  %s5, 8192, %s64, [#allocation10], 512, 512, 32
    $region25: #{tpu_custom_call.1} parent=1 // pred_fallthru
      _
    // Predicated region
    $region26: #{tpu_custom_call.1} parent=1 // pred_check
      _
    $region27: #{tpu_custom_call.1} parent=1 // pred_check_branch
      %71 = sbr.rel (0) target = $region29
    $region28: #{tpu_custom_call.1} parent=1 // pred_region
      _
    $region29: #{tpu_custom_call.1} parent=1 // pred_fallthru
      _
    // Predicated region
    $region30: #{tpu_custom_call.1} parent=1 // pred_check
      _
    $region31: #{tpu_custom_call.1} parent=1 // pred_check_branch
      %73 = sbr.rel (0) target = $region33
    $region32: #{tpu_custom_call.1} parent=1 // pred_region
      %s75 = ssub.s32 2048, 2048
      %76 = vsyncadd [#allocation10], %s75
      %s77 = sshll.u32 [#allocation11], 4
      %s78 = int_to_ptr.vmem [resolvable:$true] %s77
      %83 = dma.hbm_to_vmem [thread:$0]  %s7, 2048, %s78, [#allocation10], 128, 128, 8
    $region33: #{tpu_custom_call.1} parent=1 // pred_fallthru
      _
    // Predicated region
    $region34: #{tpu_custom_call.1} parent=1 // pred_check
      _
    $region35: #{tpu_custom_call.1} parent=1 // pred_check_branch
      %85 = sbr.rel (0) target = $region37
    $region36: #{tpu_custom_call.1} parent=1 // pred_region
      _
    $region37: #{tpu_custom_call.1} parent=1 // pred_fallthru
      _
    // Predicated region
    $region38: #{tpu_custom_call.1} parent=1 // pred_check
      _
    $region39: #{tpu_custom_call.1} parent=1 // pred_check_branch
      %87 = sbr.rel (0) target = $region41
    $region40: #{tpu_custom_call.1} parent=1 // pred_region
      %88 = dma.done [#allocation4], 2048
    $region41: #{tpu_custom_call.1} parent=1 // pred_fallthru
      _
    // Predicated region
    $region42: #{tpu_custom_call.1} parent=1 // pred_check
      _
    $region43: #{tpu_custom_call.1} parent=1 // pred_check_branch
      %90 = sbr.rel (0) target = $region45
    $region44: #{tpu_custom_call.1} parent=1 // pred_region
      %91 = dma.done [#allocation7], 8192
    $region45: #{tpu_custom_call.1} parent=1 // pred_fallthru
      _
    // Predicated region
    $region46: #{tpu_custom_call.1} parent=1 // pred_check
      _
    $region47: #{tpu_custom_call.1} parent=1 // pred_check_branch
      %93 = sbr.rel (0) target = $region49
    $region48: #{tpu_custom_call.1} parent=1 // pred_region
      %94 = dma.done [#allocation7], 8192
    $region49: #{tpu_custom_call.1} parent=1 // pred_fallthru
      _
    // Predicated region
    $region50: #{tpu_custom_call.1} parent=1 // pred_check
      _
    $region51: #{tpu_custom_call.1} parent=1 // pred_check_branch
      %96 = sbr.rel (0) target = $region53
    $region52: #{tpu_custom_call.1} parent=1 // pred_region
      %97 = dma.done [#allocation10], 8192
    $region53: #{tpu_custom_call.1} parent=1 // pred_fallthru
      _
    // Predicated region
    $region54: #{tpu_custom_call.1} parent=1 // pred_check
      _
    $region55: #{tpu_custom_call.1} parent=1 // pred_check_branch
      %99 = sbr.rel (0) target = $region57
    $region56: #{tpu_custom_call.1} parent=1 // pred_region
      %100 = dma.done [#allocation10], 2048
    $region57: #{tpu_custom_call.1} parent=1 // pred_fallthru
      _
    %v101 = vld [vmem:[%s0] sm:$0xff]
    %v102 = vld [vmem:[%s0 + $0x8] sm:$0xff]
    %v103 = vld [vmem:[%s0 + $0x10] sm:$0xff]
    %v104 = vld [vmem:[%s0 + $0x18] sm:$0xff]
    %v105 = vld [vmem:[%s0 + $0x20] sm:$0xff]
    %v106 = vld [vmem:[%s0 + $0x28] sm:$0xff]
    %v107 = vld [vmem:[%s0 + $0x30] sm:$0xff]
    %v108 = vld [vmem:[%s0 + $0x38] sm:$0xff]
    %v109 = vld [vmem:[#allocation3] sm:$0xff]
    %v110 = vld [vmem:[#allocation3 + $0x8] sm:$0xff]
    %v111 = vld [vmem:[#allocation3 + $0x10] sm:$0xff]
    %v112 = vld [vmem:[#allocation3 + $0x18] sm:$0xff]
    %v113 = vld [vmem:[#allocation3 + $0x20] sm:$0xff]
    %v114 = vld [vmem:[#allocation3 + $0x28] sm:$0xff]
    %v115 = vld [vmem:[#allocation3 + $0x30] sm:$0xff]
    %v116 = vld [vmem:[#allocation3 + $0x38] sm:$0xff]
    %v117 = vld [vmem:[#allocation3 + $0x40] sm:$0xff]
    %v118 = vld [vmem:[#allocation3 + $0x48] sm:$0xff]
    %v119 = vld [vmem:[#allocation3 + $0x50] sm:$0xff]
    %v120 = vld [vmem:[#allocation3 + $0x58] sm:$0xff]
    %v121 = vld [vmem:[#allocation3 + $0x60] sm:$0x3]
    %v122 = vld [vmem:[#allocation3 + $0x68] sm:$0x3]
    %v123 = vld [vmem:[#allocation3 + $0x70] sm:$0x3]
    %v124 = vld [vmem:[#allocation3 + $0x78] sm:$0x3]
    %v125 = vld [vmem:[%s3] sm:$0xf]
    %v127 = vlaneseq
    %v128 = vshrl.u32 %v127, 7
    %v129 = vsub.s32 0, %v128
    %v130 = vrot.slane %v125, %v129
    %v131 = vlaneseq
    %v132 = vshrl.u32 %v131, 7
    %v133 = vsub.s32 1, %v132
    %v134 = vrot.slane %v125, %v133
    %v135 = vlaneseq
    %v136 = vshrl.u32 %v135, 7
    %v137 = vsub.s32 2, %v136
    %v138 = vrot.slane %v125, %v137
    %v139 = vlaneseq
    %v140 = vshrl.u32 %v139, 7
    %v141 = vsub.s32 3, %v140
    %v142 = vrot.slane %v125, %v141
    %vm147 = vcmask 211968
    %v149 = vsel %vm147, %v101, 0
    %v152 = vsel %vm147, %v102, 0
    %v155 = vsel %vm147, %v103, 0
    %v158 = vsel %vm147, %v104, 0
    %v161 = vsel %vm147, %v105, 0
    %v164 = vsel %vm147, %v106, 0
    %v167 = vsel %vm147, %v107, 0
    %v170 = vsel %vm147, %v108, 0
    %vm172 = vcmask 1041408
    %v174 = vsel %vm172, %v121, 0
    %v177 = vsel %vm172, %v122, 0
    %v180 = vsel %vm172, %v123, 0
    %v183 = vsel %vm172, %v124, 0
    %185 = vmatprep.subr.mxu0 0.0
    %186 = vmatpush1.msra.mxu0 0.0
    %187 = vmatprep.subr.mxu0 0.0
    %188 = vmatpush1.msra.mxu0 0.0
    %189 = vmatprep.subr.mxu0 0.0
    %190 = vmatpush1.msra.mxu0 0.0
    %191 = vmatprep.subr.mxu0 0.0
    %192 = vmatpush1.msra.mxu0 0.0
    %193 = vmatprep.subr.mxu0 0.0
    %194 = vmatpush1.msra.mxu0 0.0
    %195 = vmatprep.subr.mxu0 0.0
    %196 = vmatpush1.msra.mxu0 0.0
    %197 = vmatprep.subr.mxu0 0.0
    %198 = vmatpush1.msra.mxu0 0.0
    %199 = vmatprep.subr.mxu0 0.0
    %200 = vmatpush1.msra.mxu0 0.0
    %201 = vmatprep.subr.mxu0 0.0
    %202 = vmatpush1.msra.mxu0 0.0
    %203 = vmatprep.subr.mxu0 0.0
    %204 = vmatpush1.msra.mxu0 0.0
    %205 = vmatprep.subr.mxu0 0.0
    %206 = vmatpush1.msra.mxu0 0.0
    %207 = vmatprep.subr.mxu0 0.0
    %208 = vmatpush1.msra.mxu0 0.0
    %209 = vmatprep.subr.mxu0 %v177
    %210 = vmatpush1.msra.mxu0 %v174
    %211 = vmatprep.subr.mxu0 %v118
    %212 = vmatpush1.msra.mxu0 %v117
    %213 = vmatprep.subr.mxu0 %v114
    %214 = vmatpush1.msra.mxu0 %v113
    %215 = vmatprep.subr.mxu0 %v110
    %216 = vmatpush1.msra.mxu0 %v109
    %217 = vmatprep.subr.mxu0 0.0
    %218 = vmatpush2.msra.mxu0 0.0
    %219 = vmatprep.subr.mxu0 0.0
    %220 = vmatpush2.msra.mxu0 0.0
    %221 = vmatprep.subr.mxu0 0.0
    %222 = vmatpush2.msra.mxu0 0.0
    %223 = vmatprep.subr.mxu0 0.0
    %224 = vmatpush2.msra.mxu0 0.0
    %225 = vmatprep.subr.mxu0 0.0
    %226 = vmatpush2.msra.mxu0 0.0
    %227 = vmatprep.subr.mxu0 0.0
    %228 = vmatpush2.msra.mxu0 0.0
    %229 = vmatprep.subr.mxu0 0.0
    %230 = vmatpush2.msra.mxu0 0.0
    %231 = vmatprep.subr.mxu0 0.0
    %232 = vmatpush2.msra.mxu0 0.0
    %233 = vmatprep.subr.mxu0 0.0
    %234 = vmatpush2.msra.mxu0 0.0
    %235 = vmatprep.subr.mxu0 0.0
    %236 = vmatpush2.msra.mxu0 0.0
    %237 = vmatprep.subr.mxu0 0.0
    %238 = vmatpush2.msra.mxu0 0.0
    %239 = vmatprep.subr.mxu0 0.0
    %240 = vmatpush2.msra.mxu0 0.0
    %241 = vmatprep.subr.mxu0 0.0
    %242 = vmatpush2.msra.mxu0 0.0
    %243 = vmatprep.subr.mxu0 0.0
    %244 = vmatpush2.msra.mxu0 0.0
    %245 = vmatprep.subr.mxu0 0.0
    %246 = vmatpush2.msra.mxu0 0.0
    %247 = vmatprep.subr.mxu0 0.0
    %248 = vmatpush2.msra.mxu0 0.0
    %249 = vmatprep.mubr.f32.mxu0 0.0
    %250 = vmatmul.mubr.f32.gmra.mxu0 %v149
    %v251 = vpop.f32.mrf.mxu0
    %v252 = vadd.f32 %v130, %v251
    %v253 = vpop.f32.mrf.mxu0
    %v254 = vadd.f32 %v134, %v253
    %255 = vmatprep.mubr.f32.mxu0 0.0
    %256 = vmatmul.mubr.f32.gmra.mxu0 %v152
    %v257 = vpop.f32.mrf.mxu0
    %v258 = vadd.f32 %v130, %v257
    %v259 = vpop.f32.mrf.mxu0
    %v260 = vadd.f32 %v134, %v259
    %261 = vmatprep.mubr.f32.mxu0 0.0
    %262 = vmatmul.mubr.f32.gmra.mxu0 %v155
    %v263 = vpop.f32.mrf.mxu0
    %v264 = vadd.f32 %v130, %v263
    %v265 = vpop.f32.mrf.mxu0
    %v266 = vadd.f32 %v134, %v265
    %267 = vmatprep.mubr.f32.mxu0 0.0
    %268 = vmatmul.mubr.f32.gmra.mxu0 %v158
    %v269 = vpop.f32.mrf.mxu0
    %v270 = vadd.f32 %v130, %v269
    %v271 = vpop.f32.mrf.mxu0
    %v272 = vadd.f32 %v134, %v271
    %273 = vmatprep.mubr.f32.mxu0 0.0
    %274 = vmatmul.mubr.f32.gmra.mxu0 %v161
    %v275 = vpop.f32.mrf.mxu0
    %v276 = vadd.f32 %v130, %v275
    %v277 = vpop.f32.mrf.mxu0
    %v278 = vadd.f32 %v134, %v277
    %279 = vmatprep.mubr.f32.mxu0 0.0
    %280 = vmatmul.mubr.f32.gmra.mxu0 %v164
    %v281 = vpop.f32.mrf.mxu0
    %v282 = vadd.f32 %v130, %v281
    %v283 = vpop.f32.mrf.mxu0
    %v284 = vadd.f32 %v134, %v283
    %285 = vmatprep.mubr.f32.mxu0 0.0
    %286 = vmatmul.mubr.f32.gmra.mxu0 %v167
    %v287 = vpop.f32.mrf.mxu0
    %v288 = vadd.f32 %v130, %v287
    %v289 = vpop.f32.mrf.mxu0
    %v290 = vadd.f32 %v134, %v289
    %291 = vmatprep.mubr.f32.mxu0 0.0
    %292 = vmatmul.mubr.f32.gmra.mxu0 %v170
    %v293 = vpop.f32.mrf.mxu0
    %v294 = vadd.f32 %v130, %v293
    %v295 = vpop.f32.mrf.mxu0
    %v296 = vadd.f32 %v134, %v295
    %297 = vdwg.mxu0
    %298 = vmatprep.subr.mxu0 0.0
    %299 = vmatpush1.msra.mxu0 0.0
    %300 = vmatprep.subr.mxu0 0.0
    %301 = vmatpush1.msra.mxu0 0.0
    %302 = vmatprep.subr.mxu0 0.0
    %303 = vmatpush1.msra.mxu0 0.0
    %304 = vmatprep.subr.mxu0 0.0
    %305 = vmatpush1.msra.mxu0 0.0
    %306 = vmatprep.subr.mxu0 0.0
    %307 = vmatpush1.msra.mxu0 0.0
    %308 = vmatprep.subr.mxu0 0.0
    %309 = vmatpush1.msra.mxu0 0.0
    %310 = vmatprep.subr.mxu0 0.0
    %311 = vmatpush1.msra.mxu0 0.0
    %312 = vmatprep.subr.mxu0 0.0
    %313 = vmatpush1.msra.mxu0 0.0
    %314 = vmatprep.subr.mxu0 0.0
    %315 = vmatpush1.msra.mxu0 0.0
    %316 = vmatprep.subr.mxu0 0.0
    %317 = vmatpush1.msra.mxu0 0.0
    %318 = vmatprep.subr.mxu0 0.0
    %319 = vmatpush1.msra.mxu0 0.0
    %320 = vmatprep.subr.mxu0 0.0
    %321 = vmatpush1.msra.mxu0 0.0
    %322 = vmatprep.subr.mxu0 %v183
    %323 = vmatpush1.msra.mxu0 %v180
    %324 = vmatprep.subr.mxu0 %v120
    %325 = vmatpush1.msra.mxu0 %v119
    %326 = vmatprep.subr.mxu0 %v116
    %327 = vmatpush1.msra.mxu0 %v115
    %328 = vmatprep.subr.mxu0 %v112
    %329 = vmatpush1.msra.mxu0 %v111
    %330 = vmatprep.subr.mxu0 0.0
    %331 = vmatpush2.msra.mxu0 0.0
    %332 = vmatprep.subr.mxu0 0.0
    %333 = vmatpush2.msra.mxu0 0.0
    %334 = vmatprep.subr.mxu0 0.0
    %335 = vmatpush2.msra.mxu0 0.0
    %336 = vmatprep.subr.mxu0 0.0
    %337 = vmatpush2.msra.mxu0 0.0
    %338 = vmatprep.subr.mxu0 0.0
    %339 = vmatpush2.msra.mxu0 0.0
    %340 = vmatprep.subr.mxu0 0.0
    %341 = vmatpush2.msra.mxu0 0.0
    %342 = vmatprep.subr.mxu0 0.0
    %343 = vmatpush2.msra.mxu0 0.0
    %344 = vmatprep.subr.mxu0 0.0
    %345 = vmatpush2.msra.mxu0 0.0
    %346 = vmatprep.subr.mxu0 0.0
    %347 = vmatpush2.msra.mxu0 0.0
    %348 = vmatprep.subr.mxu0 0.0
    %349 = vmatpush2.msra.mxu0 0.0
    %350 = vmatprep.subr.mxu0 0.0
    %351 = vmatpush2.msra.mxu0 0.0
    %352 = vmatprep.subr.mxu0 0.0
    %353 = vmatpush2.msra.mxu0 0.0
    %354 = vmatprep.subr.mxu0 0.0
    %355 = vmatpush2.msra.mxu0 0.0
    %356 = vmatprep.subr.mxu0 0.0
    %357 = vmatpush2.msra.mxu0 0.0
    %358 = vmatprep.subr.mxu0 0.0
    %359 = vmatpush2.msra.mxu0 0.0
    %360 = vmatprep.subr.mxu0 0.0
    %361 = vmatpush2.msra.mxu0 0.0
    %362 = vmatprep.mubr.f32.mxu0 0.0
    %363 = vmatmul.mubr.f32.gmra.mxu0 %v149
    %v364 = vpop.f32.mrf.mxu0
    %v365 = vadd.f32 %v138, %v364
    %v366 = vpop.f32.mrf.mxu0
    %v367 = vadd.f32 %v142, %v366
    %368 = vmatprep.mubr.f32.mxu0 0.0
    %369 = vmatmul.mubr.f32.gmra.mxu0 %v152
    %v370 = vpop.f32.mrf.mxu0
    %v371 = vadd.f32 %v138, %v370
    %v372 = vpop.f32.mrf.mxu0
    %v373 = vadd.f32 %v142, %v372
    %374 = vmatprep.mubr.f32.mxu0 0.0
    %375 = vmatmul.mubr.f32.gmra.mxu0 %v155
    %v376 = vpop.f32.mrf.mxu0
    %v377 = vadd.f32 %v138, %v376
    %v378 = vpop.f32.mrf.mxu0
    %v379 = vadd.f32 %v142, %v378
    %380 = vmatprep.mubr.f32.mxu0 0.0
    %381 = vmatmul.mubr.f32.gmra.mxu0 %v158
    %v382 = vpop.f32.mrf.mxu0
    %v383 = vadd.f32 %v138, %v382
    %v384 = vpop.f32.mrf.mxu0
    %v385 = vadd.f32 %v142, %v384
    %386 = vmatprep.mubr.f32.mxu0 0.0
    %387 = vmatmul.mubr.f32.gmra.mxu0 %v161
    %v388 = vpop.f32.mrf.mxu0
    %v389 = vadd.f32 %v138, %v388
    %v390 = vpop.f32.mrf.mxu0
    %v391 = vadd.f32 %v142, %v390
    %392 = vmatprep.mubr.f32.mxu0 0.0
    %393 = vmatmul.mubr.f32.gmra.mxu0 %v164
    %v394 = vpop.f32.mrf.mxu0
    %v395 = vadd.f32 %v138, %v394
    %v396 = vpop.f32.mrf.mxu0
    %v397 = vadd.f32 %v142, %v396
    %398 = vmatprep.mubr.f32.mxu0 0.0
    %399 = vmatmul.mubr.f32.gmra.mxu0 %v167
    %v400 = vpop.f32.mrf.mxu0
    %v401 = vadd.f32 %v138, %v400
    %v402 = vpop.f32.mrf.mxu0
    %v403 = vadd.f32 %v142, %v402
    %404 = vmatprep.mubr.f32.mxu0 0.0
    %405 = vmatmul.mubr.f32.gmra.mxu0 %v170
    %v406 = vpop.f32.mrf.mxu0
    %v407 = vadd.f32 %v138, %v406
    %v408 = vpop.f32.mrf.mxu0
    %v409 = vadd.f32 %v142, %v408
    %410 = vdwg.mxu0
    %411 = vst [vmem:[#allocation2] sm:$0xff] %v252
    %412 = vst [vmem:[#allocation2 + $0x8] sm:$0xff] %v254
    %413 = vst [vmem:[#allocation2 + $0x10] sm:$0xff] %v365
    %414 = vst [vmem:[#allocation2 + $0x18] sm:$0xff] %v367
    %415 = vst [vmem:[#allocation2 + $0x20] sm:$0xff] %v258
    %416 = vst [vmem:[#allocation2 + $0x28] sm:$0xff] %v260
    %417 = vst [vmem:[#allocation2 + $0x30] sm:$0xff] %v371
    %418 = vst [vmem:[#allocation2 + $0x38] sm:$0xff] %v373
    %419 = vst [vmem:[#allocation2 + $0x40] sm:$0xff] %v264
    %420 = vst [vmem:[#allocation2 + $0x48] sm:$0xff] %v266
    %421 = vst [vmem:[#allocation2 + $0x50] sm:$0xff] %v377
    %422 = vst [vmem:[#allocation2 + $0x58] sm:$0xff] %v379
    %423 = vst [vmem:[#allocation2 + $0x60] sm:$0xff] %v270
    %424 = vst [vmem:[#allocation2 + $0x68] sm:$0xff] %v272
    %425 = vst [vmem:[#allocation2 + $0x70] sm:$0xff] %v383
    %426 = vst [vmem:[#allocation2 + $0x78] sm:$0xff] %v385
    %427 = vst [vmem:[#allocation2 + $0x80] sm:$0xff] %v276
    %428 = vst [vmem:[#allocation2 + $0x88] sm:$0xff] %v278
    %429 = vst [vmem:[#allocation2 + $0x90] sm:$0xff] %v389
    %430 = vst [vmem:[#allocation2 + $0x98] sm:$0xff] %v391
    %431 = vst [vmem:[#allocation2 + $0xa0] sm:$0xff] %v282
    %432 = vst [vmem:[#allocation2 + $0xa8] sm:$0xff] %v284
    %433 = vst [vmem:[#allocation2 + $0xb0] sm:$0xff] %v395
    %434 = vst [vmem:[#allocation2 + $0xb8] sm:$0xff] %v397
    %435 = vst [vmem:[#allocation2 + $0xc0] sm:$0xff] %v288
    %436 = vst [vmem:[#allocation2 + $0xc8] sm:$0xff] %v290
    %437 = vst [vmem:[#allocation2 + $0xd0] sm:$0xff] %v401
    %438 = vst [vmem:[#allocation2 + $0xd8] sm:$0xff] %v403
    %439 = vst [vmem:[#allocation2 + $0xe0] sm:$0xff] %v294
    %440 = vst [vmem:[#allocation2 + $0xe8] sm:$0xff] %v296
    %441 = vst [vmem:[#allocation2 + $0xf0] sm:$0xff] %v407
    %442 = vst [vmem:[#allocation2 + $0xf8] sm:$0xff] %v409
    %v443 = vld [vmem:[%s6] sm:$0xf]
    %v445 = vlaneseq
    %v446 = vshrl.u32 %v445, 7
    %v447 = vsub.s32 0, %v446
    %v448 = vrot.slane %v443, %v447
    %v449 = vlaneseq
    %v450 = vshrl.u32 %v449, 7
    %v451 = vsub.s32 1, %v450
    %v452 = vrot.slane %v443, %v451
    %v453 = vlaneseq
    %v454 = vshrl.u32 %v453, 7
    %v455 = vsub.s32 2, %v454
    %v456 = vrot.slane %v443, %v455
    %v457 = vlaneseq
    %v458 = vshrl.u32 %v457, 7
    %v459 = vsub.s32 3, %v458
    %v460 = vrot.slane %v443, %v459
    %s465 = smul.u32 0, 4
    %s466 = smul.addr %s465, 8
    %s467 = scalar_lea.vmem [#allocation2], %s466
    %v468 = vld [vmem:[%s467] sm:$0xff]
    %v469 = vld [vmem:[%s467 + $0x8] sm:$0xff]
    %v470 = vld [vmem:[%s467 + $0x10] sm:$0xff]
    %v471 = vld [vmem:[%s467 + $0x18] sm:$0xff]
    %v472 = vld [vmem:[#allocation6] sm:$0xff]
    %v473 = vld [vmem:[#allocation6 + $0x8] sm:$0xff]
    %v474 = vld [vmem:[#allocation6 + $0x10] sm:$0xff]
    %v475 = vld [vmem:[#allocation6 + $0x18] sm:$0xff]
    %v476 = vld [vmem:[#allocation6 + $0x20] sm:$0xff]
    %v477 = vld [vmem:[#allocation6 + $0x28] sm:$0xff]
    %v478 = vld [vmem:[#allocation6 + $0x30] sm:$0xff]
    %v479 = vld [vmem:[#allocation6 + $0x38] sm:$0xff]
    %v480 = vld [vmem:[#allocation6 + $0x40] sm:$0xff]
    %v481 = vld [vmem:[#allocation6 + $0x48] sm:$0xff]
    %v482 = vld [vmem:[#allocation6 + $0x50] sm:$0xff]
    %v483 = vld [vmem:[#allocation6 + $0x58] sm:$0xff]
    %v484 = vld [vmem:[#allocation6 + $0x60] sm:$0xff]
    %v485 = vld [vmem:[#allocation6 + $0x68] sm:$0xff]
    %v486 = vld [vmem:[#allocation6 + $0x70] sm:$0xff]
    %v487 = vld [vmem:[#allocation6 + $0x78] sm:$0xff]
    %v488 = vld [vmem:[#allocation6 + $0x80] sm:$0xff]
    %v489 = vld [vmem:[#allocation6 + $0x88] sm:$0xff]
    %v490 = vld [vmem:[#allocation6 + $0x90] sm:$0xff]
    %v491 = vld [vmem:[#allocation6 + $0x98] sm:$0xff]
    %v492 = vld [vmem:[#allocation6 + $0xa0] sm:$0xff]
    %v493 = vld [vmem:[#allocation6 + $0xa8] sm:$0xff]
    %v494 = vld [vmem:[#allocation6 + $0xb0] sm:$0xff]
    %v495 = vld [vmem:[#allocation6 + $0xb8] sm:$0xff]
    %v496 = vld [vmem:[#allocation6 + $0xc0] sm:$0xff]
    %v497 = vld [vmem:[#allocation6 + $0xc8] sm:$0xff]
    %v498 = vld [vmem:[#allocation6 + $0xd0] sm:$0xff]
    %v499 = vld [vmem:[#allocation6 + $0xd8] sm:$0xff]
    %v500 = vld [vmem:[#allocation6 + $0xe0] sm:$0xff]
    %v501 = vld [vmem:[#allocation6 + $0xe8] sm:$0xff]
    %v502 = vld [vmem:[#allocation6 + $0xf0] sm:$0xff]
    %v503 = vld [vmem:[#allocation6 + $0xf8] sm:$0xff]
    %v504 = vld [vmem:[#allocation6 + $0x100] sm:$0xff]
    %v505 = vld [vmem:[#allocation6 + $0x108] sm:$0xff]
    %v506 = vld [vmem:[#allocation6 + $0x110] sm:$0xff]
    %v507 = vld [vmem:[#allocation6 + $0x118] sm:$0xff]
    %v508 = vld [vmem:[#allocation6 + $0x120] sm:$0xff]
    %v509 = vld [vmem:[#allocation6 + $0x128] sm:$0xff]
    %v510 = vld [vmem:[#allocation6 + $0x130] sm:$0xff]
    %v511 = vld [vmem:[#allocation6 + $0x138] sm:$0xff]
    %v512 = vld [vmem:[#allocation6 + $0x140] sm:$0xff]
    %v513 = vld [vmem:[#allocation6 + $0x148] sm:$0xff]
    %v514 = vld [vmem:[#allocation6 + $0x150] sm:$0xff]
    %v515 = vld [vmem:[#allocation6 + $0x158] sm:$0xff]
    %v516 = vld [vmem:[#allocation6 + $0x160] sm:$0xff]
    %v517 = vld [vmem:[#allocation6 + $0x168] sm:$0xff]
    %v518 = vld [vmem:[#allocation6 + $0x170] sm:$0xff]
    %v519 = vld [vmem:[#allocation6 + $0x178] sm:$0xff]
    %v520 = vld [vmem:[#allocation6 + $0x180] sm:$0xff]
    %v521 = vld [vmem:[#allocation6 + $0x188] sm:$0xff]
    %v522 = vld [vmem:[#allocation6 + $0x190] sm:$0xff]
    %v523 = vld [vmem:[#allocation6 + $0x198] sm:$0xff]
    %v524 = vld [vmem:[#allocation6 + $0x1a0] sm:$0xff]
    %v525 = vld [vmem:[#allocation6 + $0x1a8] sm:$0xff]
    %v526 = vld [vmem:[#allocation6 + $0x1b0] sm:$0xff]
    %v527 = vld [vmem:[#allocation6 + $0x1b8] sm:$0xff]
    %v528 = vld [vmem:[#allocation6 + $0x1c0] sm:$0xff]
    %v529 = vld [vmem:[#allocation6 + $0x1c8] sm:$0xff]
    %v530 = vld [vmem:[#allocation6 + $0x1d0] sm:$0xff]
    %v531 = vld [vmem:[#allocation6 + $0x1d8] sm:$0xff]
    %v532 = vld [vmem:[#allocation6 + $0x1e0] sm:$0xff]
    %v533 = vld [vmem:[#allocation6 + $0x1e8] sm:$0xff]
    %v534 = vld [vmem:[#allocation6 + $0x1f0] sm:$0xff]
    %v535 = vld [vmem:[#allocation6 + $0x1f8] sm:$0xff]
    %536 = vmatprep.subr.mxu0 %v533
    %537 = vmatpush1.msra.mxu0 %v532
    %538 = vmatprep.subr.mxu0 %v529
    %539 = vmatpush1.msra.mxu0 %v528
    %540 = vmatprep.subr.mxu0 %v525
    %541 = vmatpush1.msra.mxu0 %v524
    %542 = vmatprep.subr.mxu0 %v521
    %543 = vmatpush1.msra.mxu0 %v520
    %544 = vmatprep.subr.mxu0 %v517
    %545 = vmatpush1.msra.mxu0 %v516
    %546 = vmatprep.subr.mxu0 %v513
    %547 = vmatpush1.msra.mxu0 %v512
    %548 = vmatprep.subr.mxu0 %v509
    %549 = vmatpush1.msra.mxu0 %v508
    %550 = vmatprep.subr.mxu0 %v505
    %551 = vmatpush1.msra.mxu0 %v504
    %552 = vmatprep.subr.mxu0 %v501
    %553 = vmatpush1.msra.mxu0 %v500
    %554 = vmatprep.subr.mxu0 %v497
    %555 = vmatpush1.msra.mxu0 %v496
    %556 = vmatprep.subr.mxu0 %v493
    %557 = vmatpush1.msra.mxu0 %v492
    %558 = vmatprep.subr.mxu0 %v489
    %559 = vmatpush1.msra.mxu0 %v488
    %560 = vmatprep.subr.mxu0 %v485
    %561 = vmatpush1.msra.mxu0 %v484
    %562 = vmatprep.subr.mxu0 %v481
    %563 = vmatpush1.msra.mxu0 %v480
    %564 = vmatprep.subr.mxu0 %v477
    %565 = vmatpush1.msra.mxu0 %v476
    %566 = vmatprep.subr.mxu0 %v473
    %567 = vmatpush1.msra.mxu0 %v472
    %568 = vmatprep.subr.mxu0 0.0
    %569 = vmatpush2.msra.mxu0 0.0
    %570 = vmatprep.subr.mxu0 0.0
    %571 = vmatpush2.msra.mxu0 0.0
    %572 = vmatprep.subr.mxu0 0.0
    %573 = vmatpush2.msra.mxu0 0.0
    %574 = vmatprep.subr.mxu0 0.0
    %575 = vmatpush2.msra.mxu0 0.0
    %576 = vmatprep.subr.mxu0 0.0
    %577 = vmatpush2.msra.mxu0 0.0
    %578 = vmatprep.subr.mxu0 0.0
    %579 = vmatpush2.msra.mxu0 0.0
    %580 = vmatprep.subr.mxu0 0.0
    %581 = vmatpush2.msra.mxu0 0.0
    %582 = vmatprep.subr.mxu0 0.0
    %583 = vmatpush2.msra.mxu0 0.0
    %584 = vmatprep.subr.mxu0 0.0
    %585 = vmatpush2.msra.mxu0 0.0
    %586 = vmatprep.subr.mxu0 0.0
    %587 = vmatpush2.msra.mxu0 0.0
    %588 = vmatprep.subr.mxu0 0.0
    %589 = vmatpush2.msra.mxu0 0.0
    %590 = vmatprep.subr.mxu0 0.0
    %591 = vmatpush2.msra.mxu0 0.0
    %592 = vmatprep.subr.mxu0 0.0
    %593 = vmatpush2.msra.mxu0 0.0
    %594 = vmatprep.subr.mxu0 0.0
    %595 = vmatpush2.msra.mxu0 0.0
    %596 = vmatprep.subr.mxu0 0.0
    %597 = vmatpush2.msra.mxu0 0.0
    %598 = vmatprep.subr.mxu0 0.0
    %599 = vmatpush2.msra.mxu0 0.0
    %600 = vmatprep.mubr.f32.mxu0 0.0
    %601 = vmatmul.mubr.f32.gmra.mxu0 0.0
    %v602 = vpop.f32.mrf.mxu0
    %v603 = vadd.f32 0.0, %v602
    %v604 = vpop.f32.mrf.mxu0
    %v605 = vadd.f32 0.0, %v604
    %606 = vdwg.mxu0
    %607 = vmatprep.subr.mxu0 %v535
    %608 = vmatpush1.msra.mxu0 %v534
    %609 = vmatprep.subr.mxu0 %v531
    %610 = vmatpush1.msra.mxu0 %v530
    %611 = vmatprep.subr.mxu0 %v527
    %612 = vmatpush1.msra.mxu0 %v526
    %613 = vmatprep.subr.mxu0 %v523
    %614 = vmatpush1.msra.mxu0 %v522
    %615 = vmatprep.subr.mxu0 %v519
    %616 = vmatpush1.msra.mxu0 %v518
    %617 = vmatprep.subr.mxu0 %v515
    %618 = vmatpush1.msra.mxu0 %v514
    %619 = vmatprep.subr.mxu0 %v511
    %620 = vmatpush1.msra.mxu0 %v510
    %621 = vmatprep.subr.mxu0 %v507
    %622 = vmatpush1.msra.mxu0 %v506
    %623 = vmatprep.subr.mxu0 %v503
    %624 = vmatpush1.msra.mxu0 %v502
    %625 = vmatprep.subr.mxu0 %v499
    %626 = vmatpush1.msra.mxu0 %v498
    %627 = vmatprep.subr.mxu0 %v495
    %628 = vmatpush1.msra.mxu0 %v494
    %629 = vmatprep.subr.mxu0 %v491
    %630 = vmatpush1.msra.mxu0 %v490
    %631 = vmatprep.subr.mxu0 %v487
    %632 = vmatpush1.msra.mxu0 %v486
    %633 = vmatprep.subr.mxu0 %v483
    %634 = vmatpush1.msra.mxu0 %v482
    %635 = vmatprep.subr.mxu0 %v479
    %636 = vmatpush1.msra.mxu0 %v478
    %637 = vmatprep.subr.mxu0 %v475
    %638 = vmatpush1.msra.mxu0 %v474
    %639 = vmatprep.subr.mxu0 0.0
    %640 = vmatpush2.msra.mxu0 0.0
    %641 = vmatprep.subr.mxu0 0.0
    %642 = vmatpush2.msra.mxu0 0.0
    %643 = vmatprep.subr.mxu0 0.0
    %644 = vmatpush2.msra.mxu0 0.0
    %645 = vmatprep.subr.mxu0 0.0
    %646 = vmatpush2.msra.mxu0 0.0
    %647 = vmatprep.subr.mxu0 0.0
    %648 = vmatpush2.msra.mxu0 0.0
    %649 = vmatprep.subr.mxu0 0.0
    %650 = vmatpush2.msra.mxu0 0.0
    %651 = vmatprep.subr.mxu0 0.0
    %652 = vmatpush2.msra.mxu0 0.0
    %653 = vmatprep.subr.mxu0 0.0
    %654 = vmatpush2.msra.mxu0 0.0
    %655 = vmatprep.subr.mxu0 0.0
    %656 = vmatpush2.msra.mxu0 0.0
    %657 = vmatprep.subr.mxu0 0.0
    %658 = vmatpush2.msra.mxu0 0.0
    %659 = vmatprep.subr.mxu0 0.0
    %660 = vmatpush2.msra.mxu0 0.0
    %661 = vmatprep.subr.mxu0 0.0
    %662 = vmatpush2.msra.mxu0 0.0
    %663 = vmatprep.subr.mxu0 0.0
    %664 = vmatpush2.msra.mxu0 0.0
    %665 = vmatprep.subr.mxu0 0.0
    %666 = vmatpush2.msra.mxu0 0.0
    %667 = vmatprep.subr.mxu0 0.0
    %668 = vmatpush2.msra.mxu0 0.0
    %669 = vmatprep.subr.mxu0 0.0
    %670 = vmatpush2.msra.mxu0 0.0
    %671 = vmatprep.mubr.f32.mxu0 0.0
    %672 = vmatmul.mubr.f32.gmra.mxu0 0.0
    %v673 = vpop.f32.mrf.mxu0
    %v674 = vadd.f32 0.0, %v673
    %v675 = vpop.f32.mrf.mxu0
    %v676 = vadd.f32 0.0, %v675
    %677 = vdwg.mxu0
    %v678 = vadd.f32 %v468, %v603
    %v679 = vadd.f32 %v469, %v605
    %v680 = vadd.f32 %v470, %v674
    %v681 = vadd.f32 %v471, %v676
    %v682 = vxor.u32 %v678, 2147483648
    %v683 = vxor.u32 %v679, 2147483648
    %v684 = vxor.u32 %v680, 2147483648
    %v685 = vmul.f32 %v682, 1.442695
    %v686 = vpow.pop %v685
    %v687 = vmul.f32 %v683, 1.442695
    %v688 = vpow.pop %v687
    %v689 = vmul.f32 %v684, 1.442695
    %v690 = vpow.pop %v689
    %v691 = vadd.f32 %v686, 1.0
    %v692 = vadd.f32 %v688, 1.0
    %v693 = vadd.f32 %v690, 1.0
    %v694 = vrcp.pop %v691
    %v695 = vmul.f32 1.0, %v694
    %v696 = vrcp.pop %v692
    %v697 = vmul.f32 1.0, %v696
    %v698 = vrcp.pop %v693
    %v699 = vmul.f32 1.0, %v698
    %v700 = vtanh.pop %v681
    %v701 = vmul.f32 %v697, 0.0
    %v702 = vmul.f32 %v695, %v700
    %v703 = vadd.f32 %v701, %v702
    %v704 = vtanh.pop %v703
    %v705 = vmul.f32 %v699, %v704
    %v706 = vld [vmem:[#allocation9] sm:$0xff]
    %v707 = vld [vmem:[#allocation9 + $0x8] sm:$0xff]
    %v708 = vld [vmem:[#allocation9 + $0x10] sm:$0xff]
    %v709 = vld [vmem:[#allocation9 + $0x18] sm:$0xff]
    %v710 = vld [vmem:[#allocation9 + $0x20] sm:$0xff]
    %v711 = vld [vmem:[#allocation9 + $0x28] sm:$0xff]
    %v712 = vld [vmem:[#allocation9 + $0x30] sm:$0xff]
    %v713 = vld [vmem:[#allocation9 + $0x38] sm:$0xff]
    %v714 = vld [vmem:[#allocation9 + $0x40] sm:$0xff]
    %v715 = vld [vmem:[#allocation9 + $0x48] sm:$0xff]
    %v716 = vld [vmem:[#allocation9 + $0x50] sm:$0xff]
    %v717 = vld [vmem:[#allocation9 + $0x58] sm:$0xff]
    %v718 = vld [vmem:[#allocation9 + $0x60] sm:$0xff]
    %v719 = vld [vmem:[#allocation9 + $0x68] sm:$0xff]
    %v720 = vld [vmem:[#allocation9 + $0x70] sm:$0xff]
    %v721 = vld [vmem:[#allocation9 + $0x78] sm:$0xff]
    %v722 = vld [vmem:[#allocation9 + $0x80] sm:$0xff]
    %v723 = vld [vmem:[#allocation9 + $0x88] sm:$0xff]
    %v724 = vld [vmem:[#allocation9 + $0x90] sm:$0xff]
    %v725 = vld [vmem:[#allocation9 + $0x98] sm:$0xff]
    %v726 = vld [vmem:[#allocation9 + $0xa0] sm:$0xff]
    %v727 = vld [vmem:[#allocation9 + $0xa8] sm:$0xff]
    %v728 = vld [vmem:[#allocation9 + $0xb0] sm:$0xff]
    %v729 = vld [vmem:[#allocation9 + $0xb8] sm:$0xff]
    %v730 = vld [vmem:[#allocation9 + $0xc0] sm:$0xff]
    %v731 = vld [vmem:[#allocation9 + $0xc8] sm:$0xff]
    %v732 = vld [vmem:[#allocation9 + $0xd0] sm:$0xff]
    %v733 = vld [vmem:[#allocation9 + $0xd8] sm:$0xff]
    %v734 = vld [vmem:[#allocation9 + $0xe0] sm:$0xff]
    %v735 = vld [vmem:[#allocation9 + $0xe8] sm:$0xff]
    %v736 = vld [vmem:[#allocation9 + $0xf0] sm:$0xff]
    %v737 = vld [vmem:[#allocation9 + $0xf8] sm:$0xff]
    %v738 = vld [vmem:[#allocation9 + $0x100] sm:$0xff]
    %v739 = vld [vmem:[#allocation9 + $0x108] sm:$0xff]
    %v740 = vld [vmem:[#allocation9 + $0x110] sm:$0xff]
    %v741 = vld [vmem:[#allocation9 + $0x118] sm:$0xff]
    %v742 = vld [vmem:[#allocation9 + $0x120] sm:$0xff]
    %v743 = vld [vmem:[#allocation9 + $0x128] sm:$0xff]
    %v744 = vld [vmem:[#allocation9 + $0x130] sm:$0xff]
    %v745 = vld [vmem:[#allocation9 + $0x138] sm:$0xff]
    %v746 = vld [vmem:[#allocation9 + $0x140] sm:$0xff]
    %v747 = vld [vmem:[#allocation9 + $0x148] sm:$0xff]
    %v748 = vld [vmem:[#allocation9 + $0x150] sm:$0xff]
    %v749 = vld [vmem:[#allocation9 + $0x158] sm:$0xff]
    %v750 = vld [vmem:[#allocation9 + $0x160] sm:$0xff]
    %v751 = vld [vmem:[#allocation9 + $0x168] sm:$0xff]
    %v752 = vld [vmem:[#allocation9 + $0x170] sm:$0xff]
    %v753 = vld [vmem:[#allocation9 + $0x178] sm:$0xff]
    %v754 = vld [vmem:[#allocation9 + $0x180] sm:$0xff]
    %v755 = vld [vmem:[#allocation9 + $0x188] sm:$0xff]
    %v756 = vld [vmem:[#allocation9 + $0x190] sm:$0xff]
    %v757 = vld [vmem:[#allocation9 + $0x198] sm:$0xff]
    %v758 = vld [vmem:[#allocation9 + $0x1a0] sm:$0xff]
    %v759 = vld [vmem:[#allocation9 + $0x1a8] sm:$0xff]
    %v760 = vld [vmem:[#allocation9 + $0x1b0] sm:$0xff]
    %v761 = vld [vmem:[#allocation9 + $0x1b8] sm:$0xff]
    %v762 = vld [vmem:[#allocation9 + $0x1c0] sm:$0xff]
    %v763 = vld [vmem:[#allocation9 + $0x1c8] sm:$0xff]
    %v764 = vld [vmem:[#allocation9 + $0x1d0] sm:$0xff]
    %v765 = vld [vmem:[#allocation9 + $0x1d8] sm:$0xff]
    %v766 = vld [vmem:[#allocation9 + $0x1e0] sm:$0xff]
    %v767 = vld [vmem:[#allocation9 + $0x1e8] sm:$0xff]
    %v768 = vld [vmem:[#allocation9 + $0x1f0] sm:$0xff]
    %v769 = vld [vmem:[#allocation9 + $0x1f8] sm:$0xff]
    %v770 = vld [vmem:[#allocation8] sm:$0xff]
    %v771 = vld [vmem:[#allocation8 + $0x8] sm:$0xff]
    %v772 = vld [vmem:[#allocation8 + $0x10] sm:$0xff]
    %v773 = vld [vmem:[#allocation8 + $0x18] sm:$0xff]
    %v774 = vld [vmem:[#allocation8 + $0x20] sm:$0xff]
    %v775 = vld [vmem:[#allocation8 + $0x28] sm:$0xff]
    %v776 = vld [vmem:[#allocation8 + $0x30] sm:$0xff]
    %v777 = vld [vmem:[#allocation8 + $0x38] sm:$0xff]
    %v778 = vld [vmem:[#allocation8 + $0x40] sm:$0xff]
    %v779 = vld [vmem:[#allocation8 + $0x48] sm:$0xff]
    %v780 = vld [vmem:[#allocation8 + $0x50] sm:$0xff]
    %v781 = vld [vmem:[#allocation8 + $0x58] sm:$0xff]
    %v782 = vld [vmem:[#allocation8 + $0x60] sm:$0xff]
    %v783 = vld [vmem:[#allocation8 + $0x68] sm:$0xff]
    %v784 = vld [vmem:[#allocation8 + $0x70] sm:$0xff]
    %v785 = vld [vmem:[#allocation8 + $0x78] sm:$0xff]
    %v786 = vld [vmem:[#allocation8 + $0x80] sm:$0xff]
    %v787 = vld [vmem:[#allocation8 + $0x88] sm:$0xff]
    %v788 = vld [vmem:[#allocation8 + $0x90] sm:$0xff]
    %v789 = vld [vmem:[#allocation8 + $0x98] sm:$0xff]
    %v790 = vld [vmem:[#allocation8 + $0xa0] sm:$0xff]
    %v791 = vld [vmem:[#allocation8 + $0xa8] sm:$0xff]
    %v792 = vld [vmem:[#allocation8 + $0xb0] sm:$0xff]
    %v793 = vld [vmem:[#allocation8 + $0xb8] sm:$0xff]
    %v794 = vld [vmem:[#allocation8 + $0xc0] sm:$0xff]
    %v795 = vld [vmem:[#allocation8 + $0xc8] sm:$0xff]
    %v796 = vld [vmem:[#allocation8 + $0xd0] sm:$0xff]
    %v797 = vld [vmem:[#allocation8 + $0xd8] sm:$0xff]
    %v798 = vld [vmem:[#allocation8 + $0xe0] sm:$0xff]
    %v799 = vld [vmem:[#allocation8 + $0xe8] sm:$0xff]
    %v800 = vld [vmem:[#allocation8 + $0xf0] sm:$0xff]
    %v801 = vld [vmem:[#allocation8 + $0xf8] sm:$0xff]
    %v802 = vld [vmem:[#allocation8 + $0x100] sm:$0xff]
    %v803 = vld [vmem:[#allocation8 + $0x108] sm:$0xff]
    %v804 = vld [vmem:[#allocation8 + $0x110] sm:$0xff]
    %v805 = vld [vmem:[#allocation8 + $0x118] sm:$0xff]
    %v806 = vld [vmem:[#allocation8 + $0x120] sm:$0xff]
    %v807 = vld [vmem:[#allocation8 + $0x128] sm:$0xff]
    %v808 = vld [vmem:[#allocation8 + $0x130] sm:$0xff]
    %v809 = vld [vmem:[#allocation8 + $0x138] sm:$0xff]
    %v810 = vld [vmem:[#allocation8 + $0x140] sm:$0xff]
    %v811 = vld [vmem:[#allocation8 + $0x148] sm:$0xff]
    %v812 = vld [vmem:[#allocation8 + $0x150] sm:$0xff]
    %v813 = vld [vmem:[#allocation8 + $0x158] sm:$0xff]
    %v814 = vld [vmem:[#allocation8 + $0x160] sm:$0xff]
    %v815 = vld [vmem:[#allocation8 + $0x168] sm:$0xff]
    %v816 = vld [vmem:[#allocation8 + $0x170] sm:$0xff]
    %v817 = vld [vmem:[#allocation8 + $0x178] sm:$0xff]
    %v818 = vld [vmem:[#allocation8 + $0x180] sm:$0xff]
    %v819 = vld [vmem:[#allocation8 + $0x188] sm:$0xff]
    %v820 = vld [vmem:[#allocation8 + $0x190] sm:$0xff]
    %v821 = vld [vmem:[#allocation8 + $0x198] sm:$0xff]
    %v822 = vld [vmem:[#allocation8 + $0x1a0] sm:$0xff]
    %v823 = vld [vmem:[#allocation8 + $0x1a8] sm:$0xff]
    %v824 = vld [vmem:[#allocation8 + $0x1b0] sm:$0xff]
    %v825 = vld [vmem:[#allocation8 + $0x1b8] sm:$0xff]
    %v826 = vld [vmem:[#allocation8 + $0x1c0] sm:$0xff]
    %v827 = vld [vmem:[#allocation8 + $0x1c8] sm:$0xff]
    %v828 = vld [vmem:[#allocation8 + $0x1d0] sm:$0xff]
    %v829 = vld [vmem:[#allocation8 + $0x1d8] sm:$0xff]
    %v830 = vld [vmem:[#allocation8 + $0x1e0] sm:$0xff]
    %v831 = vld [vmem:[#allocation8 + $0x1e8] sm:$0xff]
    %v832 = vld [vmem:[#allocation8 + $0x1f0] sm:$0xff]
    %v833 = vld [vmem:[#allocation8 + $0x1f8] sm:$0xff]
    %834 = vmatprep.subr.mxu0 %v831
    %835 = vmatpush1.msra.mxu0 %v830
    %836 = vmatprep.subr.mxu0 %v827
    %837 = vmatpush1.msra.mxu0 %v826
    %838 = vmatprep.subr.mxu0 %v823
    %839 = vmatpush1.msra.mxu0 %v822
    %840 = vmatprep.subr.mxu0 %v819
    %841 = vmatpush1.msra.mxu0 %v818
    %842 = vmatprep.subr.mxu0 %v815
    %843 = vmatpush1.msra.mxu0 %v814
    %844 = vmatprep.subr.mxu0 %v811
    %845 = vmatpush1.msra.mxu0 %v810
    %846 = vmatprep.subr.mxu0 %v807
    %847 = vmatpush1.msra.mxu0 %v806
    %848 = vmatprep.subr.mxu0 %v803
    %849 = vmatpush1.msra.mxu0 %v802
    %850 = vmatprep.subr.mxu0 %v799
    %851 = vmatpush1.msra.mxu0 %v798
    %852 = vmatprep.subr.mxu0 %v795
    %853 = vmatpush1.msra.mxu0 %v794
    %854 = vmatprep.subr.mxu0 %v791
    %855 = vmatpush1.msra.mxu0 %v790
    %856 = vmatprep.subr.mxu0 %v787
    %857 = vmatpush1.msra.mxu0 %v786
    %858 = vmatprep.subr.mxu0 %v783
    %859 = vmatpush1.msra.mxu0 %v782
    %860 = vmatprep.subr.mxu0 %v779
    %861 = vmatpush1.msra.mxu0 %v778
    %862 = vmatprep.subr.mxu0 %v775
    %863 = vmatpush1.msra.mxu0 %v774
    %864 = vmatprep.subr.mxu0 %v771
    %865 = vmatpush1.msra.mxu0 %v770
    %866 = vmatprep.subr.mxu0 0.0
    %867 = vmatpush2.msra.mxu0 0.0
    %868 = vmatprep.subr.mxu0 0.0
    %869 = vmatpush2.msra.mxu0 0.0
    %870 = vmatprep.subr.mxu0 0.0
    %871 = vmatpush2.msra.mxu0 0.0
    %872 = vmatprep.subr.mxu0 0.0
    %873 = vmatpush2.msra.mxu0 0.0
    %874 = vmatprep.subr.mxu0 0.0
    %875 = vmatpush2.msra.mxu0 0.0
    %876 = vmatprep.subr.mxu0 0.0
    %877 = vmatpush2.msra.mxu0 0.0
    %878 = vmatprep.subr.mxu0 0.0
    %879 = vmatpush2.msra.mxu0 0.0
    %880 = vmatprep.subr.mxu0 0.0
    %881 = vmatpush2.msra.mxu0 0.0
    %882 = vmatprep.subr.mxu0 0.0
    %883 = vmatpush2.msra.mxu0 0.0
    %884 = vmatprep.subr.mxu0 0.0
    %885 = vmatpush2.msra.mxu0 0.0
    %886 = vmatprep.subr.mxu0 0.0
    %887 = vmatpush2.msra.mxu0 0.0
    %888 = vmatprep.subr.mxu0 0.0
    %889 = vmatpush2.msra.mxu0 0.0
    %890 = vmatprep.subr.mxu0 0.0
    %891 = vmatpush2.msra.mxu0 0.0
    %892 = vmatprep.subr.mxu0 0.0
    %893 = vmatpush2.msra.mxu0 0.0
    %894 = vmatprep.subr.mxu0 0.0
    %895 = vmatpush2.msra.mxu0 0.0
    %896 = vmatprep.subr.mxu0 0.0
    %897 = vmatpush2.msra.mxu0 0.0
    %898 = vmatprep.mubr.f32.mxu0 0.0
    %899 = vmatmul.mubr.f32.gmra.mxu0 %v705
    %v900 = vpop.f32.mrf.mxu0
    %v901 = vadd.f32 0.0, %v900
    %v902 = vpop.f32.mrf.mxu0
    %v903 = vadd.f32 0.0, %v902
    %904 = vdwg.mxu0
    %905 = vmatprep.subr.mxu0 %v833
    %906 = vmatpush1.msra.mxu0 %v832
    %907 = vmatprep.subr.mxu0 %v829
    %908 = vmatpush1.msra.mxu0 %v828
    %909 = vmatprep.subr.mxu0 %v825
    %910 = vmatpush1.msra.mxu0 %v824
    %911 = vmatprep.subr.mxu0 %v821
    %912 = vmatpush1.msra.mxu0 %v820
    %913 = vmatprep.subr.mxu0 %v817
    %914 = vmatpush1.msra.mxu0 %v816
    %915 = vmatprep.subr.mxu0 %v813
    %916 = vmatpush1.msra.mxu0 %v812
    %917 = vmatprep.subr.mxu0 %v809
    %918 = vmatpush1.msra.mxu0 %v808
    %919 = vmatprep.subr.mxu0 %v805
    %920 = vmatpush1.msra.mxu0 %v804
    %921 = vmatprep.subr.mxu0 %v801
    %922 = vmatpush1.msra.mxu0 %v800
    %923 = vmatprep.subr.mxu0 %v797
    %924 = vmatpush1.msra.mxu0 %v796
    %925 = vmatprep.subr.mxu0 %v793
    %926 = vmatpush1.msra.mxu0 %v792
    %927 = vmatprep.subr.mxu0 %v789
    %928 = vmatpush1.msra.mxu0 %v788
    %929 = vmatprep.subr.mxu0 %v785
    %930 = vmatpush1.msra.mxu0 %v784
    %931 = vmatprep.subr.mxu0 %v781
    %932 = vmatpush1.msra.mxu0 %v780
    %933 = vmatprep.subr.mxu0 %v777
    %934 = vmatpush1.msra.mxu0 %v776
    %935 = vmatprep.subr.mxu0 %v773
    %936 = vmatpush1.msra.mxu0 %v772
    %937 = vmatprep.subr.mxu0 0.0
    %938 = vmatpush2.msra.mxu0 0.0
    %939 = vmatprep.subr.mxu0 0.0
    %940 = vmatpush2.msra.mxu0 0.0
    %941 = vmatprep.subr.mxu0 0.0
    %942 = vmatpush2.msra.mxu0 0.0
    %943 = vmatprep.subr.mxu0 0.0
    %944 = vmatpush2.msra.mxu0 0.0
    %945 = vmatprep.subr.mxu0 0.0
    %946 = vmatpush2.msra.mxu0 0.0
    %947 = vmatprep.subr.mxu0 0.0
    %948 = vmatpush2.msra.mxu0 0.0
    %949 = vmatprep.subr.mxu0 0.0
    %950 = vmatpush2.msra.mxu0 0.0
    %951 = vmatprep.subr.mxu0 0.0
    %952 = vmatpush2.msra.mxu0 0.0
    %953 = vmatprep.subr.mxu0 0.0
    %954 = vmatpush2.msra.mxu0 0.0
    %955 = vmatprep.subr.mxu0 0.0
    %956 = vmatpush2.msra.mxu0 0.0
    %957 = vmatprep.subr.mxu0 0.0
    %958 = vmatpush2.msra.mxu0 0.0
    %959 = vmatprep.subr.mxu0 0.0
    %960 = vmatpush2.msra.mxu0 0.0
    %961 = vmatprep.subr.mxu0 0.0
    %962 = vmatpush2.msra.mxu0 0.0
    %963 = vmatprep.subr.mxu0 0.0
    %964 = vmatpush2.msra.mxu0 0.0
    %965 = vmatprep.subr.mxu0 0.0
    %966 = vmatpush2.msra.mxu0 0.0
    %967 = vmatprep.subr.mxu0 0.0
    %968 = vmatpush2.msra.mxu0 0.0
    %969 = vmatprep.mubr.f32.mxu0 0.0
    %970 = vmatmul.mubr.f32.gmra.mxu0 %v705
    %v971 = vpop.f32.mrf.mxu0
    %v972 = vadd.f32 0.0, %v971
    %v973 = vpop.f32.mrf.mxu0
    %v974 = vadd.f32 0.0, %v973
    %975 = vdwg.mxu0
    %976 = vmatprep.subr.mxu0 %v767
    %977 = vmatpush1.msra.mxu0 %v766
    %978 = vmatprep.subr.mxu0 %v763
    %979 = vmatpush1.msra.mxu0 %v762
    %980 = vmatprep.subr.mxu0 %v759
    %981 = vmatpush1.msra.mxu0 %v758
    %982 = vmatprep.subr.mxu0 %v755
    %983 = vmatpush1.msra.mxu0 %v754
    %984 = vmatprep.subr.mxu0 %v751
    %985 = vmatpush1.msra.mxu0 %v750
    %986 = vmatprep.subr.mxu0 %v747
    %987 = vmatpush1.msra.mxu0 %v746
    %988 = vmatprep.subr.mxu0 %v743
    %989 = vmatpush1.msra.mxu0 %v742
    %990 = vmatprep.subr.mxu0 %v739
    %991 = vmatpush1.msra.mxu0 %v738
    %992 = vmatprep.subr.mxu0 %v735
    %993 = vmatpush1.msra.mxu0 %v734
    %994 = vmatprep.subr.mxu0 %v731
    %995 = vmatpush1.msra.mxu0 %v730
    %996 = vmatprep.subr.mxu0 %v727
    %997 = vmatpush1.msra.mxu0 %v726
    %998 = vmatprep.subr.mxu0 %v723
    %999 = vmatpush1.msra.mxu0 %v722
    %1000 = vmatprep.subr.mxu0 %v719
    %1001 = vmatpush1.msra.mxu0 %v718
    %1002 = vmatprep.subr.mxu0 %v715
    %1003 = vmatpush1.msra.mxu0 %v714
    %1004 = vmatprep.subr.mxu0 %v711
    %1005 = vmatpush1.msra.mxu0 %v710
    %1006 = vmatprep.subr.mxu0 %v707
    %1007 = vmatpush1.msra.mxu0 %v706
    %1008 = vmatprep.subr.mxu0 0.0
    %1009 = vmatpush2.msra.mxu0 0.0
    %1010 = vmatprep.subr.mxu0 0.0
    %1011 = vmatpush2.msra.mxu0 0.0
    %1012 = vmatprep.subr.mxu0 0.0
    %1013 = vmatpush2.msra.mxu0 0.0
    %1014 = vmatprep.subr.mxu0 0.0
    %1015 = vmatpush2.msra.mxu0 0.0
    %1016 = vmatprep.subr.mxu0 0.0
    %1017 = vmatpush2.msra.mxu0 0.0
    %1018 = vmatprep.subr.mxu0 0.0
    %1019 = vmatpush2.msra.mxu0 0.0
    %1020 = vmatprep.subr.mxu0 0.0
    %1021 = vmatpush2.msra.mxu0 0.0
    %1022 = vmatprep.subr.mxu0 0.0
    %1023 = vmatpush2.msra.mxu0 0.0
    %1024 = vmatprep.subr.mxu0 0.0
    %1025 = vmatpush2.msra.mxu0 0.0
    %1026 = vmatprep.subr.mxu0 0.0
    %1027 = vmatpush2.msra.mxu0 0.0
    %1028 = vmatprep.subr.mxu0 0.0
    %1029 = vmatpush2.msra.mxu0 0.0
    %1030 = vmatprep.subr.mxu0 0.0
    %1031 = vmatpush2.msra.mxu0 0.0
    %1032 = vmatprep.subr.mxu0 0.0
    %1033 = vmatpush2.msra.mxu0 0.0
    %1034 = vmatprep.subr.mxu0 0.0
    %1035 = vmatpush2.msra.mxu0 0.0
    %1036 = vmatprep.subr.mxu0 0.0
    %1037 = vmatpush2.msra.mxu0 0.0
    %1038 = vmatprep.subr.mxu0 0.0
    %1039 = vmatpush2.msra.mxu0 0.0
    %1040 = vmatprep.mubr.f32.mxu0 0.0
    %1041 = vmatmul.mubr.f32.gmra.mxu0 0.0
    %v1042 = vpop.f32.mrf.mxu0
    %v1043 = vadd.f32 %v901, %v1042
    %v1044 = vpop.f32.mrf.mxu0
    %v1045 = vadd.f32 %v903, %v1044
    %1046 = vdwg.mxu0
    %1047 = vmatprep.subr.mxu0 %v769
    %1048 = vmatpush1.msra.mxu0 %v768
    %1049 = vmatprep.subr.mxu0 %v765
    %1050 = vmatpush1.msra.mxu0 %v764
    %1051 = vmatprep.subr.mxu0 %v761
    %1052 = vmatpush1.msra.mxu0 %v760
    %1053 = vmatprep.subr.mxu0 %v757
    %1054 = vmatpush1.msra.mxu0 %v756
    %1055 = vmatprep.subr.mxu0 %v753
    %1056 = vmatpush1.msra.mxu0 %v752
    %1057 = vmatprep.subr.mxu0 %v749
    %1058 = vmatpush1.msra.mxu0 %v748
    %1059 = vmatprep.subr.mxu0 %v745
    %1060 = vmatpush1.msra.mxu0 %v744
    %1061 = vmatprep.subr.mxu0 %v741
    %1062 = vmatpush1.msra.mxu0 %v740
    %1063 = vmatprep.subr.mxu0 %v737
    %1064 = vmatpush1.msra.mxu0 %v736
    %1065 = vmatprep.subr.mxu0 %v733
    %1066 = vmatpush1.msra.mxu0 %v732
    %1067 = vmatprep.subr.mxu0 %v729
    %1068 = vmatpush1.msra.mxu0 %v728
    %1069 = vmatprep.subr.mxu0 %v725
    %1070 = vmatpush1.msra.mxu0 %v724
    %1071 = vmatprep.subr.mxu0 %v721
    %1072 = vmatpush1.msra.mxu0 %v720
    %1073 = vmatprep.subr.mxu0 %v717
    %1074 = vmatpush1.msra.mxu0 %v716
    %1075 = vmatprep.subr.mxu0 %v713
    %1076 = vmatpush1.msra.mxu0 %v712
    %1077 = vmatprep.subr.mxu0 %v709
    %1078 = vmatpush1.msra.mxu0 %v708
    %1079 = vmatprep.subr.mxu0 0.0
    %1080 = vmatpush2.msra.mxu0 0.0
    %1081 = vmatprep.subr.mxu0 0.0
    %1082 = vmatpush2.msra.mxu0 0.0
    %1083 = vmatprep.subr.mxu0 0.0
    %1084 = vmatpush2.msra.mxu0 0.0
    %1085 = vmatprep.subr.mxu0 0.0
    %1086 = vmatpush2.msra.mxu0 0.0
    %1087 = vmatprep.subr.mxu0 0.0
    %1088 = vmatpush2.msra.mxu0 0.0
    %1089 = vmatprep.subr.mxu0 0.0
    %1090 = vmatpush2.msra.mxu0 0.0
    %1091 = vmatprep.subr.mxu0 0.0
    %1092 = vmatpush2.msra.mxu0 0.0
    %1093 = vmatprep.subr.mxu0 0.0
    %1094 = vmatpush2.msra.mxu0 0.0
    %1095 = vmatprep.subr.mxu0 0.0
    %1096 = vmatpush2.msra.mxu0 0.0
    %1097 = vmatprep.subr.mxu0 0.0
    %1098 = vmatpush2.msra.mxu0 0.0
    %1099 = vmatprep.subr.mxu0 0.0
    %1100 = vmatpush2.msra.mxu0 0.0
    %1101 = vmatprep.subr.mxu0 0.0
    %1102 = vmatpush2.msra.mxu0 0.0
    %1103 = vmatprep.subr.mxu0 0.0
    %1104 = vmatpush2.msra.mxu0 0.0
    %1105 = vmatprep.subr.mxu0 0.0
    %1106 = vmatpush2.msra.mxu0 0.0
    %1107 = vmatprep.subr.mxu0 0.0
    %1108 = vmatpush2.msra.mxu0 0.0
    %1109 = vmatprep.subr.mxu0 0.0
    %1110 = vmatpush2.msra.mxu0 0.0
    %1111 = vmatprep.mubr.f32.mxu0 0.0
    %1112 = vmatmul.mubr.f32.gmra.mxu0 0.0
    %v1113 = vpop.f32.mrf.mxu0
    %v1114 = vadd.f32 %v972, %v1113
    %v1115 = vpop.f32.mrf.mxu0
    %v1116 = vadd.f32 %v974, %v1115
    %1117 = vdwg.mxu0
    %v1118 = vadd.f32 %v1043, %v448
    %v1119 = vadd.f32 %v1045, %v452
    %v1120 = vadd.f32 %v1114, %v456
    %v1121 = vadd.f32 %v1116, %v460
    %v1122 = vxor.u32 %v1118, 2147483648
    %v1123 = vxor.u32 %v1119, 2147483648
    %v1124 = vxor.u32 %v1120, 2147483648
    %v1125 = vmul.f32 %v1122, 1.442695
    %v1126 = vpow.pop %v1125
    %v1127 = vmul.f32 %v1123, 1.442695
    %v1128 = vpow.pop %v1127
    %v1129 = vmul.f32 %v1124, 1.442695
    %v1130 = vpow.pop %v1129
    %v1131 = vadd.f32 %v1126, 1.0
    %v1132 = vadd.f32 %v1128, 1.0
    %v1133 = vadd.f32 %v1130, 1.0
    %v1134 = vrcp.pop %v1131
    %v1135 = vmul.f32 1.0, %v1134
    %v1136 = vrcp.pop %v1132
    %v1137 = vmul.f32 1.0, %v1136
    %v1138 = vrcp.pop %v1133
    %v1139 = vmul.f32 1.0, %v1138
    %v1140 = vtanh.pop %v1121
    %v1141 = vmul.f32 %v1137, 0.0
    %v1142 = vmul.f32 %v1135, %v1140
    %v1143 = vadd.f32 %v1141, %v1142
    %v1144 = vtanh.pop %v1143
    %v1145 = vmul.f32 %v1139, %v1144
    %s1146 = smul.u32 1, 4
    %s1147 = smul.addr %s1146, 8
    %s1148 = scalar_lea.vmem [#allocation2], %s1147
    %v1149 = vld [vmem:[%s1148] sm:$0xff]
    %v1150 = vld [vmem:[%s1148 + $0x8] sm:$0xff]
    %v1151 = vld [vmem:[%s1148 + $0x10] sm:$0xff]
    %v1152 = vld [vmem:[%s1148 + $0x18] sm:$0xff]
    %1153 = vmatprep.subr.mxu0 %v533
    %1154 = vmatpush1.msra.mxu0 %v532
    %1155 = vmatprep.subr.mxu0 %v529
    %1156 = vmatpush1.msra.mxu0 %v528
    %1157 = vmatprep.subr.mxu0 %v525
    %1158 = vmatpush1.msra.mxu0 %v524
    %1159 = vmatprep.subr.mxu0 %v521
    %1160 = vmatpush1.msra.mxu0 %v520
    %1161 = vmatprep.subr.mxu0 %v517
    %1162 = vmatpush1.msra.mxu0 %v516
    %1163 = vmatprep.subr.mxu0 %v513
    %1164 = vmatpush1.msra.mxu0 %v512
    %1165 = vmatprep.subr.mxu0 %v509
    %1166 = vmatpush1.msra.mxu0 %v508
    %1167 = vmatprep.subr.mxu0 %v505
    %1168 = vmatpush1.msra.mxu0 %v504
    %1169 = vmatprep.subr.mxu0 %v501
    %1170 = vmatpush1.msra.mxu0 %v500
    %1171 = vmatprep.subr.mxu0 %v497
    %1172 = vmatpush1.msra.mxu0 %v496
    %1173 = vmatprep.subr.mxu0 %v493
    %1174 = vmatpush1.msra.mxu0 %v492
    %1175 = vmatprep.subr.mxu0 %v489
    %1176 = vmatpush1.msra.mxu0 %v488
    %1177 = vmatprep.subr.mxu0 %v485
    %1178 = vmatpush1.msra.mxu0 %v484
    %1179 = vmatprep.subr.mxu0 %v481
    %1180 = vmatpush1.msra.mxu0 %v480
    %1181 = vmatprep.subr.mxu0 %v477
    %1182 = vmatpush1.msra.mxu0 %v476
    %1183 = vmatprep.subr.mxu0 %v473
    %1184 = vmatpush1.msra.mxu0 %v472
    %1185 = vmatprep.subr.mxu0 0.0
    %1186 = vmatpush2.msra.mxu0 0.0
    %1187 = vmatprep.subr.mxu0 0.0
    %1188 = vmatpush2.msra.mxu0 0.0
    %1189 = vmatprep.subr.mxu0 0.0
    %1190 = vmatpush2.msra.mxu0 0.0
    %1191 = vmatprep.subr.mxu0 0.0
    %1192 = vmatpush2.msra.mxu0 0.0
    %1193 = vmatprep.subr.mxu0 0.0
    %1194 = vmatpush2.msra.mxu0 0.0
    %1195 = vmatprep.subr.mxu0 0.0
    %1196 = vmatpush2.msra.mxu0 0.0
    %1197 = vmatprep.subr.mxu0 0.0
    %1198 = vmatpush2.msra.mxu0 0.0
    %1199 = vmatprep.subr.mxu0 0.0
    %1200 = vmatpush2.msra.mxu0 0.0
    %1201 = vmatprep.subr.mxu0 0.0
    %1202 = vmatpush2.msra.mxu0 0.0
    %1203 = vmatprep.subr.mxu0 0.0
    %1204 = vmatpush2.msra.mxu0 0.0
    %1205 = vmatprep.subr.mxu0 0.0
    %1206 = vmatpush2.msra.mxu0 0.0
    %1207 = vmatprep.subr.mxu0 0.0
    %1208 = vmatpush2.msra.mxu0 0.0
    %1209 = vmatprep.subr.mxu0 0.0
    %1210 = vmatpush2.msra.mxu0 0.0
    %1211 = vmatprep.subr.mxu0 0.0
    %1212 = vmatpush2.msra.mxu0 0.0
    %1213 = vmatprep.subr.mxu0 0.0
    %1214 = vmatpush2.msra.mxu0 0.0
    %1215 = vmatprep.subr.mxu0 0.0
    %1216 = vmatpush2.msra.mxu0 0.0
    %1217 = vmatprep.mubr.f32.mxu0 0.0
    %1218 = vmatmul.mubr.f32.gmra.mxu0 %v705
    %v1219 = vpop.f32.mrf.mxu0
    %v1220 = vadd.f32 0.0, %v1219
    %v1221 = vpop.f32.mrf.mxu0
    %v1222 = vadd.f32 0.0, %v1221
    %1223 = vdwg.mxu0
    %1224 = vmatprep.subr.mxu0 %v535
    %1225 = vmatpush1.msra.mxu0 %v534
    %1226 = vmatprep.subr.mxu0 %v531
    %1227 = vmatpush1.msra.mxu0 %v530
    %1228 = vmatprep.subr.mxu0 %v527
    %1229 = vmatpush1.msra.mxu0 %v526
    %1230 = vmatprep.subr.mxu0 %v523
    %1231 = vmatpush1.msra.mxu0 %v522
    %1232 = vmatprep.subr.mxu0 %v519
    %1233 = vmatpush1.msra.mxu0 %v518
    %1234 = vmatprep.subr.mxu0 %v515
    %1235 = vmatpush1.msra.mxu0 %v514
    %1236 = vmatprep.subr.mxu0 %v511
    %1237 = vmatpush1.msra.mxu0 %v510
    %1238 = vmatprep.subr.mxu0 %v507
    %1239 = vmatpush1.msra.mxu0 %v506
    %1240 = vmatprep.subr.mxu0 %v503
    %1241 = vmatpush1.msra.mxu0 %v502
    %1242 = vmatprep.subr.mxu0 %v499
    %1243 = vmatpush1.msra.mxu0 %v498
    %1244 = vmatprep.subr.mxu0 %v495
    %1245 = vmatpush1.msra.mxu0 %v494
    %1246 = vmatprep.subr.mxu0 %v491
    %1247 = vmatpush1.msra.mxu0 %v490
    %1248 = vmatprep.subr.mxu0 %v487
    %1249 = vmatpush1.msra.mxu0 %v486
    %1250 = vmatprep.subr.mxu0 %v483
    %1251 = vmatpush1.msra.mxu0 %v482
    %1252 = vmatprep.subr.mxu0 %v479
    %1253 = vmatpush1.msra.mxu0 %v478
    %1254 = vmatprep.subr.mxu0 %v475
    %1255 = vmatpush1.msra.mxu0 %v474
    %1256 = vmatprep.subr.mxu0 0.0
    %1257 = vmatpush2.msra.mxu0 0.0
    %1258 = vmatprep.subr.mxu0 0.0
    %1259 = vmatpush2.msra.mxu0 0.0
    %1260 = vmatprep.subr.mxu0 0.0
    %1261 = vmatpush2.msra.mxu0 0.0
    %1262 = vmatprep.subr.mxu0 0.0
    %1263 = vmatpush2.msra.mxu0 0.0
    %1264 = vmatprep.subr.mxu0 0.0
    %1265 = vmatpush2.msra.mxu0 0.0
    %1266 = vmatprep.subr.mxu0 0.0
    %1267 = vmatpush2.msra.mxu0 0.0
    %1268 = vmatprep.subr.mxu0 0.0
    %1269 = vmatpush2.msra.mxu0 0.0
    %1270 = vmatprep.subr.mxu0 0.0
    %1271 = vmatpush2.msra.mxu0 0.0
    %1272 = vmatprep.subr.mxu0 0.0
    %1273 = vmatpush2.msra.mxu0 0.0
    %1274 = vmatprep.subr.mxu0 0.0
    %1275 = vmatpush2.msra.mxu0 0.0
    %1276 = vmatprep.subr.mxu0 0.0
    %1277 = vmatpush2.msra.mxu0 0.0
    %1278 = vmatprep.subr.mxu0 0.0
    %1279 = vmatpush2.msra.mxu0 0.0
    %1280 = vmatprep.subr.mxu0 0.0
    %1281 = vmatpush2.msra.mxu0 0.0
    %1282 = vmatprep.subr.mxu0 0.0
    %1283 = vmatpush2.msra.mxu0 0.0
    %1284 = vmatprep.subr.mxu0 0.0
    %1285 = vmatpush2.msra.mxu0 0.0
    %1286 = vmatprep.subr.mxu0 0.0
    %1287 = vmatpush2.msra.mxu0 0.0
    %1288 = vmatprep.mubr.f32.mxu0 0.0
    %1289 = vmatmul.mubr.f32.gmra.mxu0 %v705
    %v1290 = vpop.f32.mrf.mxu0
    %v1291 = vadd.f32 0.0, %v1290
    %v1292 = vpop.f32.mrf.mxu0
    %v1293 = vadd.f32 0.0, %v1292
    %1294 = vdwg.mxu0
    %v1295 = vadd.f32 %v1149, %v1220
    %v1296 = vadd.f32 %v1150, %v1222
    %v1297 = vadd.f32 %v1151, %v1291
    %v1298 = vadd.f32 %v1152, %v1293
    %v1299 = vxor.u32 %v1295, 2147483648
    %v1300 = vxor.u32 %v1296, 2147483648
    %v1301 = vxor.u32 %v1297, 2147483648
    %v1302 = vmul.f32 %v1299, 1.442695
    %v1303 = vpow.pop %v1302
    %v1304 = vmul.f32 %v1300, 1.442695
    %v1305 = vpow.pop %v1304
    %v1306 = vmul.f32 %v1301, 1.442695
    %v1307 = vpow.pop %v1306
    %v1308 = vadd.f32 %v1303, 1.0
    %v1309 = vadd.f32 %v1305, 1.0
    %v1310 = vadd.f32 %v1307, 1.0
    %v1311 = vrcp.pop %v1308
    %v1312 = vmul.f32 1.0, %v1311
    %v1313 = vrcp.pop %v1309
    %v1314 = vmul.f32 1.0, %v1313
    %v1315 = vrcp.pop %v1310
    %v1316 = vmul.f32 1.0, %v1315
    %v1317 = vtanh.pop %v1298
    %v1318 = vmul.f32 %v1314, %v703
    %v1319 = vmul.f32 %v1312, %v1317
    %v1320 = vadd.f32 %v1318, %v1319
    %v1321 = vtanh.pop %v1320
    %v1322 = vmul.f32 %v1316, %v1321
    %1323 = vmatprep.subr.mxu0 %v831
    %1324 = vmatpush1.msra.mxu0 %v830
    %1325 = vmatprep.subr.mxu0 %v827
    %1326 = vmatpush1.msra.mxu0 %v826
    %1327 = vmatprep.subr.mxu0 %v823
    %1328 = vmatpush1.msra.mxu0 %v822
    %1329 = vmatprep.subr.mxu0 %v819
    %1330 = vmatpush1.msra.mxu0 %v818
    %1331 = vmatprep.subr.mxu0 %v815
    %1332 = vmatpush1.msra.mxu0 %v814
    %1333 = vmatprep.subr.mxu0 %v811
    %1334 = vmatpush1.msra.mxu0 %v810
    %1335 = vmatprep.subr.mxu0 %v807
    %1336 = vmatpush1.msra.mxu0 %v806
    %1337 = vmatprep.subr.mxu0 %v803
    %1338 = vmatpush1.msra.mxu0 %v802
    %1339 = vmatprep.subr.mxu0 %v799
    %1340 = vmatpush1.msra.mxu0 %v798
    %1341 = vmatprep.subr.mxu0 %v795
    %1342 = vmatpush1.msra.mxu0 %v794
    %1343 = vmatprep.subr.mxu0 %v791
    %1344 = vmatpush1.msra.mxu0 %v790
    %1345 = vmatprep.subr.mxu0 %v787
    %1346 = vmatpush1.msra.mxu0 %v786
    %1347 = vmatprep.subr.mxu0 %v783
    %1348 = vmatpush1.msra.mxu0 %v782
    %1349 = vmatprep.subr.mxu0 %v779
    %1350 = vmatpush1.msra.mxu0 %v778
    %1351 = vmatprep.subr.mxu0 %v775
    %1352 = vmatpush1.msra.mxu0 %v774
    %1353 = vmatprep.subr.mxu0 %v771
    %1354 = vmatpush1.msra.mxu0 %v770
    %1355 = vmatprep.subr.mxu0 0.0
    %1356 = vmatpush2.msra.mxu0 0.0
    %1357 = vmatprep.subr.mxu0 0.0
    %1358 = vmatpush2.msra.mxu0 0.0
    %1359 = vmatprep.subr.mxu0 0.0
    %1360 = vmatpush2.msra.mxu0 0.0
    %1361 = vmatprep.subr.mxu0 0.0
    %1362 = vmatpush2.msra.mxu0 0.0
    %1363 = vmatprep.subr.mxu0 0.0
    %1364 = vmatpush2.msra.mxu0 0.0
    %1365 = vmatprep.subr.mxu0 0.0
    %1366 = vmatpush2.msra.mxu0 0.0
    %1367 = vmatprep.subr.mxu0 0.0
    %1368 = vmatpush2.msra.mxu0 0.0
    %1369 = vmatprep.subr.mxu0 0.0
    %1370 = vmatpush2.msra.mxu0 0.0
    %1371 = vmatprep.subr.mxu0 0.0
    %1372 = vmatpush2.msra.mxu0 0.0
    %1373 = vmatprep.subr.mxu0 0.0
    %1374 = vmatpush2.msra.mxu0 0.0
    %1375 = vmatprep.subr.mxu0 0.0
    %1376 = vmatpush2.msra.mxu0 0.0
    %1377 = vmatprep.subr.mxu0 0.0
    %1378 = vmatpush2.msra.mxu0 0.0
    %1379 = vmatprep.subr.mxu0 0.0
    %1380 = vmatpush2.msra.mxu0 0.0
    %1381 = vmatprep.subr.mxu0 0.0
    %1382 = vmatpush2.msra.mxu0 0.0
    %1383 = vmatprep.subr.mxu0 0.0
    %1384 = vmatpush2.msra.mxu0 0.0
    %1385 = vmatprep.subr.mxu0 0.0
    %1386 = vmatpush2.msra.mxu0 0.0
    %1387 = vmatprep.mubr.f32.mxu0 0.0
    %1388 = vmatmul.mubr.f32.gmra.mxu0 %v1322
    %v1389 = vpop.f32.mrf.mxu0
    %v1390 = vadd.f32 0.0, %v1389
    %v1391 = vpop.f32.mrf.mxu0
    %v1392 = vadd.f32 0.0, %v1391
    %1393 = vdwg.mxu0
    %1394 = vmatprep.subr.mxu0 %v833
    %1395 = vmatpush1.msra.mxu0 %v832
    %1396 = vmatprep.subr.mxu0 %v829
    %1397 = vmatpush1.msra.mxu0 %v828
    %1398 = vmatprep.subr.mxu0 %v825
    %1399 = vmatpush1.msra.mxu0 %v824
    %1400 = vmatprep.subr.mxu0 %v821
    %1401 = vmatpush1.msra.mxu0 %v820
    %1402 = vmatprep.subr.mxu0 %v817
    %1403 = vmatpush1.msra.mxu0 %v816
    %1404 = vmatprep.subr.mxu0 %v813
    %1405 = vmatpush1.msra.mxu0 %v812
    %1406 = vmatprep.subr.mxu0 %v809
    %1407 = vmatpush1.msra.mxu0 %v808
    %1408 = vmatprep.subr.mxu0 %v805
    %1409 = vmatpush1.msra.mxu0 %v804
    %1410 = vmatprep.subr.mxu0 %v801
    %1411 = vmatpush1.msra.mxu0 %v800
    %1412 = vmatprep.subr.mxu0 %v797
    %1413 = vmatpush1.msra.mxu0 %v796
    %1414 = vmatprep.subr.mxu0 %v793
    %1415 = vmatpush1.msra.mxu0 %v792
    %1416 = vmatprep.subr.mxu0 %v789
    %1417 = vmatpush1.msra.mxu0 %v788
    %1418 = vmatprep.subr.mxu0 %v785
    %1419 = vmatpush1.msra.mxu0 %v784
    %1420 = vmatprep.subr.mxu0 %v781
    %1421 = vmatpush1.msra.mxu0 %v780
    %1422 = vmatprep.subr.mxu0 %v777
    %1423 = vmatpush1.msra.mxu0 %v776
    %1424 = vmatprep.subr.mxu0 %v773
    %1425 = vmatpush1.msra.mxu0 %v772
    %1426 = vmatprep.subr.mxu0 0.0
    %1427 = vmatpush2.msra.mxu0 0.0
    %1428 = vmatprep.subr.mxu0 0.0
    %1429 = vmatpush2.msra.mxu0 0.0
    %1430 = vmatprep.subr.mxu0 0.0
    %1431 = vmatpush2.msra.mxu0 0.0
    %1432 = vmatprep.subr.mxu0 0.0
    %1433 = vmatpush2.msra.mxu0 0.0
    %1434 = vmatprep.subr.mxu0 0.0
    %1435 = vmatpush2.msra.mxu0 0.0
    %1436 = vmatprep.subr.mxu0 0.0
    %1437 = vmatpush2.msra.mxu0 0.0
    %1438 = vmatprep.subr.mxu0 0.0
    %1439 = vmatpush2.msra.mxu0 0.0
    %1440 = vmatprep.subr.mxu0 0.0
    %1441 = vmatpush2.msra.mxu0 0.0
    %1442 = vmatprep.subr.mxu0 0.0
    %1443 = vmatpush2.msra.mxu0 0.0
    %1444 = vmatprep.subr.mxu0 0.0
    %1445 = vmatpush2.msra.mxu0 0.0
    %1446 = vmatprep.subr.mxu0 0.0
    %1447 = vmatpush2.msra.mxu0 0.0
    %1448 = vmatprep.subr.mxu0 0.0
    %1449 = vmatpush2.msra.mxu0 0.0
    %1450 = vmatprep.subr.mxu0 0.0
    %1451 = vmatpush2.msra.mxu0 0.0
    %1452 = vmatprep.subr.mxu0 0.0
    %1453 = vmatpush2.msra.mxu0 0.0
    %1454 = vmatprep.subr.mxu0 0.0
    %1455 = vmatpush2.msra.mxu0 0.0
    %1456 = vmatprep.subr.mxu0 0.0
    %1457 = vmatpush2.msra.mxu0 0.0
    %1458 = vmatprep.mubr.f32.mxu0 0.0
    %1459 = vmatmul.mubr.f32.gmra.mxu0 %v1322
    %v1460 = vpop.f32.mrf.mxu0
    %v1461 = vadd.f32 0.0, %v1460
    %v1462 = vpop.f32.mrf.mxu0
    %v1463 = vadd.f32 0.0, %v1462
    %1464 = vdwg.mxu0
    %1465 = vmatprep.subr.mxu0 %v767
    %1466 = vmatpush1.msra.mxu0 %v766
    %1467 = vmatprep.subr.mxu0 %v763
    %1468 = vmatpush1.msra.mxu0 %v762
    %1469 = vmatprep.subr.mxu0 %v759
    %1470 = vmatpush1.msra.mxu0 %v758
    %1471 = vmatprep.subr.mxu0 %v755
    %1472 = vmatpush1.msra.mxu0 %v754
    %1473 = vmatprep.subr.mxu0 %v751
    %1474 = vmatpush1.msra.mxu0 %v750
    %1475 = vmatprep.subr.mxu0 %v747
    %1476 = vmatpush1.msra.mxu0 %v746
    %1477 = vmatprep.subr.mxu0 %v743
    %1478 = vmatpush1.msra.mxu0 %v742
    %1479 = vmatprep.subr.mxu0 %v739
    %1480 = vmatpush1.msra.mxu0 %v738
    %1481 = vmatprep.subr.mxu0 %v735
    %1482 = vmatpush1.msra.mxu0 %v734
    %1483 = vmatprep.subr.mxu0 %v731
    %1484 = vmatpush1.msra.mxu0 %v730
    %1485 = vmatprep.subr.mxu0 %v727
    %1486 = vmatpush1.msra.mxu0 %v726
    %1487 = vmatprep.subr.mxu0 %v723
    %1488 = vmatpush1.msra.mxu0 %v722
    %1489 = vmatprep.subr.mxu0 %v719
    %1490 = vmatpush1.msra.mxu0 %v718
    %1491 = vmatprep.subr.mxu0 %v715
    %1492 = vmatpush1.msra.mxu0 %v714
    %1493 = vmatprep.subr.mxu0 %v711
    %1494 = vmatpush1.msra.mxu0 %v710
    %1495 = vmatprep.subr.mxu0 %v707
    %1496 = vmatpush1.msra.mxu0 %v706
    %1497 = vmatprep.subr.mxu0 0.0
    %1498 = vmatpush2.msra.mxu0 0.0
    %1499 = vmatprep.subr.mxu0 0.0
    %1500 = vmatpush2.msra.mxu0 0.0
    %1501 = vmatprep.subr.mxu0 0.0
    %1502 = vmatpush2.msra.mxu0 0.0
    %1503 = vmatprep.subr.mxu0 0.0
    %1504 = vmatpush2.msra.mxu0 0.0
    %1505 = vmatprep.subr.mxu0 0.0
    %1506 = vmatpush2.msra.mxu0 0.0
    %1507 = vmatprep.subr.mxu0 0.0
    %1508 = vmatpush2.msra.mxu0 0.0
    %1509 = vmatprep.subr.mxu0 0.0
    %1510 = vmatpush2.msra.mxu0 0.0
    %1511 = vmatprep.subr.mxu0 0.0
    %1512 = vmatpush2.msra.mxu0 0.0
    %1513 = vmatprep.subr.mxu0 0.0
    %1514 = vmatpush2.msra.mxu0 0.0
    %1515 = vmatprep.subr.mxu0 0.0
    %1516 = vmatpush2.msra.mxu0 0.0
    %1517 = vmatprep.subr.mxu0 0.0
    %1518 = vmatpush2.msra.mxu0 0.0
    %1519 = vmatprep.subr.mxu0 0.0
    %1520 = vmatpush2.msra.mxu0 0.0
    %1521 = vmatprep.subr.mxu0 0.0
    %1522 = vmatpush2.msra.mxu0 0.0
    %1523 = vmatprep.subr.mxu0 0.0
    %1524 = vmatpush2.msra.mxu0 0.0
    %1525 = vmatprep.subr.mxu0 0.0
    %1526 = vmatpush2.msra.mxu0 0.0
    %1527 = vmatprep.subr.mxu0 0.0
    %1528 = vmatpush2.msra.mxu0 0.0
    %1529 = vmatprep.mubr.f32.mxu0 0.0
    %1530 = vmatmul.mubr.f32.gmra.mxu0 %v1145
    %v1531 = vpop.f32.mrf.mxu0
    %v1532 = vadd.f32 %v1390, %v1531
    %v1533 = vpop.f32.mrf.mxu0
    %v1534 = vadd.f32 %v1392, %v1533
    %1535 = vdwg.mxu0
    %1536 = vmatprep.subr.mxu0 %v769
    %1537 = vmatpush1.msra.mxu0 %v768
    %1538 = vmatprep.subr.mxu0 %v765
    %1539 = vmatpush1.msra.mxu0 %v764
    %1540 = vmatprep.subr.mxu0 %v761
    %1541 = vmatpush1.msra.mxu0 %v760
    %1542 = vmatprep.subr.mxu0 %v757
    %1543 = vmatpush1.msra.mxu0 %v756
    %1544 = vmatprep.subr.mxu0 %v753
    %1545 = vmatpush1.msra.mxu0 %v752
    %1546 = vmatprep.subr.mxu0 %v749
    %1547 = vmatpush1.msra.mxu0 %v748
    %1548 = vmatprep.subr.mxu0 %v745
    %1549 = vmatpush1.msra.mxu0 %v744
    %1550 = vmatprep.subr.mxu0 %v741
    %1551 = vmatpush1.msra.mxu0 %v740
    %1552 = vmatprep.subr.mxu0 %v737
    %1553 = vmatpush1.msra.mxu0 %v736
    %1554 = vmatprep.subr.mxu0 %v733
    %1555 = vmatpush1.msra.mxu0 %v732
    %1556 = vmatprep.subr.mxu0 %v729
    %1557 = vmatpush1.msra.mxu0 %v728
    %1558 = vmatprep.subr.mxu0 %v725
    %1559 = vmatpush1.msra.mxu0 %v724
    %1560 = vmatprep.subr.mxu0 %v721
    %1561 = vmatpush1.msra.mxu0 %v720
    %1562 = vmatprep.subr.mxu0 %v717
    %1563 = vmatpush1.msra.mxu0 %v716
    %1564 = vmatprep.subr.mxu0 %v713
    %1565 = vmatpush1.msra.mxu0 %v712
    %1566 = vmatprep.subr.mxu0 %v709
    %1567 = vmatpush1.msra.mxu0 %v708
    %1568 = vmatprep.subr.mxu0 0.0
    %1569 = vmatpush2.msra.mxu0 0.0
    %1570 = vmatprep.subr.mxu0 0.0
    %1571 = vmatpush2.msra.mxu0 0.0
    %1572 = vmatprep.subr.mxu0 0.0
    %1573 = vmatpush2.msra.mxu0 0.0
    %1574 = vmatprep.subr.mxu0 0.0
    %1575 = vmatpush2.msra.mxu0 0.0
    %1576 = vmatprep.subr.mxu0 0.0
    %1577 = vmatpush2.msra.mxu0 0.0
    %1578 = vmatprep.subr.mxu0 0.0
    %1579 = vmatpush2.msra.mxu0 0.0
    %1580 = vmatprep.subr.mxu0 0.0
    %1581 = vmatpush2.msra.mxu0 0.0
    %1582 = vmatprep.subr.mxu0 0.0
    %1583 = vmatpush2.msra.mxu0 0.0
    %1584 = vmatprep.subr.mxu0 0.0
    %1585 = vmatpush2.msra.mxu0 0.0
    %1586 = vmatprep.subr.mxu0 0.0
    %1587 = vmatpush2.msra.mxu0 0.0
    %1588 = vmatprep.subr.mxu0 0.0
    %1589 = vmatpush2.msra.mxu0 0.0
    %1590 = vmatprep.subr.mxu0 0.0
    %1591 = vmatpush2.msra.mxu0 0.0
    %1592 = vmatprep.subr.mxu0 0.0
    %1593 = vmatpush2.msra.mxu0 0.0
    %1594 = vmatprep.subr.mxu0 0.0
    %1595 = vmatpush2.msra.mxu0 0.0
    %1596 = vmatprep.subr.mxu0 0.0
    %1597 = vmatpush2.msra.mxu0 0.0
    %1598 = vmatprep.subr.mxu0 0.0
    %1599 = vmatpush2.msra.mxu0 0.0
    %1600 = vmatprep.mubr.f32.mxu0 0.0
    %1601 = vmatmul.mubr.f32.gmra.mxu0 %v1145
    %v1602 = vpop.f32.mrf.mxu0
    %v1603 = vadd.f32 %v1461, %v1602
    %v1604 = vpop.f32.mrf.mxu0
    %v1605 = vadd.f32 %v1463, %v1604
    %1606 = vdwg.mxu0
    %v1607 = vadd.f32 %v1532, %v448
    %v1608 = vadd.f32 %v1534, %v452
    %v1609 = vadd.f32 %v1603, %v456
    %v1610 = vadd.f32 %v1605, %v460
    %v1611 = vxor.u32 %v1607, 2147483648
    %v1612 = vxor.u32 %v1608, 2147483648
    %v1613 = vxor.u32 %v1609, 2147483648
    %v1614 = vmul.f32 %v1611, 1.442695
    %v1615 = vpow.pop %v1614
    %v1616 = vmul.f32 %v1612, 1.442695
    %v1617 = vpow.pop %v1616
    %v1618 = vmul.f32 %v1613, 1.442695
    %v1619 = vpow.pop %v1618
    %v1620 = vadd.f32 %v1615, 1.0
    %v1621 = vadd.f32 %v1617, 1.0
    %v1622 = vadd.f32 %v1619, 1.0
    %v1623 = vrcp.pop %v1620
    %v1624 = vmul.f32 1.0, %v1623
    %v1625 = vrcp.pop %v1621
    %v1626 = vmul.f32 1.0, %v1625
    %v1627 = vrcp.pop %v1622
    %v1628 = vmul.f32 1.0, %v1627
    %v1629 = vtanh.pop %v1610
    %v1630 = vmul.f32 %v1626, %v1143
    %v1631 = vmul.f32 %v1624, %v1629
    %v1632 = vadd.f32 %v1630, %v1631
    %v1633 = vtanh.pop %v1632
    %v1634 = vmul.f32 %v1628, %v1633
    %s1635 = smul.u32 2, 4
    %s1636 = smul.addr %s1635, 8
    %s1637 = scalar_lea.vmem [#allocation2], %s1636
    %v1638 = vld [vmem:[%s1637] sm:$0xff]
    %v1639 = vld [vmem:[%s1637 + $0x8] sm:$0xff]
    %v1640 = vld [vmem:[%s1637 + $0x10] sm:$0xff]
    %v1641 = vld [vmem:[%s1637 + $0x18] sm:$0xff]
    %1642 = vmatprep.subr.mxu0 %v533
    %1643 = vmatpush1.msra.mxu0 %v532
    %1644 = vmatprep.subr.mxu0 %v529
    %1645 = vmatpush1.msra.mxu0 %v528
    %1646 = vmatprep.subr.mxu0 %v525
    %1647 = vmatpush1.msra.mxu0 %v524
    %1648 = vmatprep.subr.mxu0 %v521
    %1649 = vmatpush1.msra.mxu0 %v520
    %1650 = vmatprep.subr.mxu0 %v517
    %1651 = vmatpush1.msra.mxu0 %v516
    %1652 = vmatprep.subr.mxu0 %v513
    %1653 = vmatpush1.msra.mxu0 %v512
    %1654 = vmatprep.subr.mxu0 %v509
    %1655 = vmatpush1.msra.mxu0 %v508
    %1656 = vmatprep.subr.mxu0 %v505
    %1657 = vmatpush1.msra.mxu0 %v504
    %1658 = vmatprep.subr.mxu0 %v501
    %1659 = vmatpush1.msra.mxu0 %v500
    %1660 = vmatprep.subr.mxu0 %v497
    %1661 = vmatpush1.msra.mxu0 %v496
    %1662 = vmatprep.subr.mxu0 %v493
    %1663 = vmatpush1.msra.mxu0 %v492
    %1664 = vmatprep.subr.mxu0 %v489
    %1665 = vmatpush1.msra.mxu0 %v488
    %1666 = vmatprep.subr.mxu0 %v485
    %1667 = vmatpush1.msra.mxu0 %v484
    %1668 = vmatprep.subr.mxu0 %v481
    %1669 = vmatpush1.msra.mxu0 %v480
    %1670 = vmatprep.subr.mxu0 %v477
    %1671 = vmatpush1.msra.mxu0 %v476
    %1672 = vmatprep.subr.mxu0 %v473
    %1673 = vmatpush1.msra.mxu0 %v472
    %1674 = vmatprep.subr.mxu0 0.0
    %1675 = vmatpush2.msra.mxu0 0.0
    %1676 = vmatprep.subr.mxu0 0.0
    %1677 = vmatpush2.msra.mxu0 0.0
    %1678 = vmatprep.subr.mxu0 0.0
    %1679 = vmatpush2.msra.mxu0 0.0
    %1680 = vmatprep.subr.mxu0 0.0
    %1681 = vmatpush2.msra.mxu0 0.0
    %1682 = vmatprep.subr.mxu0 0.0
    %1683 = vmatpush2.msra.mxu0 0.0
    %1684 = vmatprep.subr.mxu0 0.0
    %1685 = vmatpush2.msra.mxu0 0.0
    %1686 = vmatprep.subr.mxu0 0.0
    %1687 = vmatpush2.msra.mxu0 0.0
    %1688 = vmatprep.subr.mxu0 0.0
    %1689 = vmatpush2.msra.mxu0 0.0
    %1690 = vmatprep.subr.mxu0 0.0
    %1691 = vmatpush2.msra.mxu0 0.0
    %1692 = vmatprep.subr.mxu0 0.0
    %1693 = vmatpush2.msra.mxu0 0.0
    %1694 = vmatprep.subr.mxu0 0.0
    %1695 = vmatpush2.msra.mxu0 0.0
    %1696 = vmatprep.subr.mxu0 0.0
    %1697 = vmatpush2.msra.mxu0 0.0
    %1698 = vmatprep.subr.mxu0 0.0
    %1699 = vmatpush2.msra.mxu0 0.0
    %1700 = vmatprep.subr.mxu0 0.0
    %1701 = vmatpush2.msra.mxu0 0.0
    %1702 = vmatprep.subr.mxu0 0.0
    %1703 = vmatpush2.msra.mxu0 0.0
    %1704 = vmatprep.subr.mxu0 0.0
    %1705 = vmatpush2.msra.mxu0 0.0
    %1706 = vmatprep.mubr.f32.mxu0 0.0
    %1707 = vmatmul.mubr.f32.gmra.mxu0 %v1322
    %v1708 = vpop.f32.mrf.mxu0
    %v1709 = vadd.f32 0.0, %v1708
    %v1710 = vpop.f32.mrf.mxu0
    %v1711 = vadd.f32 0.0, %v1710
    %1712 = vdwg.mxu0
    %1713 = vmatprep.subr.mxu0 %v535
    %1714 = vmatpush1.msra.mxu0 %v534
    %1715 = vmatprep.subr.mxu0 %v531
    %1716 = vmatpush1.msra.mxu0 %v530
    %1717 = vmatprep.subr.mxu0 %v527
    %1718 = vmatpush1.msra.mxu0 %v526
    %1719 = vmatprep.subr.mxu0 %v523
    %1720 = vmatpush1.msra.mxu0 %v522
    %1721 = vmatprep.subr.mxu0 %v519
    %1722 = vmatpush1.msra.mxu0 %v518
    %1723 = vmatprep.subr.mxu0 %v515
    %1724 = vmatpush1.msra.mxu0 %v514
    %1725 = vmatprep.subr.mxu0 %v511
    %1726 = vmatpush1.msra.mxu0 %v510
    %1727 = vmatprep.subr.mxu0 %v507
    %1728 = vmatpush1.msra.mxu0 %v506
    %1729 = vmatprep.subr.mxu0 %v503
    %1730 = vmatpush1.msra.mxu0 %v502
    %1731 = vmatprep.subr.mxu0 %v499
    %1732 = vmatpush1.msra.mxu0 %v498
    %1733 = vmatprep.subr.mxu0 %v495
    %1734 = vmatpush1.msra.mxu0 %v494
    %1735 = vmatprep.subr.mxu0 %v491
    %1736 = vmatpush1.msra.mxu0 %v490
    %1737 = vmatprep.subr.mxu0 %v487
    %1738 = vmatpush1.msra.mxu0 %v486
    %1739 = vmatprep.subr.mxu0 %v483
    %1740 = vmatpush1.msra.mxu0 %v482
    %1741 = vmatprep.subr.mxu0 %v479
    %1742 = vmatpush1.msra.mxu0 %v478
    %1743 = vmatprep.subr.mxu0 %v475
    %1744 = vmatpush1.msra.mxu0 %v474
    %1745 = vmatprep.subr.mxu0 0.0
    %1746 = vmatpush2.msra.mxu0 0.0
    %1747 = vmatprep.subr.mxu0 0.0
    %1748 = vmatpush2.msra.mxu0 0.0
    %1749 = vmatprep.subr.mxu0 0.0
    %1750 = vmatpush2.msra.mxu0 0.0
    %1751 = vmatprep.subr.mxu0 0.0
    %1752 = vmatpush2.msra.mxu0 0.0
    %1753 = vmatprep.subr.mxu0 0.0
    %1754 = vmatpush2.msra.mxu0 0.0
    %1755 = vmatprep.subr.mxu0 0.0
    %1756 = vmatpush2.msra.mxu0 0.0
    %1757 = vmatprep.subr.mxu0 0.0
    %1758 = vmatpush2.msra.mxu0 0.0
    %1759 = vmatprep.subr.mxu0 0.0
    %1760 = vmatpush2.msra.mxu0 0.0
    %1761 = vmatprep.subr.mxu0 0.0
    %1762 = vmatpush2.msra.mxu0 0.0
    %1763 = vmatprep.subr.mxu0 0.0
    %1764 = vmatpush2.msra.mxu0 0.0
    %1765 = vmatprep.subr.mxu0 0.0
    %1766 = vmatpush2.msra.mxu0 0.0
    %1767 = vmatprep.subr.mxu0 0.0
    %1768 = vmatpush2.msra.mxu0 0.0
    %1769 = vmatprep.subr.mxu0 0.0
    %1770 = vmatpush2.msra.mxu0 0.0
    %1771 = vmatprep.subr.mxu0 0.0
    %1772 = vmatpush2.msra.mxu0 0.0
    %1773 = vmatprep.subr.mxu0 0.0
    %1774 = vmatpush2.msra.mxu0 0.0
    %1775 = vmatprep.subr.mxu0 0.0
    %1776 = vmatpush2.msra.mxu0 0.0
    %1777 = vmatprep.mubr.f32.mxu0 0.0
    %1778 = vmatmul.mubr.f32.gmra.mxu0 %v1322
    %v1779 = vpop.f32.mrf.mxu0
    %v1780 = vadd.f32 0.0, %v1779
    %v1781 = vpop.f32.mrf.mxu0
    %v1782 = vadd.f32 0.0, %v1781
    %1783 = vdwg.mxu0
    %v1784 = vadd.f32 %v1638, %v1709
    %v1785 = vadd.f32 %v1639, %v1711
    %v1786 = vadd.f32 %v1640, %v1780
    %v1787 = vadd.f32 %v1641, %v1782
    %v1788 = vxor.u32 %v1784, 2147483648
    %v1789 = vxor.u32 %v1785, 2147483648
    %v1790 = vxor.u32 %v1786, 2147483648
    %v1791 = vmul.f32 %v1788, 1.442695
    %v1792 = vpow.pop %v1791
    %v1793 = vmul.f32 %v1789, 1.442695
    %v1794 = vpow.pop %v1793
    %v1795 = vmul.f32 %v1790, 1.442695
    %v1796 = vpow.pop %v1795
    %v1797 = vadd.f32 %v1792, 1.0
    %v1798 = vadd.f32 %v1794, 1.0
    %v1799 = vadd.f32 %v1796, 1.0
    %v1800 = vrcp.pop %v1797
    %v1801 = vmul.f32 1.0, %v1800
    %v1802 = vrcp.pop %v1798
    %v1803 = vmul.f32 1.0, %v1802
    %v1804 = vrcp.pop %v1799
    %v1805 = vmul.f32 1.0, %v1804
    %v1806 = vtanh.pop %v1787
    %v1807 = vmul.f32 %v1803, %v1320
    %v1808 = vmul.f32 %v1801, %v1806
    %v1809 = vadd.f32 %v1807, %v1808
    %v1810 = vtanh.pop %v1809
    %v1811 = vmul.f32 %v1805, %v1810
    %1812 = vmatprep.subr.mxu0 %v831
    %1813 = vmatpush1.msra.mxu0 %v830
    %1814 = vmatprep.subr.mxu0 %v827
    %1815 = vmatpush1.msra.mxu0 %v826
    %1816 = vmatprep.subr.mxu0 %v823
    %1817 = vmatpush1.msra.mxu0 %v822
    %1818 = vmatprep.subr.mxu0 %v819
    %1819 = vmatpush1.msra.mxu0 %v818
    %1820 = vmatprep.subr.mxu0 %v815
    %1821 = vmatpush1.msra.mxu0 %v814
    %1822 = vmatprep.subr.mxu0 %v811
    %1823 = vmatpush1.msra.mxu0 %v810
    %1824 = vmatprep.subr.mxu0 %v807
    %1825 = vmatpush1.msra.mxu0 %v806
    %1826 = vmatprep.subr.mxu0 %v803
    %1827 = vmatpush1.msra.mxu0 %v802
    %1828 = vmatprep.subr.mxu0 %v799
    %1829 = vmatpush1.msra.mxu0 %v798
    %1830 = vmatprep.subr.mxu0 %v795
    %1831 = vmatpush1.msra.mxu0 %v794
    %1832 = vmatprep.subr.mxu0 %v791
    %1833 = vmatpush1.msra.mxu0 %v790
    %1834 = vmatprep.subr.mxu0 %v787
    %1835 = vmatpush1.msra.mxu0 %v786
    %1836 = vmatprep.subr.mxu0 %v783
    %1837 = vmatpush1.msra.mxu0 %v782
    %1838 = vmatprep.subr.mxu0 %v779
    %1839 = vmatpush1.msra.mxu0 %v778
    %1840 = vmatprep.subr.mxu0 %v775
    %1841 = vmatpush1.msra.mxu0 %v774
    %1842 = vmatprep.subr.mxu0 %v771
    %1843 = vmatpush1.msra.mxu0 %v770
    %1844 = vmatprep.subr.mxu0 0.0
    %1845 = vmatpush2.msra.mxu0 0.0
    %1846 = vmatprep.subr.mxu0 0.0
    %1847 = vmatpush2.msra.mxu0 0.0
    %1848 = vmatprep.subr.mxu0 0.0
    %1849 = vmatpush2.msra.mxu0 0.0
    %1850 = vmatprep.subr.mxu0 0.0
    %1851 = vmatpush2.msra.mxu0 0.0
    %1852 = vmatprep.subr.mxu0 0.0
    %1853 = vmatpush2.msra.mxu0 0.0
    %1854 = vmatprep.subr.mxu0 0.0
    %1855 = vmatpush2.msra.mxu0 0.0
    %1856 = vmatprep.subr.mxu0 0.0
    %1857 = vmatpush2.msra.mxu0 0.0
    %1858 = vmatprep.subr.mxu0 0.0
    %1859 = vmatpush2.msra.mxu0 0.0
    %1860 = vmatprep.subr.mxu0 0.0
    %1861 = vmatpush2.msra.mxu0 0.0
    %1862 = vmatprep.subr.mxu0 0.0
    %1863 = vmatpush2.msra.mxu0 0.0
    %1864 = vmatprep.subr.mxu0 0.0
    %1865 = vmatpush2.msra.mxu0 0.0
    %1866 = vmatprep.subr.mxu0 0.0
    %1867 = vmatpush2.msra.mxu0 0.0
    %1868 = vmatprep.subr.mxu0 0.0
    %1869 = vmatpush2.msra.mxu0 0.0
    %1870 = vmatprep.subr.mxu0 0.0
    %1871 = vmatpush2.msra.mxu0 0.0
    %1872 = vmatprep.subr.mxu0 0.0
    %1873 = vmatpush2.msra.mxu0 0.0
    %1874 = vmatprep.subr.mxu0 0.0
    %1875 = vmatpush2.msra.mxu0 0.0
    %1876 = vmatprep.mubr.f32.mxu0 0.0
    %1877 = vmatmul.mubr.f32.gmra.mxu0 %v1811
    %v1878 = vpop.f32.mrf.mxu0
    %v1879 = vadd.f32 0.0, %v1878
    %v1880 = vpop.f32.mrf.mxu0
    %v1881 = vadd.f32 0.0, %v1880
    %1882 = vdwg.mxu0
    %1883 = vmatprep.subr.mxu0 %v833
    %1884 = vmatpush1.msra.mxu0 %v832
    %1885 = vmatprep.subr.mxu0 %v829
    %1886 = vmatpush1.msra.mxu0 %v828
    %1887 = vmatprep.subr.mxu0 %v825
    %1888 = vmatpush1.msra.mxu0 %v824
    %1889 = vmatprep.subr.mxu0 %v821
    %1890 = vmatpush1.msra.mxu0 %v820
    %1891 = vmatprep.subr.mxu0 %v817
    %1892 = vmatpush1.msra.mxu0 %v816
    %1893 = vmatprep.subr.mxu0 %v813
    %1894 = vmatpush1.msra.mxu0 %v812
    %1895 = vmatprep.subr.mxu0 %v809
    %1896 = vmatpush1.msra.mxu0 %v808
    %1897 = vmatprep.subr.mxu0 %v805
    %1898 = vmatpush1.msra.mxu0 %v804
    %1899 = vmatprep.subr.mxu0 %v801
    %1900 = vmatpush1.msra.mxu0 %v800
    %1901 = vmatprep.subr.mxu0 %v797
    %1902 = vmatpush1.msra.mxu0 %v796
    %1903 = vmatprep.subr.mxu0 %v793
    %1904 = vmatpush1.msra.mxu0 %v792
    %1905 = vmatprep.subr.mxu0 %v789
    %1906 = vmatpush1.msra.mxu0 %v788
    %1907 = vmatprep.subr.mxu0 %v785
    %1908 = vmatpush1.msra.mxu0 %v784
    %1909 = vmatprep.subr.mxu0 %v781
    %1910 = vmatpush1.msra.mxu0 %v780
    %1911 = vmatprep.subr.mxu0 %v777
    %1912 = vmatpush1.msra.mxu0 %v776
    %1913 = vmatprep.subr.mxu0 %v773
    %1914 = vmatpush1.msra.mxu0 %v772
    %1915 = vmatprep.subr.mxu0 0.0
    %1916 = vmatpush2.msra.mxu0 0.0
    %1917 = vmatprep.subr.mxu0 0.0
    %1918 = vmatpush2.msra.mxu0 0.0
    %1919 = vmatprep.subr.mxu0 0.0
    %1920 = vmatpush2.msra.mxu0 0.0
    %1921 = vmatprep.subr.mxu0 0.0
    %1922 = vmatpush2.msra.mxu0 0.0
    %1923 = vmatprep.subr.mxu0 0.0
    %1924 = vmatpush2.msra.mxu0 0.0
    %1925 = vmatprep.subr.mxu0 0.0
    %1926 = vmatpush2.msra.mxu0 0.0
    %1927 = vmatprep.subr.mxu0 0.0
    %1928 = vmatpush2.msra.mxu0 0.0
    %1929 = vmatprep.subr.mxu0 0.0
    %1930 = vmatpush2.msra.mxu0 0.0
    %1931 = vmatprep.subr.mxu0 0.0
    %1932 = vmatpush2.msra.mxu0 0.0
    %1933 = vmatprep.subr.mxu0 0.0
    %1934 = vmatpush2.msra.mxu0 0.0
    %1935 = vmatprep.subr.mxu0 0.0
    %1936 = vmatpush2.msra.mxu0 0.0
    %1937 = vmatprep.subr.mxu0 0.0
    %1938 = vmatpush2.msra.mxu0 0.0
    %1939 = vmatprep.subr.mxu0 0.0
    %1940 = vmatpush2.msra.mxu0 0.0
    %1941 = vmatprep.subr.mxu0 0.0
    %1942 = vmatpush2.msra.mxu0 0.0
    %1943 = vmatprep.subr.mxu0 0.0
    %1944 = vmatpush2.msra.mxu0 0.0
    %1945 = vmatprep.subr.mxu0 0.0
    %1946 = vmatpush2.msra.mxu0 0.0
    %1947 = vmatprep.mubr.f32.mxu0 0.0
    %1948 = vmatmul.mubr.f32.gmra.mxu0 %v1811
    %v1949 = vpop.f32.mrf.mxu0
    %v1950 = vadd.f32 0.0, %v1949
    %v1951 = vpop.f32.mrf.mxu0
    %v1952 = vadd.f32 0.0, %v1951
    %1953 = vdwg.mxu0
    %1954 = vmatprep.subr.mxu0 %v767
    %1955 = vmatpush1.msra.mxu0 %v766
    %1956 = vmatprep.subr.mxu0 %v763
    %1957 = vmatpush1.msra.mxu0 %v762
    %1958 = vmatprep.subr.mxu0 %v759
    %1959 = vmatpush1.msra.mxu0 %v758
    %1960 = vmatprep.subr.mxu0 %v755
    %1961 = vmatpush1.msra.mxu0 %v754
    %1962 = vmatprep.subr.mxu0 %v751
    %1963 = vmatpush1.msra.mxu0 %v750
    %1964 = vmatprep.subr.mxu0 %v747
    %1965 = vmatpush1.msra.mxu0 %v746
    %1966 = vmatprep.subr.mxu0 %v743
    %1967 = vmatpush1.msra.mxu0 %v742
    %1968 = vmatprep.subr.mxu0 %v739
    %1969 = vmatpush1.msra.mxu0 %v738
    %1970 = vmatprep.subr.mxu0 %v735
    %1971 = vmatpush1.msra.mxu0 %v734
    %1972 = vmatprep.subr.mxu0 %v731
    %1973 = vmatpush1.msra.mxu0 %v730
    %1974 = vmatprep.subr.mxu0 %v727
    %1975 = vmatpush1.msra.mxu0 %v726
    %1976 = vmatprep.subr.mxu0 %v723
    %1977 = vmatpush1.msra.mxu0 %v722
    %1978 = vmatprep.subr.mxu0 %v719
    %1979 = vmatpush1.msra.mxu0 %v718
    %1980 = vmatprep.subr.mxu0 %v715
    %1981 = vmatpush1.msra.mxu0 %v714
    %1982 = vmatprep.subr.mxu0 %v711
    %1983 = vmatpush1.msra.mxu0 %v710
    %1984 = vmatprep.subr.mxu0 %v707
    %1985 = vmatpush1.msra.mxu0 %v706
    %1986 = vmatprep.subr.mxu0 0.0
    %1987 = vmatpush2.msra.mxu0 0.0
    %1988 = vmatprep.subr.mxu0 0.0
    %1989 = vmatpush2.msra.mxu0 0.0
    %1990 = vmatprep.subr.mxu0 0.0
    %1991 = vmatpush2.msra.mxu0 0.0
    %1992 = vmatprep.subr.mxu0 0.0
    %1993 = vmatpush2.msra.mxu0 0.0
    %1994 = vmatprep.subr.mxu0 0.0
    %1995 = vmatpush2.msra.mxu0 0.0
    %1996 = vmatprep.subr.mxu0 0.0
    %1997 = vmatpush2.msra.mxu0 0.0
    %1998 = vmatprep.subr.mxu0 0.0
    %1999 = vmatpush2.msra.mxu0 0.0
    %2000 = vmatprep.subr.mxu0 0.0
    %2001 = vmatpush2.msra.mxu0 0.0
    %2002 = vmatprep.subr.mxu0 0.0
    %2003 = vmatpush2.msra.mxu0 0.0
    %2004 = vmatprep.subr.mxu0 0.0
    %2005 = vmatpush2.msra.mxu0 0.0
    %2006 = vmatprep.subr.mxu0 0.0
    %2007 = vmatpush2.msra.mxu0 0.0
    %2008 = vmatprep.subr.mxu0 0.0
    %2009 = vmatpush2.msra.mxu0 0.0
    %2010 = vmatprep.subr.mxu0 0.0
    %2011 = vmatpush2.msra.mxu0 0.0
    %2012 = vmatprep.subr.mxu0 0.0
    %2013 = vmatpush2.msra.mxu0 0.0
    %2014 = vmatprep.subr.mxu0 0.0
    %2015 = vmatpush2.msra.mxu0 0.0
    %2016 = vmatprep.subr.mxu0 0.0
    %2017 = vmatpush2.msra.mxu0 0.0
    %2018 = vmatprep.mubr.f32.mxu0 0.0
    %2019 = vmatmul.mubr.f32.gmra.mxu0 %v1634
    %v2020 = vpop.f32.mrf.mxu0
    %v2021 = vadd.f32 %v1879, %v2020
    %v2022 = vpop.f32.mrf.mxu0
    %v2023 = vadd.f32 %v1881, %v2022
    %2024 = vdwg.mxu0
    %2025 = vmatprep.subr.mxu0 %v769
    %2026 = vmatpush1.msra.mxu0 %v768
    %2027 = vmatprep.subr.mxu0 %v765
    %2028 = vmatpush1.msra.mxu0 %v764
    %2029 = vmatprep.subr.mxu0 %v761
    %2030 = vmatpush1.msra.mxu0 %v760
    %2031 = vmatprep.subr.mxu0 %v757
    %2032 = vmatpush1.msra.mxu0 %v756
    %2033 = vmatprep.subr.mxu0 %v753
    %2034 = vmatpush1.msra.mxu0 %v752
    %2035 = vmatprep.subr.mxu0 %v749
    %2036 = vmatpush1.msra.mxu0 %v748
    %2037 = vmatprep.subr.mxu0 %v745
    %2038 = vmatpush1.msra.mxu0 %v744
    %2039 = vmatprep.subr.mxu0 %v741
    %2040 = vmatpush1.msra.mxu0 %v740
    %2041 = vmatprep.subr.mxu0 %v737
    %2042 = vmatpush1.msra.mxu0 %v736
    %2043 = vmatprep.subr.mxu0 %v733
    %2044 = vmatpush1.msra.mxu0 %v732
    %2045 = vmatprep.subr.mxu0 %v729
    %2046 = vmatpush1.msra.mxu0 %v728
    %2047 = vmatprep.subr.mxu0 %v725
    %2048 = vmatpush1.msra.mxu0 %v724
    %2049 = vmatprep.subr.mxu0 %v721
    %2050 = vmatpush1.msra.mxu0 %v720
    %2051 = vmatprep.subr.mxu0 %v717
    %2052 = vmatpush1.msra.mxu0 %v716
    %2053 = vmatprep.subr.mxu0 %v713
    %2054 = vmatpush1.msra.mxu0 %v712
    %2055 = vmatprep.subr.mxu0 %v709
    %2056 = vmatpush1.msra.mxu0 %v708
    %2057 = vmatprep.subr.mxu0 0.0
    %2058 = vmatpush2.msra.mxu0 0.0
    %2059 = vmatprep.subr.mxu0 0.0
    %2060 = vmatpush2.msra.mxu0 0.0
    %2061 = vmatprep.subr.mxu0 0.0
    %2062 = vmatpush2.msra.mxu0 0.0
    %2063 = vmatprep.subr.mxu0 0.0
    %2064 = vmatpush2.msra.mxu0 0.0
    %2065 = vmatprep.subr.mxu0 0.0
    %2066 = vmatpush2.msra.mxu0 0.0
    %2067 = vmatprep.subr.mxu0 0.0
    %2068 = vmatpush2.msra.mxu0 0.0
    %2069 = vmatprep.subr.mxu0 0.0
    %2070 = vmatpush2.msra.mxu0 0.0
    %2071 = vmatprep.subr.mxu0 0.0
    %2072 = vmatpush2.msra.mxu0 0.0
    %2073 = vmatprep.subr.mxu0 0.0
    %2074 = vmatpush2.msra.mxu0 0.0
    %2075 = vmatprep.subr.mxu0 0.0
    %2076 = vmatpush2.msra.mxu0 0.0
    %2077 = vmatprep.subr.mxu0 0.0
    %2078 = vmatpush2.msra.mxu0 0.0
    %2079 = vmatprep.subr.mxu0 0.0
    %2080 = vmatpush2.msra.mxu0 0.0
    %2081 = vmatprep.subr.mxu0 0.0
    %2082 = vmatpush2.msra.mxu0 0.0
    %2083 = vmatprep.subr.mxu0 0.0
    %2084 = vmatpush2.msra.mxu0 0.0
    %2085 = vmatprep.subr.mxu0 0.0
    %2086 = vmatpush2.msra.mxu0 0.0
    %2087 = vmatprep.subr.mxu0 0.0
    %2088 = vmatpush2.msra.mxu0 0.0
    %2089 = vmatprep.mubr.f32.mxu0 0.0
    %2090 = vmatmul.mubr.f32.gmra.mxu0 %v1634
    %v2091 = vpop.f32.mrf.mxu0
    %v2092 = vadd.f32 %v1950, %v2091
    %v2093 = vpop.f32.mrf.mxu0
    %v2094 = vadd.f32 %v1952, %v2093
    %2095 = vdwg.mxu0
    %v2096 = vadd.f32 %v2021, %v448
    %v2097 = vadd.f32 %v2023, %v452
    %v2098 = vadd.f32 %v2092, %v456
    %v2099 = vadd.f32 %v2094, %v460
    %v2100 = vxor.u32 %v2096, 2147483648
    %v2101 = vxor.u32 %v2097, 2147483648
    %v2102 = vxor.u32 %v2098, 2147483648
    %v2103 = vmul.f32 %v2100, 1.442695
    %v2104 = vpow.pop %v2103
    %v2105 = vmul.f32 %v2101, 1.442695
    %v2106 = vpow.pop %v2105
    %v2107 = vmul.f32 %v2102, 1.442695
    %v2108 = vpow.pop %v2107
    %v2109 = vadd.f32 %v2104, 1.0
    %v2110 = vadd.f32 %v2106, 1.0
    %v2111 = vadd.f32 %v2108, 1.0
    %v2112 = vrcp.pop %v2109
    %v2113 = vmul.f32 1.0, %v2112
    %v2114 = vrcp.pop %v2110
    %v2115 = vmul.f32 1.0, %v2114
    %v2116 = vrcp.pop %v2111
    %v2117 = vmul.f32 1.0, %v2116
    %v2118 = vtanh.pop %v2099
    %v2119 = vmul.f32 %v2115, %v1632
    %v2120 = vmul.f32 %v2113, %v2118
    %v2121 = vadd.f32 %v2119, %v2120
    %v2122 = vtanh.pop %v2121
    %v2123 = vmul.f32 %v2117, %v2122
    %s2124 = smul.u32 3, 4
    %s2125 = smul.addr %s2124, 8
    %s2126 = scalar_lea.vmem [#allocation2], %s2125
    %v2127 = vld [vmem:[%s2126] sm:$0xff]
    %v2128 = vld [vmem:[%s2126 + $0x8] sm:$0xff]
    %v2129 = vld [vmem:[%s2126 + $0x10] sm:$0xff]
    %v2130 = vld [vmem:[%s2126 + $0x18] sm:$0xff]
    %2131 = vmatprep.subr.mxu0 %v533
    %2132 = vmatpush1.msra.mxu0 %v532
    %2133 = vmatprep.subr.mxu0 %v529
    %2134 = vmatpush1.msra.mxu0 %v528
    %2135 = vmatprep.subr.mxu0 %v525
    %2136 = vmatpush1.msra.mxu0 %v524
    %2137 = vmatprep.subr.mxu0 %v521
    %2138 = vmatpush1.msra.mxu0 %v520
    %2139 = vmatprep.subr.mxu0 %v517
    %2140 = vmatpush1.msra.mxu0 %v516
    %2141 = vmatprep.subr.mxu0 %v513
    %2142 = vmatpush1.msra.mxu0 %v512
    %2143 = vmatprep.subr.mxu0 %v509
    %2144 = vmatpush1.msra.mxu0 %v508
    %2145 = vmatprep.subr.mxu0 %v505
    %2146 = vmatpush1.msra.mxu0 %v504
    %2147 = vmatprep.subr.mxu0 %v501
    %2148 = vmatpush1.msra.mxu0 %v500
    %2149 = vmatprep.subr.mxu0 %v497
    %2150 = vmatpush1.msra.mxu0 %v496
    %2151 = vmatprep.subr.mxu0 %v493
    %2152 = vmatpush1.msra.mxu0 %v492
    %2153 = vmatprep.subr.mxu0 %v489
    %2154 = vmatpush1.msra.mxu0 %v488
    %2155 = vmatprep.subr.mxu0 %v485
    %2156 = vmatpush1.msra.mxu0 %v484
    %2157 = vmatprep.subr.mxu0 %v481
    %2158 = vmatpush1.msra.mxu0 %v480
    %2159 = vmatprep.subr.mxu0 %v477
    %2160 = vmatpush1.msra.mxu0 %v476
    %2161 = vmatprep.subr.mxu0 %v473
    %2162 = vmatpush1.msra.mxu0 %v472
    %2163 = vmatprep.subr.mxu0 0.0
    %2164 = vmatpush2.msra.mxu0 0.0
    %2165 = vmatprep.subr.mxu0 0.0
    %2166 = vmatpush2.msra.mxu0 0.0
    %2167 = vmatprep.subr.mxu0 0.0
    %2168 = vmatpush2.msra.mxu0 0.0
    %2169 = vmatprep.subr.mxu0 0.0
    %2170 = vmatpush2.msra.mxu0 0.0
    %2171 = vmatprep.subr.mxu0 0.0
    %2172 = vmatpush2.msra.mxu0 0.0
    %2173 = vmatprep.subr.mxu0 0.0
    %2174 = vmatpush2.msra.mxu0 0.0
    %2175 = vmatprep.subr.mxu0 0.0
    %2176 = vmatpush2.msra.mxu0 0.0
    %2177 = vmatprep.subr.mxu0 0.0
    %2178 = vmatpush2.msra.mxu0 0.0
    %2179 = vmatprep.subr.mxu0 0.0
    %2180 = vmatpush2.msra.mxu0 0.0
    %2181 = vmatprep.subr.mxu0 0.0
    %2182 = vmatpush2.msra.mxu0 0.0
    %2183 = vmatprep.subr.mxu0 0.0
    %2184 = vmatpush2.msra.mxu0 0.0
    %2185 = vmatprep.subr.mxu0 0.0
    %2186 = vmatpush2.msra.mxu0 0.0
    %2187 = vmatprep.subr.mxu0 0.0
    %2188 = vmatpush2.msra.mxu0 0.0
    %2189 = vmatprep.subr.mxu0 0.0
    %2190 = vmatpush2.msra.mxu0 0.0
    %2191 = vmatprep.subr.mxu0 0.0
    %2192 = vmatpush2.msra.mxu0 0.0
    %2193 = vmatprep.subr.mxu0 0.0
    %2194 = vmatpush2.msra.mxu0 0.0
    %2195 = vmatprep.mubr.f32.mxu0 0.0
    %2196 = vmatmul.mubr.f32.gmra.mxu0 %v1811
    %v2197 = vpop.f32.mrf.mxu0
    %v2198 = vadd.f32 0.0, %v2197
    %v2199 = vpop.f32.mrf.mxu0
    %v2200 = vadd.f32 0.0, %v2199
    %2201 = vdwg.mxu0
    %2202 = vmatprep.subr.mxu0 %v535
    %2203 = vmatpush1.msra.mxu0 %v534
    %2204 = vmatprep.subr.mxu0 %v531
    %2205 = vmatpush1.msra.mxu0 %v530
    %2206 = vmatprep.subr.mxu0 %v527
    %2207 = vmatpush1.msra.mxu0 %v526
    %2208 = vmatprep.subr.mxu0 %v523
    %2209 = vmatpush1.msra.mxu0 %v522
    %2210 = vmatprep.subr.mxu0 %v519
    %2211 = vmatpush1.msra.mxu0 %v518
    %2212 = vmatprep.subr.mxu0 %v515
    %2213 = vmatpush1.msra.mxu0 %v514
    %2214 = vmatprep.subr.mxu0 %v511
    %2215 = vmatpush1.msra.mxu0 %v510
    %2216 = vmatprep.subr.mxu0 %v507
    %2217 = vmatpush1.msra.mxu0 %v506
    %2218 = vmatprep.subr.mxu0 %v503
    %2219 = vmatpush1.msra.mxu0 %v502
    %2220 = vmatprep.subr.mxu0 %v499
    %2221 = vmatpush1.msra.mxu0 %v498
    %2222 = vmatprep.subr.mxu0 %v495
    %2223 = vmatpush1.msra.mxu0 %v494
    %2224 = vmatprep.subr.mxu0 %v491
    %2225 = vmatpush1.msra.mxu0 %v490
    %2226 = vmatprep.subr.mxu0 %v487
    %2227 = vmatpush1.msra.mxu0 %v486
    %2228 = vmatprep.subr.mxu0 %v483
    %2229 = vmatpush1.msra.mxu0 %v482
    %2230 = vmatprep.subr.mxu0 %v479
    %2231 = vmatpush1.msra.mxu0 %v478
    %2232 = vmatprep.subr.mxu0 %v475
    %2233 = vmatpush1.msra.mxu0 %v474
    %2234 = vmatprep.subr.mxu0 0.0
    %2235 = vmatpush2.msra.mxu0 0.0
    %2236 = vmatprep.subr.mxu0 0.0
    %2237 = vmatpush2.msra.mxu0 0.0
    %2238 = vmatprep.subr.mxu0 0.0
    %2239 = vmatpush2.msra.mxu0 0.0
    %2240 = vmatprep.subr.mxu0 0.0
    %2241 = vmatpush2.msra.mxu0 0.0
    %2242 = vmatprep.subr.mxu0 0.0
    %2243 = vmatpush2.msra.mxu0 0.0
    %2244 = vmatprep.subr.mxu0 0.0
    %2245 = vmatpush2.msra.mxu0 0.0
    %2246 = vmatprep.subr.mxu0 0.0
    %2247 = vmatpush2.msra.mxu0 0.0
    %2248 = vmatprep.subr.mxu0 0.0
    %2249 = vmatpush2.msra.mxu0 0.0
    %2250 = vmatprep.subr.mxu0 0.0
    %2251 = vmatpush2.msra.mxu0 0.0
    %2252 = vmatprep.subr.mxu0 0.0
    %2253 = vmatpush2.msra.mxu0 0.0
    %2254 = vmatprep.subr.mxu0 0.0
    %2255 = vmatpush2.msra.mxu0 0.0
    %2256 = vmatprep.subr.mxu0 0.0
    %2257 = vmatpush2.msra.mxu0 0.0
    %2258 = vmatprep.subr.mxu0 0.0
    %2259 = vmatpush2.msra.mxu0 0.0
    %2260 = vmatprep.subr.mxu0 0.0
    %2261 = vmatpush2.msra.mxu0 0.0
    %2262 = vmatprep.subr.mxu0 0.0
    %2263 = vmatpush2.msra.mxu0 0.0
    %2264 = vmatprep.subr.mxu0 0.0
    %2265 = vmatpush2.msra.mxu0 0.0
    %2266 = vmatprep.mubr.f32.mxu0 0.0
    %2267 = vmatmul.mubr.f32.gmra.mxu0 %v1811
    %v2268 = vpop.f32.mrf.mxu0
    %v2269 = vadd.f32 0.0, %v2268
    %v2270 = vpop.f32.mrf.mxu0
    %v2271 = vadd.f32 0.0, %v2270
    %2272 = vdwg.mxu0
    %v2273 = vadd.f32 %v2127, %v2198
    %v2274 = vadd.f32 %v2128, %v2200
    %v2275 = vadd.f32 %v2129, %v2269
    %v2276 = vadd.f32 %v2130, %v2271
    %v2277 = vxor.u32 %v2273, 2147483648
    %v2278 = vxor.u32 %v2274, 2147483648
    %v2279 = vxor.u32 %v2275, 2147483648
    %v2280 = vmul.f32 %v2277, 1.442695
    %v2281 = vpow.pop %v2280
    %v2282 = vmul.f32 %v2278, 1.442695
    %v2283 = vpow.pop %v2282
    %v2284 = vmul.f32 %v2279, 1.442695
    %v2285 = vpow.pop %v2284
    %v2286 = vadd.f32 %v2281, 1.0
    %v2287 = vadd.f32 %v2283, 1.0
    %v2288 = vadd.f32 %v2285, 1.0
    %v2289 = vrcp.pop %v2286
    %v2290 = vmul.f32 1.0, %v2289
    %v2291 = vrcp.pop %v2287
    %v2292 = vmul.f32 1.0, %v2291
    %v2293 = vrcp.pop %v2288
    %v2294 = vmul.f32 1.0, %v2293
    %v2295 = vtanh.pop %v2276
    %v2296 = vmul.f32 %v2292, %v1809
    %v2297 = vmul.f32 %v2290, %v2295
    %v2298 = vadd.f32 %v2296, %v2297
    %v2299 = vtanh.pop %v2298
    %v2300 = vmul.f32 %v2294, %v2299
    %2301 = vmatprep.subr.mxu0 %v831
    %2302 = vmatpush1.msra.mxu0 %v830
    %2303 = vmatprep.subr.mxu0 %v827
    %2304 = vmatpush1.msra.mxu0 %v826
    %2305 = vmatprep.subr.mxu0 %v823
    %2306 = vmatpush1.msra.mxu0 %v822
    %2307 = vmatprep.subr.mxu0 %v819
    %2308 = vmatpush1.msra.mxu0 %v818
    %2309 = vmatprep.subr.mxu0 %v815
    %2310 = vmatpush1.msra.mxu0 %v814
    %2311 = vmatprep.subr.mxu0 %v811
    %2312 = vmatpush1.msra.mxu0 %v810
    %2313 = vmatprep.subr.mxu0 %v807
    %2314 = vmatpush1.msra.mxu0 %v806
    %2315 = vmatprep.subr.mxu0 %v803
    %2316 = vmatpush1.msra.mxu0 %v802
    %2317 = vmatprep.subr.mxu0 %v799
    %2318 = vmatpush1.msra.mxu0 %v798
    %2319 = vmatprep.subr.mxu0 %v795
    %2320 = vmatpush1.msra.mxu0 %v794
    %2321 = vmatprep.subr.mxu0 %v791
    %2322 = vmatpush1.msra.mxu0 %v790
    %2323 = vmatprep.subr.mxu0 %v787
    %2324 = vmatpush1.msra.mxu0 %v786
    %2325 = vmatprep.subr.mxu0 %v783
    %2326 = vmatpush1.msra.mxu0 %v782
    %2327 = vmatprep.subr.mxu0 %v779
    %2328 = vmatpush1.msra.mxu0 %v778
    %2329 = vmatprep.subr.mxu0 %v775
    %2330 = vmatpush1.msra.mxu0 %v774
    %2331 = vmatprep.subr.mxu0 %v771
    %2332 = vmatpush1.msra.mxu0 %v770
    %2333 = vmatprep.subr.mxu0 0.0
    %2334 = vmatpush2.msra.mxu0 0.0
    %2335 = vmatprep.subr.mxu0 0.0
    %2336 = vmatpush2.msra.mxu0 0.0
    %2337 = vmatprep.subr.mxu0 0.0
    %2338 = vmatpush2.msra.mxu0 0.0
    %2339 = vmatprep.subr.mxu0 0.0
    %2340 = vmatpush2.msra.mxu0 0.0
    %2341 = vmatprep.subr.mxu0 0.0
    %2342 = vmatpush2.msra.mxu0 0.0
    %2343 = vmatprep.subr.mxu0 0.0
    %2344 = vmatpush2.msra.mxu0 0.0
    %2345 = vmatprep.subr.mxu0 0.0
    %2346 = vmatpush2.msra.mxu0 0.0
    %2347 = vmatprep.subr.mxu0 0.0
    %2348 = vmatpush2.msra.mxu0 0.0
    %2349 = vmatprep.subr.mxu0 0.0
    %2350 = vmatpush2.msra.mxu0 0.0
    %2351 = vmatprep.subr.mxu0 0.0
    %2352 = vmatpush2.msra.mxu0 0.0
    %2353 = vmatprep.subr.mxu0 0.0
    %2354 = vmatpush2.msra.mxu0 0.0
    %2355 = vmatprep.subr.mxu0 0.0
    %2356 = vmatpush2.msra.mxu0 0.0
    %2357 = vmatprep.subr.mxu0 0.0
    %2358 = vmatpush2.msra.mxu0 0.0
    %2359 = vmatprep.subr.mxu0 0.0
    %2360 = vmatpush2.msra.mxu0 0.0
    %2361 = vmatprep.subr.mxu0 0.0
    %2362 = vmatpush2.msra.mxu0 0.0
    %2363 = vmatprep.subr.mxu0 0.0
    %2364 = vmatpush2.msra.mxu0 0.0
    %2365 = vmatprep.mubr.f32.mxu0 0.0
    %2366 = vmatmul.mubr.f32.gmra.mxu0 %v2300
    %v2367 = vpop.f32.mrf.mxu0
    %v2368 = vadd.f32 0.0, %v2367
    %v2369 = vpop.f32.mrf.mxu0
    %v2370 = vadd.f32 0.0, %v2369
    %2371 = vdwg.mxu0
    %2372 = vmatprep.subr.mxu0 %v833
    %2373 = vmatpush1.msra.mxu0 %v832
    %2374 = vmatprep.subr.mxu0 %v829
    %2375 = vmatpush1.msra.mxu0 %v828
    %2376 = vmatprep.subr.mxu0 %v825
    %2377 = vmatpush1.msra.mxu0 %v824
    %2378 = vmatprep.subr.mxu0 %v821
    %2379 = vmatpush1.msra.mxu0 %v820
    %2380 = vmatprep.subr.mxu0 %v817
    %2381 = vmatpush1.msra.mxu0 %v816
    %2382 = vmatprep.subr.mxu0 %v813
    %2383 = vmatpush1.msra.mxu0 %v812
    %2384 = vmatprep.subr.mxu0 %v809
    %2385 = vmatpush1.msra.mxu0 %v808
    %2386 = vmatprep.subr.mxu0 %v805
    %2387 = vmatpush1.msra.mxu0 %v804
    %2388 = vmatprep.subr.mxu0 %v801
    %2389 = vmatpush1.msra.mxu0 %v800
    %2390 = vmatprep.subr.mxu0 %v797
    %2391 = vmatpush1.msra.mxu0 %v796
    %2392 = vmatprep.subr.mxu0 %v793
    %2393 = vmatpush1.msra.mxu0 %v792
    %2394 = vmatprep.subr.mxu0 %v789
    %2395 = vmatpush1.msra.mxu0 %v788
    %2396 = vmatprep.subr.mxu0 %v785
    %2397 = vmatpush1.msra.mxu0 %v784
    %2398 = vmatprep.subr.mxu0 %v781
    %2399 = vmatpush1.msra.mxu0 %v780
    %2400 = vmatprep.subr.mxu0 %v777
    %2401 = vmatpush1.msra.mxu0 %v776
    %2402 = vmatprep.subr.mxu0 %v773
    %2403 = vmatpush1.msra.mxu0 %v772
    %2404 = vmatprep.subr.mxu0 0.0
    %2405 = vmatpush2.msra.mxu0 0.0
    %2406 = vmatprep.subr.mxu0 0.0
    %2407 = vmatpush2.msra.mxu0 0.0
    %2408 = vmatprep.subr.mxu0 0.0
    %2409 = vmatpush2.msra.mxu0 0.0
    %2410 = vmatprep.subr.mxu0 0.0
    %2411 = vmatpush2.msra.mxu0 0.0
    %2412 = vmatprep.subr.mxu0 0.0
    %2413 = vmatpush2.msra.mxu0 0.0
    %2414 = vmatprep.subr.mxu0 0.0
    %2415 = vmatpush2.msra.mxu0 0.0
    %2416 = vmatprep.subr.mxu0 0.0
    %2417 = vmatpush2.msra.mxu0 0.0
    %2418 = vmatprep.subr.mxu0 0.0
    %2419 = vmatpush2.msra.mxu0 0.0
    %2420 = vmatprep.subr.mxu0 0.0
    %2421 = vmatpush2.msra.mxu0 0.0
    %2422 = vmatprep.subr.mxu0 0.0
    %2423 = vmatpush2.msra.mxu0 0.0
    %2424 = vmatprep.subr.mxu0 0.0
    %2425 = vmatpush2.msra.mxu0 0.0
    %2426 = vmatprep.subr.mxu0 0.0
    %2427 = vmatpush2.msra.mxu0 0.0
    %2428 = vmatprep.subr.mxu0 0.0
    %2429 = vmatpush2.msra.mxu0 0.0
    %2430 = vmatprep.subr.mxu0 0.0
    %2431 = vmatpush2.msra.mxu0 0.0
    %2432 = vmatprep.subr.mxu0 0.0
    %2433 = vmatpush2.msra.mxu0 0.0
    %2434 = vmatprep.subr.mxu0 0.0
    %2435 = vmatpush2.msra.mxu0 0.0
    %2436 = vmatprep.mubr.f32.mxu0 0.0
    %2437 = vmatmul.mubr.f32.gmra.mxu0 %v2300
    %v2438 = vpop.f32.mrf.mxu0
    %v2439 = vadd.f32 0.0, %v2438
    %v2440 = vpop.f32.mrf.mxu0
    %v2441 = vadd.f32 0.0, %v2440
    %2442 = vdwg.mxu0
    %2443 = vmatprep.subr.mxu0 %v767
    %2444 = vmatpush1.msra.mxu0 %v766
    %2445 = vmatprep.subr.mxu0 %v763
    %2446 = vmatpush1.msra.mxu0 %v762
    %2447 = vmatprep.subr.mxu0 %v759
    %2448 = vmatpush1.msra.mxu0 %v758
    %2449 = vmatprep.subr.mxu0 %v755
    %2450 = vmatpush1.msra.mxu0 %v754
    %2451 = vmatprep.subr.mxu0 %v751
    %2452 = vmatpush1.msra.mxu0 %v750
    %2453 = vmatprep.subr.mxu0 %v747
    %2454 = vmatpush1.msra.mxu0 %v746
    %2455 = vmatprep.subr.mxu0 %v743
    %2456 = vmatpush1.msra.mxu0 %v742
    %2457 = vmatprep.subr.mxu0 %v739
    %2458 = vmatpush1.msra.mxu0 %v738
    %2459 = vmatprep.subr.mxu0 %v735
    %2460 = vmatpush1.msra.mxu0 %v734
    %2461 = vmatprep.subr.mxu0 %v731
    %2462 = vmatpush1.msra.mxu0 %v730
    %2463 = vmatprep.subr.mxu0 %v727
    %2464 = vmatpush1.msra.mxu0 %v726
    %2465 = vmatprep.subr.mxu0 %v723
    %2466 = vmatpush1.msra.mxu0 %v722
    %2467 = vmatprep.subr.mxu0 %v719
    %2468 = vmatpush1.msra.mxu0 %v718
    %2469 = vmatprep.subr.mxu0 %v715
    %2470 = vmatpush1.msra.mxu0 %v714
    %2471 = vmatprep.subr.mxu0 %v711
    %2472 = vmatpush1.msra.mxu0 %v710
    %2473 = vmatprep.subr.mxu0 %v707
    %2474 = vmatpush1.msra.mxu0 %v706
    %2475 = vmatprep.subr.mxu0 0.0
    %2476 = vmatpush2.msra.mxu0 0.0
    %2477 = vmatprep.subr.mxu0 0.0
    %2478 = vmatpush2.msra.mxu0 0.0
    %2479 = vmatprep.subr.mxu0 0.0
    %2480 = vmatpush2.msra.mxu0 0.0
    %2481 = vmatprep.subr.mxu0 0.0
    %2482 = vmatpush2.msra.mxu0 0.0
    %2483 = vmatprep.subr.mxu0 0.0
    %2484 = vmatpush2.msra.mxu0 0.0
    %2485 = vmatprep.subr.mxu0 0.0
    %2486 = vmatpush2.msra.mxu0 0.0
    %2487 = vmatprep.subr.mxu0 0.0
    %2488 = vmatpush2.msra.mxu0 0.0
    %2489 = vmatprep.subr.mxu0 0.0
    %2490 = vmatpush2.msra.mxu0 0.0
    %2491 = vmatprep.subr.mxu0 0.0
    %2492 = vmatpush2.msra.mxu0 0.0
    %2493 = vmatprep.subr.mxu0 0.0
    %2494 = vmatpush2.msra.mxu0 0.0
    %2495 = vmatprep.subr.mxu0 0.0
    %2496 = vmatpush2.msra.mxu0 0.0
    %2497 = vmatprep.subr.mxu0 0.0
    %2498 = vmatpush2.msra.mxu0 0.0
    %2499 = vmatprep.subr.mxu0 0.0
    %2500 = vmatpush2.msra.mxu0 0.0
    %2501 = vmatprep.subr.mxu0 0.0
    %2502 = vmatpush2.msra.mxu0 0.0
    %2503 = vmatprep.subr.mxu0 0.0
    %2504 = vmatpush2.msra.mxu0 0.0
    %2505 = vmatprep.subr.mxu0 0.0
    %2506 = vmatpush2.msra.mxu0 0.0
    %2507 = vmatprep.mubr.f32.mxu0 0.0
    %2508 = vmatmul.mubr.f32.gmra.mxu0 %v2123
    %v2509 = vpop.f32.mrf.mxu0
    %v2510 = vadd.f32 %v2368, %v2509
    %v2511 = vpop.f32.mrf.mxu0
    %v2512 = vadd.f32 %v2370, %v2511
    %2513 = vdwg.mxu0
    %2514 = vmatprep.subr.mxu0 %v769
    %2515 = vmatpush1.msra.mxu0 %v768
    %2516 = vmatprep.subr.mxu0 %v765
    %2517 = vmatpush1.msra.mxu0 %v764
    %2518 = vmatprep.subr.mxu0 %v761
    %2519 = vmatpush1.msra.mxu0 %v760
    %2520 = vmatprep.subr.mxu0 %v757
    %2521 = vmatpush1.msra.mxu0 %v756
    %2522 = vmatprep.subr.mxu0 %v753
    %2523 = vmatpush1.msra.mxu0 %v752
    %2524 = vmatprep.subr.mxu0 %v749
    %2525 = vmatpush1.msra.mxu0 %v748
    %2526 = vmatprep.subr.mxu0 %v745
    %2527 = vmatpush1.msra.mxu0 %v744
    %2528 = vmatprep.subr.mxu0 %v741
    %2529 = vmatpush1.msra.mxu0 %v740
    %2530 = vmatprep.subr.mxu0 %v737
    %2531 = vmatpush1.msra.mxu0 %v736
    %2532 = vmatprep.subr.mxu0 %v733
    %2533 = vmatpush1.msra.mxu0 %v732
    %2534 = vmatprep.subr.mxu0 %v729
    %2535 = vmatpush1.msra.mxu0 %v728
    %2536 = vmatprep.subr.mxu0 %v725
    %2537 = vmatpush1.msra.mxu0 %v724
    %2538 = vmatprep.subr.mxu0 %v721
    %2539 = vmatpush1.msra.mxu0 %v720
    %2540 = vmatprep.subr.mxu0 %v717
    %2541 = vmatpush1.msra.mxu0 %v716
    %2542 = vmatprep.subr.mxu0 %v713
    %2543 = vmatpush1.msra.mxu0 %v712
    %2544 = vmatprep.subr.mxu0 %v709
    %2545 = vmatpush1.msra.mxu0 %v708
    %2546 = vmatprep.subr.mxu0 0.0
    %2547 = vmatpush2.msra.mxu0 0.0
    %2548 = vmatprep.subr.mxu0 0.0
    %2549 = vmatpush2.msra.mxu0 0.0
    %2550 = vmatprep.subr.mxu0 0.0
    %2551 = vmatpush2.msra.mxu0 0.0
    %2552 = vmatprep.subr.mxu0 0.0
    %2553 = vmatpush2.msra.mxu0 0.0
    %2554 = vmatprep.subr.mxu0 0.0
    %2555 = vmatpush2.msra.mxu0 0.0
    %2556 = vmatprep.subr.mxu0 0.0
    %2557 = vmatpush2.msra.mxu0 0.0
    %2558 = vmatprep.subr.mxu0 0.0
    %2559 = vmatpush2.msra.mxu0 0.0
    %2560 = vmatprep.subr.mxu0 0.0
    %2561 = vmatpush2.msra.mxu0 0.0
    %2562 = vmatprep.subr.mxu0 0.0
    %2563 = vmatpush2.msra.mxu0 0.0
    %2564 = vmatprep.subr.mxu0 0.0
    %2565 = vmatpush2.msra.mxu0 0.0
    %2566 = vmatprep.subr.mxu0 0.0
    %2567 = vmatpush2.msra.mxu0 0.0
    %2568 = vmatprep.subr.mxu0 0.0
    %2569 = vmatpush2.msra.mxu0 0.0
    %2570 = vmatprep.subr.mxu0 0.0
    %2571 = vmatpush2.msra.mxu0 0.0
    %2572 = vmatprep.subr.mxu0 0.0
    %2573 = vmatpush2.msra.mxu0 0.0
    %2574 = vmatprep.subr.mxu0 0.0
    %2575 = vmatpush2.msra.mxu0 0.0
    %2576 = vmatprep.subr.mxu0 0.0
    %2577 = vmatpush2.msra.mxu0 0.0
    %2578 = vmatprep.mubr.f32.mxu0 0.0
    %2579 = vmatmul.mubr.f32.gmra.mxu0 %v2123
    %v2580 = vpop.f32.mrf.mxu0
    %v2581 = vadd.f32 %v2439, %v2580
    %v2582 = vpop.f32.mrf.mxu0
    %v2583 = vadd.f32 %v2441, %v2582
    %2584 = vdwg.mxu0
    %v2585 = vadd.f32 %v2510, %v448
    %v2586 = vadd.f32 %v2512, %v452
    %v2587 = vadd.f32 %v2581, %v456
    %v2588 = vadd.f32 %v2583, %v460
    %v2589 = vxor.u32 %v2585, 2147483648
    %v2590 = vxor.u32 %v2586, 2147483648
    %v2591 = vxor.u32 %v2587, 2147483648
    %v2592 = vmul.f32 %v2589, 1.442695
    %v2593 = vpow.pop %v2592
    %v2594 = vmul.f32 %v2590, 1.442695
    %v2595 = vpow.pop %v2594
    %v2596 = vmul.f32 %v2591, 1.442695
    %v2597 = vpow.pop %v2596
    %v2598 = vadd.f32 %v2593, 1.0
    %v2599 = vadd.f32 %v2595, 1.0
    %v2600 = vadd.f32 %v2597, 1.0
    %v2601 = vrcp.pop %v2598
    %v2602 = vmul.f32 1.0, %v2601
    %v2603 = vrcp.pop %v2599
    %v2604 = vmul.f32 1.0, %v2603
    %v2605 = vrcp.pop %v2600
    %v2606 = vmul.f32 1.0, %v2605
    %v2607 = vtanh.pop %v2588
    %v2608 = vmul.f32 %v2604, %v2121
    %v2609 = vmul.f32 %v2602, %v2607
    %v2610 = vadd.f32 %v2608, %v2609
    %v2611 = vtanh.pop %v2610
    %v2612 = vmul.f32 %v2606, %v2611
    %s2613 = smul.u32 4, 4
    %s2614 = smul.addr %s2613, 8
    %s2615 = scalar_lea.vmem [#allocation2], %s2614
    %v2616 = vld [vmem:[%s2615] sm:$0xff]
    %v2617 = vld [vmem:[%s2615 + $0x8] sm:$0xff]
    %v2618 = vld [vmem:[%s2615 + $0x10] sm:$0xff]
    %v2619 = vld [vmem:[%s2615 + $0x18] sm:$0xff]
    %2620 = vmatprep.subr.mxu0 %v533
    %2621 = vmatpush1.msra.mxu0 %v532
    %2622 = vmatprep.subr.mxu0 %v529
    %2623 = vmatpush1.msra.mxu0 %v528
    %2624 = vmatprep.subr.mxu0 %v525
    %2625 = vmatpush1.msra.mxu0 %v524
    %2626 = vmatprep.subr.mxu0 %v521
    %2627 = vmatpush1.msra.mxu0 %v520
    %2628 = vmatprep.subr.mxu0 %v517
    %2629 = vmatpush1.msra.mxu0 %v516
    %2630 = vmatprep.subr.mxu0 %v513
    %2631 = vmatpush1.msra.mxu0 %v512
    %2632 = vmatprep.subr.mxu0 %v509
    %2633 = vmatpush1.msra.mxu0 %v508
    %2634 = vmatprep.subr.mxu0 %v505
    %2635 = vmatpush1.msra.mxu0 %v504
    %2636 = vmatprep.subr.mxu0 %v501
    %2637 = vmatpush1.msra.mxu0 %v500
    %2638 = vmatprep.subr.mxu0 %v497
    %2639 = vmatpush1.msra.mxu0 %v496
    %2640 = vmatprep.subr.mxu0 %v493
    %2641 = vmatpush1.msra.mxu0 %v492
    %2642 = vmatprep.subr.mxu0 %v489
    %2643 = vmatpush1.msra.mxu0 %v488
    %2644 = vmatprep.subr.mxu0 %v485
    %2645 = vmatpush1.msra.mxu0 %v484
    %2646 = vmatprep.subr.mxu0 %v481
    %2647 = vmatpush1.msra.mxu0 %v480
    %2648 = vmatprep.subr.mxu0 %v477
    %2649 = vmatpush1.msra.mxu0 %v476
    %2650 = vmatprep.subr.mxu0 %v473
    %2651 = vmatpush1.msra.mxu0 %v472
    %2652 = vmatprep.subr.mxu0 0.0
    %2653 = vmatpush2.msra.mxu0 0.0
    %2654 = vmatprep.subr.mxu0 0.0
    %2655 = vmatpush2.msra.mxu0 0.0
    %2656 = vmatprep.subr.mxu0 0.0
    %2657 = vmatpush2.msra.mxu0 0.0
    %2658 = vmatprep.subr.mxu0 0.0
    %2659 = vmatpush2.msra.mxu0 0.0
    %2660 = vmatprep.subr.mxu0 0.0
    %2661 = vmatpush2.msra.mxu0 0.0
    %2662 = vmatprep.subr.mxu0 0.0
    %2663 = vmatpush2.msra.mxu0 0.0
    %2664 = vmatprep.subr.mxu0 0.0
    %2665 = vmatpush2.msra.mxu0 0.0
    %2666 = vmatprep.subr.mxu0 0.0
    %2667 = vmatpush2.msra.mxu0 0.0
    %2668 = vmatprep.subr.mxu0 0.0
    %2669 = vmatpush2.msra.mxu0 0.0
    %2670 = vmatprep.subr.mxu0 0.0
    %2671 = vmatpush2.msra.mxu0 0.0
    %2672 = vmatprep.subr.mxu0 0.0
    %2673 = vmatpush2.msra.mxu0 0.0
    %2674 = vmatprep.subr.mxu0 0.0
    %2675 = vmatpush2.msra.mxu0 0.0
    %2676 = vmatprep.subr.mxu0 0.0
    %2677 = vmatpush2.msra.mxu0 0.0
    %2678 = vmatprep.subr.mxu0 0.0
    %2679 = vmatpush2.msra.mxu0 0.0
    %2680 = vmatprep.subr.mxu0 0.0
    %2681 = vmatpush2.msra.mxu0 0.0
    %2682 = vmatprep.subr.mxu0 0.0
    %2683 = vmatpush2.msra.mxu0 0.0
    %2684 = vmatprep.mubr.f32.mxu0 0.0
    %2685 = vmatmul.mubr.f32.gmra.mxu0 %v2300
    %v2686 = vpop.f32.mrf.mxu0
    %v2687 = vadd.f32 0.0, %v2686
    %v2688 = vpop.f32.mrf.mxu0
    %v2689 = vadd.f32 0.0, %v2688
    %2690 = vdwg.mxu0
    %2691 = vmatprep.subr.mxu0 %v535
    %2692 = vmatpush1.msra.mxu0 %v534
    %2693 = vmatprep.subr.mxu0 %v531
    %2694 = vmatpush1.msra.mxu0 %v530
    %2695 = vmatprep.subr.mxu0 %v527
    %2696 = vmatpush1.msra.mxu0 %v526
    %2697 = vmatprep.subr.mxu0 %v523
    %2698 = vmatpush1.msra.mxu0 %v522
    %2699 = vmatprep.subr.mxu0 %v519
    %2700 = vmatpush1.msra.mxu0 %v518
    %2701 = vmatprep.subr.mxu0 %v515
    %2702 = vmatpush1.msra.mxu0 %v514
    %2703 = vmatprep.subr.mxu0 %v511
    %2704 = vmatpush1.msra.mxu0 %v510
    %2705 = vmatprep.subr.mxu0 %v507
    %2706 = vmatpush1.msra.mxu0 %v506
    %2707 = vmatprep.subr.mxu0 %v503
    %2708 = vmatpush1.msra.mxu0 %v502
    %2709 = vmatprep.subr.mxu0 %v499
    %2710 = vmatpush1.msra.mxu0 %v498
    %2711 = vmatprep.subr.mxu0 %v495
    %2712 = vmatpush1.msra.mxu0 %v494
    %2713 = vmatprep.subr.mxu0 %v491
    %2714 = vmatpush1.msra.mxu0 %v490
    %2715 = vmatprep.subr.mxu0 %v487
    %2716 = vmatpush1.msra.mxu0 %v486
    %2717 = vmatprep.subr.mxu0 %v483
    %2718 = vmatpush1.msra.mxu0 %v482
    %2719 = vmatprep.subr.mxu0 %v479
    %2720 = vmatpush1.msra.mxu0 %v478
    %2721 = vmatprep.subr.mxu0 %v475
    %2722 = vmatpush1.msra.mxu0 %v474
    %2723 = vmatprep.subr.mxu0 0.0
    %2724 = vmatpush2.msra.mxu0 0.0
    %2725 = vmatprep.subr.mxu0 0.0
    %2726 = vmatpush2.msra.mxu0 0.0
    %2727 = vmatprep.subr.mxu0 0.0
    %2728 = vmatpush2.msra.mxu0 0.0
    %2729 = vmatprep.subr.mxu0 0.0
    %2730 = vmatpush2.msra.mxu0 0.0
    %2731 = vmatprep.subr.mxu0 0.0
    %2732 = vmatpush2.msra.mxu0 0.0
    %2733 = vmatprep.subr.mxu0 0.0
    %2734 = vmatpush2.msra.mxu0 0.0
    %2735 = vmatprep.subr.mxu0 0.0
    %2736 = vmatpush2.msra.mxu0 0.0
    %2737 = vmatprep.subr.mxu0 0.0
    %2738 = vmatpush2.msra.mxu0 0.0
    %2739 = vmatprep.subr.mxu0 0.0
    %2740 = vmatpush2.msra.mxu0 0.0
    %2741 = vmatprep.subr.mxu0 0.0
    %2742 = vmatpush2.msra.mxu0 0.0
    %2743 = vmatprep.subr.mxu0 0.0
    %2744 = vmatpush2.msra.mxu0 0.0
    %2745 = vmatprep.subr.mxu0 0.0
    %2746 = vmatpush2.msra.mxu0 0.0
    %2747 = vmatprep.subr.mxu0 0.0
    %2748 = vmatpush2.msra.mxu0 0.0
    %2749 = vmatprep.subr.mxu0 0.0
    %2750 = vmatpush2.msra.mxu0 0.0
    %2751 = vmatprep.subr.mxu0 0.0
    %2752 = vmatpush2.msra.mxu0 0.0
    %2753 = vmatprep.subr.mxu0 0.0
    %2754 = vmatpush2.msra.mxu0 0.0
    %2755 = vmatprep.mubr.f32.mxu0 0.0
    %2756 = vmatmul.mubr.f32.gmra.mxu0 %v2300
    %v2757 = vpop.f32.mrf.mxu0
    %v2758 = vadd.f32 0.0, %v2757
    %v2759 = vpop.f32.mrf.mxu0
    %v2760 = vadd.f32 0.0, %v2759
    %2761 = vdwg.mxu0
    %v2762 = vadd.f32 %v2616, %v2687
    %v2763 = vadd.f32 %v2617, %v2689
    %v2764 = vadd.f32 %v2618, %v2758
    %v2765 = vadd.f32 %v2619, %v2760
    %v2766 = vxor.u32 %v2762, 2147483648
    %v2767 = vxor.u32 %v2763, 2147483648
    %v2768 = vxor.u32 %v2764, 2147483648
    %v2769 = vmul.f32 %v2766, 1.442695
    %v2770 = vpow.pop %v2769
    %v2771 = vmul.f32 %v2767, 1.442695
    %v2772 = vpow.pop %v2771
    %v2773 = vmul.f32 %v2768, 1.442695
    %v2774 = vpow.pop %v2773
    %v2775 = vadd.f32 %v2770, 1.0
    %v2776 = vadd.f32 %v2772, 1.0
    %v2777 = vadd.f32 %v2774, 1.0
    %v2778 = vrcp.pop %v2775
    %v2779 = vmul.f32 1.0, %v2778
    %v2780 = vrcp.pop %v2776
    %v2781 = vmul.f32 1.0, %v2780
    %v2782 = vrcp.pop %v2777
    %v2783 = vmul.f32 1.0, %v2782
    %v2784 = vtanh.pop %v2765
    %v2785 = vmul.f32 %v2781, %v2298
    %v2786 = vmul.f32 %v2779, %v2784
    %v2787 = vadd.f32 %v2785, %v2786
    %v2788 = vtanh.pop %v2787
    %v2789 = vmul.f32 %v2783, %v2788
    %2790 = vmatprep.subr.mxu0 %v831
    %2791 = vmatpush1.msra.mxu0 %v830
    %2792 = vmatprep.subr.mxu0 %v827
    %2793 = vmatpush1.msra.mxu0 %v826
    %2794 = vmatprep.subr.mxu0 %v823
    %2795 = vmatpush1.msra.mxu0 %v822
    %2796 = vmatprep.subr.mxu0 %v819
    %2797 = vmatpush1.msra.mxu0 %v818
    %2798 = vmatprep.subr.mxu0 %v815
    %2799 = vmatpush1.msra.mxu0 %v814
    %2800 = vmatprep.subr.mxu0 %v811
    %2801 = vmatpush1.msra.mxu0 %v810
    %2802 = vmatprep.subr.mxu0 %v807
    %2803 = vmatpush1.msra.mxu0 %v806
    %2804 = vmatprep.subr.mxu0 %v803
    %2805 = vmatpush1.msra.mxu0 %v802
    %2806 = vmatprep.subr.mxu0 %v799
    %2807 = vmatpush1.msra.mxu0 %v798
    %2808 = vmatprep.subr.mxu0 %v795
    %2809 = vmatpush1.msra.mxu0 %v794
    %2810 = vmatprep.subr.mxu0 %v791
    %2811 = vmatpush1.msra.mxu0 %v790
    %2812 = vmatprep.subr.mxu0 %v787
    %2813 = vmatpush1.msra.mxu0 %v786
    %2814 = vmatprep.subr.mxu0 %v783
    %2815 = vmatpush1.msra.mxu0 %v782
    %2816 = vmatprep.subr.mxu0 %v779
    %2817 = vmatpush1.msra.mxu0 %v778
    %2818 = vmatprep.subr.mxu0 %v775
    %2819 = vmatpush1.msra.mxu0 %v774
    %2820 = vmatprep.subr.mxu0 %v771
    %2821 = vmatpush1.msra.mxu0 %v770
    %2822 = vmatprep.subr.mxu0 0.0
    %2823 = vmatpush2.msra.mxu0 0.0
    %2824 = vmatprep.subr.mxu0 0.0
    %2825 = vmatpush2.msra.mxu0 0.0
    %2826 = vmatprep.subr.mxu0 0.0
    %2827 = vmatpush2.msra.mxu0 0.0
    %2828 = vmatprep.subr.mxu0 0.0
    %2829 = vmatpush2.msra.mxu0 0.0
    %2830 = vmatprep.subr.mxu0 0.0
    %2831 = vmatpush2.msra.mxu0 0.0
    %2832 = vmatprep.subr.mxu0 0.0
    %2833 = vmatpush2.msra.mxu0 0.0
    %2834 = vmatprep.subr.mxu0 0.0
    %2835 = vmatpush2.msra.mxu0 0.0
    %2836 = vmatprep.subr.mxu0 0.0
    %2837 = vmatpush2.msra.mxu0 0.0
    %2838 = vmatprep.subr.mxu0 0.0
    %2839 = vmatpush2.msra.mxu0 0.0
    %2840 = vmatprep.subr.mxu0 0.0
    %2841 = vmatpush2.msra.mxu0 0.0
    %2842 = vmatprep.subr.mxu0 0.0
    %2843 = vmatpush2.msra.mxu0 0.0
    %2844 = vmatprep.subr.mxu0 0.0
    %2845 = vmatpush2.msra.mxu0 0.0
    %2846 = vmatprep.subr.mxu0 0.0
    %2847 = vmatpush2.msra.mxu0 0.0
    %2848 = vmatprep.subr.mxu0 0.0
    %2849 = vmatpush2.msra.mxu0 0.0
    %2850 = vmatprep.subr.mxu0 0.0
    %2851 = vmatpush2.msra.mxu0 0.0
    %2852 = vmatprep.subr.mxu0 0.0
    %2853 = vmatpush2.msra.mxu0 0.0
    %2854 = vmatprep.mubr.f32.mxu0 0.0
    %2855 = vmatmul.mubr.f32.gmra.mxu0 %v2789
    %v2856 = vpop.f32.mrf.mxu0
    %v2857 = vadd.f32 0.0, %v2856
    %v2858 = vpop.f32.mrf.mxu0
    %v2859 = vadd.f32 0.0, %v2858
    %2860 = vdwg.mxu0
    %2861 = vmatprep.subr.mxu0 %v833
    %2862 = vmatpush1.msra.mxu0 %v832
    %2863 = vmatprep.subr.mxu0 %v829
    %2864 = vmatpush1.msra.mxu0 %v828
    %2865 = vmatprep.subr.mxu0 %v825
    %2866 = vmatpush1.msra.mxu0 %v824
    %2867 = vmatprep.subr.mxu0 %v821
    %2868 = vmatpush1.msra.mxu0 %v820
    %2869 = vmatprep.subr.mxu0 %v817
    %2870 = vmatpush1.msra.mxu0 %v816
    %2871 = vmatprep.subr.mxu0 %v813
    %2872 = vmatpush1.msra.mxu0 %v812
    %2873 = vmatprep.subr.mxu0 %v809
    %2874 = vmatpush1.msra.mxu0 %v808
    %2875 = vmatprep.subr.mxu0 %v805
    %2876 = vmatpush1.msra.mxu0 %v804
    %2877 = vmatprep.subr.mxu0 %v801
    %2878 = vmatpush1.msra.mxu0 %v800
    %2879 = vmatprep.subr.mxu0 %v797
    %2880 = vmatpush1.msra.mxu0 %v796
    %2881 = vmatprep.subr.mxu0 %v793
    %2882 = vmatpush1.msra.mxu0 %v792
    %2883 = vmatprep.subr.mxu0 %v789
    %2884 = vmatpush1.msra.mxu0 %v788
    %2885 = vmatprep.subr.mxu0 %v785
    %2886 = vmatpush1.msra.mxu0 %v784
    %2887 = vmatprep.subr.mxu0 %v781
    %2888 = vmatpush1.msra.mxu0 %v780
    %2889 = vmatprep.subr.mxu0 %v777
    %2890 = vmatpush1.msra.mxu0 %v776
    %2891 = vmatprep.subr.mxu0 %v773
    %2892 = vmatpush1.msra.mxu0 %v772
    %2893 = vmatprep.subr.mxu0 0.0
    %2894 = vmatpush2.msra.mxu0 0.0
    %2895 = vmatprep.subr.mxu0 0.0
    %2896 = vmatpush2.msra.mxu0 0.0
    %2897 = vmatprep.subr.mxu0 0.0
    %2898 = vmatpush2.msra.mxu0 0.0
    %2899 = vmatprep.subr.mxu0 0.0
    %2900 = vmatpush2.msra.mxu0 0.0
    %2901 = vmatprep.subr.mxu0 0.0
    %2902 = vmatpush2.msra.mxu0 0.0
    %2903 = vmatprep.subr.mxu0 0.0
    %2904 = vmatpush2.msra.mxu0 0.0
    %2905 = vmatprep.subr.mxu0 0.0
    %2906 = vmatpush2.msra.mxu0 0.0
    %2907 = vmatprep.subr.mxu0 0.0
    %2908 = vmatpush2.msra.mxu0 0.0
    %2909 = vmatprep.subr.mxu0 0.0
    %2910 = vmatpush2.msra.mxu0 0.0
    %2911 = vmatprep.subr.mxu0 0.0
    %2912 = vmatpush2.msra.mxu0 0.0
    %2913 = vmatprep.subr.mxu0 0.0
    %2914 = vmatpush2.msra.mxu0 0.0
    %2915 = vmatprep.subr.mxu0 0.0
    %2916 = vmatpush2.msra.mxu0 0.0
    %2917 = vmatprep.subr.mxu0 0.0
    %2918 = vmatpush2.msra.mxu0 0.0
    %2919 = vmatprep.subr.mxu0 0.0
    %2920 = vmatpush2.msra.mxu0 0.0
    %2921 = vmatprep.subr.mxu0 0.0
    %2922 = vmatpush2.msra.mxu0 0.0
    %2923 = vmatprep.subr.mxu0 0.0
    %2924 = vmatpush2.msra.mxu0 0.0
    %2925 = vmatprep.mubr.f32.mxu0 0.0
    %2926 = vmatmul.mubr.f32.gmra.mxu0 %v2789
    %v2927 = vpop.f32.mrf.mxu0
    %v2928 = vadd.f32 0.0, %v2927
    %v2929 = vpop.f32.mrf.mxu0
    %v2930 = vadd.f32 0.0, %v2929
    %2931 = vdwg.mxu0
    %2932 = vmatprep.subr.mxu0 %v767
    %2933 = vmatpush1.msra.mxu0 %v766
    %2934 = vmatprep.subr.mxu0 %v763
    %2935 = vmatpush1.msra.mxu0 %v762
    %2936 = vmatprep.subr.mxu0 %v759
    %2937 = vmatpush1.msra.mxu0 %v758
    %2938 = vmatprep.subr.mxu0 %v755
    %2939 = vmatpush1.msra.mxu0 %v754
    %2940 = vmatprep.subr.mxu0 %v751
    %2941 = vmatpush1.msra.mxu0 %v750
    %2942 = vmatprep.subr.mxu0 %v747
    %2943 = vmatpush1.msra.mxu0 %v746
    %2944 = vmatprep.subr.mxu0 %v743
    %2945 = vmatpush1.msra.mxu0 %v742
    %2946 = vmatprep.subr.mxu0 %v739
    %2947 = vmatpush1.msra.mxu0 %v738
    %2948 = vmatprep.subr.mxu0 %v735
    %2949 = vmatpush1.msra.mxu0 %v734
    %2950 = vmatprep.subr.mxu0 %v731
    %2951 = vmatpush1.msra.mxu0 %v730
    %2952 = vmatprep.subr.mxu0 %v727
    %2953 = vmatpush1.msra.mxu0 %v726
    %2954 = vmatprep.subr.mxu0 %v723
    %2955 = vmatpush1.msra.mxu0 %v722
    %2956 = vmatprep.subr.mxu0 %v719
    %2957 = vmatpush1.msra.mxu0 %v718
    %2958 = vmatprep.subr.mxu0 %v715
    %2959 = vmatpush1.msra.mxu0 %v714
    %2960 = vmatprep.subr.mxu0 %v711
    %2961 = vmatpush1.msra.mxu0 %v710
    %2962 = vmatprep.subr.mxu0 %v707
    %2963 = vmatpush1.msra.mxu0 %v706
    %2964 = vmatprep.subr.mxu0 0.0
    %2965 = vmatpush2.msra.mxu0 0.0
    %2966 = vmatprep.subr.mxu0 0.0
    %2967 = vmatpush2.msra.mxu0 0.0
    %2968 = vmatprep.subr.mxu0 0.0
    %2969 = vmatpush2.msra.mxu0 0.0
    %2970 = vmatprep.subr.mxu0 0.0
    %2971 = vmatpush2.msra.mxu0 0.0
    %2972 = vmatprep.subr.mxu0 0.0
    %2973 = vmatpush2.msra.mxu0 0.0
    %2974 = vmatprep.subr.mxu0 0.0
    %2975 = vmatpush2.msra.mxu0 0.0
    %2976 = vmatprep.subr.mxu0 0.0
    %2977 = vmatpush2.msra.mxu0 0.0
    %2978 = vmatprep.subr.mxu0 0.0
    %2979 = vmatpush2.msra.mxu0 0.0
    %2980 = vmatprep.subr.mxu0 0.0
    %2981 = vmatpush2.msra.mxu0 0.0
    %2982 = vmatprep.subr.mxu0 0.0
    %2983 = vmatpush2.msra.mxu0 0.0
    %2984 = vmatprep.subr.mxu0 0.0
    %2985 = vmatpush2.msra.mxu0 0.0
    %2986 = vmatprep.subr.mxu0 0.0
    %2987 = vmatpush2.msra.mxu0 0.0
    %2988 = vmatprep.subr.mxu0 0.0
    %2989 = vmatpush2.msra.mxu0 0.0
    %2990 = vmatprep.subr.mxu0 0.0
    %2991 = vmatpush2.msra.mxu0 0.0
    %2992 = vmatprep.subr.mxu0 0.0
    %2993 = vmatpush2.msra.mxu0 0.0
    %2994 = vmatprep.subr.mxu0 0.0
    %2995 = vmatpush2.msra.mxu0 0.0
    %2996 = vmatprep.mubr.f32.mxu0 0.0
    %2997 = vmatmul.mubr.f32.gmra.mxu0 %v2612
    %v2998 = vpop.f32.mrf.mxu0
    %v2999 = vadd.f32 %v2857, %v2998
    %v3000 = vpop.f32.mrf.mxu0
    %v3001 = vadd.f32 %v2859, %v3000
    %3002 = vdwg.mxu0
    %3003 = vmatprep.subr.mxu0 %v769
    %3004 = vmatpush1.msra.mxu0 %v768
    %3005 = vmatprep.subr.mxu0 %v765
    %3006 = vmatpush1.msra.mxu0 %v764
    %3007 = vmatprep.subr.mxu0 %v761
    %3008 = vmatpush1.msra.mxu0 %v760
    %3009 = vmatprep.subr.mxu0 %v757
    %3010 = vmatpush1.msra.mxu0 %v756
    %3011 = vmatprep.subr.mxu0 %v753
    %3012 = vmatpush1.msra.mxu0 %v752
    %3013 = vmatprep.subr.mxu0 %v749
    %3014 = vmatpush1.msra.mxu0 %v748
    %3015 = vmatprep.subr.mxu0 %v745
    %3016 = vmatpush1.msra.mxu0 %v744
    %3017 = vmatprep.subr.mxu0 %v741
    %3018 = vmatpush1.msra.mxu0 %v740
    %3019 = vmatprep.subr.mxu0 %v737
    %3020 = vmatpush1.msra.mxu0 %v736
    %3021 = vmatprep.subr.mxu0 %v733
    %3022 = vmatpush1.msra.mxu0 %v732
    %3023 = vmatprep.subr.mxu0 %v729
    %3024 = vmatpush1.msra.mxu0 %v728
    %3025 = vmatprep.subr.mxu0 %v725
    %3026 = vmatpush1.msra.mxu0 %v724
    %3027 = vmatprep.subr.mxu0 %v721
    %3028 = vmatpush1.msra.mxu0 %v720
    %3029 = vmatprep.subr.mxu0 %v717
    %3030 = vmatpush1.msra.mxu0 %v716
    %3031 = vmatprep.subr.mxu0 %v713
    %3032 = vmatpush1.msra.mxu0 %v712
    %3033 = vmatprep.subr.mxu0 %v709
    %3034 = vmatpush1.msra.mxu0 %v708
    %3035 = vmatprep.subr.mxu0 0.0
    %3036 = vmatpush2.msra.mxu0 0.0
    %3037 = vmatprep.subr.mxu0 0.0
    %3038 = vmatpush2.msra.mxu0 0.0
    %3039 = vmatprep.subr.mxu0 0.0
    %3040 = vmatpush2.msra.mxu0 0.0
    %3041 = vmatprep.subr.mxu0 0.0
    %3042 = vmatpush2.msra.mxu0 0.0
    %3043 = vmatprep.subr.mxu0 0.0
    %3044 = vmatpush2.msra.mxu0 0.0
    %3045 = vmatprep.subr.mxu0 0.0
    %3046 = vmatpush2.msra.mxu0 0.0
    %3047 = vmatprep.subr.mxu0 0.0
    %3048 = vmatpush2.msra.mxu0 0.0
    %3049 = vmatprep.subr.mxu0 0.0
    %3050 = vmatpush2.msra.mxu0 0.0
    %3051 = vmatprep.subr.mxu0 0.0
    %3052 = vmatpush2.msra.mxu0 0.0
    %3053 = vmatprep.subr.mxu0 0.0
    %3054 = vmatpush2.msra.mxu0 0.0
    %3055 = vmatprep.subr.mxu0 0.0
    %3056 = vmatpush2.msra.mxu0 0.0
    %3057 = vmatprep.subr.mxu0 0.0
    %3058 = vmatpush2.msra.mxu0 0.0
    %3059 = vmatprep.subr.mxu0 0.0
    %3060 = vmatpush2.msra.mxu0 0.0
    %3061 = vmatprep.subr.mxu0 0.0
    %3062 = vmatpush2.msra.mxu0 0.0
    %3063 = vmatprep.subr.mxu0 0.0
    %3064 = vmatpush2.msra.mxu0 0.0
    %3065 = vmatprep.subr.mxu0 0.0
    %3066 = vmatpush2.msra.mxu0 0.0
    %3067 = vmatprep.mubr.f32.mxu0 0.0
    %3068 = vmatmul.mubr.f32.gmra.mxu0 %v2612
    %v3069 = vpop.f32.mrf.mxu0
    %v3070 = vadd.f32 %v2928, %v3069
    %v3071 = vpop.f32.mrf.mxu0
    %v3072 = vadd.f32 %v2930, %v3071
    %3073 = vdwg.mxu0
    %v3074 = vadd.f32 %v2999, %v448
    %v3075 = vadd.f32 %v3001, %v452
    %v3076 = vadd.f32 %v3070, %v456
    %v3077 = vadd.f32 %v3072, %v460
    %v3078 = vxor.u32 %v3074, 2147483648
    %v3079 = vxor.u32 %v3075, 2147483648
    %v3080 = vxor.u32 %v3076, 2147483648
    %v3081 = vmul.f32 %v3078, 1.442695
    %v3082 = vpow.pop %v3081
    %v3083 = vmul.f32 %v3079, 1.442695
    %v3084 = vpow.pop %v3083
    %v3085 = vmul.f32 %v3080, 1.442695
    %v3086 = vpow.pop %v3085
    %v3087 = vadd.f32 %v3082, 1.0
    %v3088 = vadd.f32 %v3084, 1.0
    %v3089 = vadd.f32 %v3086, 1.0
    %v3090 = vrcp.pop %v3087
    %v3091 = vmul.f32 1.0, %v3090
    %v3092 = vrcp.pop %v3088
    %v3093 = vmul.f32 1.0, %v3092
    %v3094 = vrcp.pop %v3089
    %v3095 = vmul.f32 1.0, %v3094
    %v3096 = vtanh.pop %v3077
    %v3097 = vmul.f32 %v3093, %v2610
    %v3098 = vmul.f32 %v3091, %v3096
    %v3099 = vadd.f32 %v3097, %v3098
    %v3100 = vtanh.pop %v3099
    %v3101 = vmul.f32 %v3095, %v3100
    %s3102 = smul.u32 5, 4
    %s3103 = smul.addr %s3102, 8
    %s3104 = scalar_lea.vmem [#allocation2], %s3103
    %v3105 = vld [vmem:[%s3104] sm:$0xff]
    %v3106 = vld [vmem:[%s3104 + $0x8] sm:$0xff]
    %v3107 = vld [vmem:[%s3104 + $0x10] sm:$0xff]
    %v3108 = vld [vmem:[%s3104 + $0x18] sm:$0xff]
    %3109 = vmatprep.subr.mxu0 %v533
    %3110 = vmatpush1.msra.mxu0 %v532
    %3111 = vmatprep.subr.mxu0 %v529
    %3112 = vmatpush1.msra.mxu0 %v528
    %3113 = vmatprep.subr.mxu0 %v525
    %3114 = vmatpush1.msra.mxu0 %v524
    %3115 = vmatprep.subr.mxu0 %v521
    %3116 = vmatpush1.msra.mxu0 %v520
    %3117 = vmatprep.subr.mxu0 %v517
    %3118 = vmatpush1.msra.mxu0 %v516
    %3119 = vmatprep.subr.mxu0 %v513
    %3120 = vmatpush1.msra.mxu0 %v512
    %3121 = vmatprep.subr.mxu0 %v509
    %3122 = vmatpush1.msra.mxu0 %v508
    %3123 = vmatprep.subr.mxu0 %v505
    %3124 = vmatpush1.msra.mxu0 %v504
    %3125 = vmatprep.subr.mxu0 %v501
    %3126 = vmatpush1.msra.mxu0 %v500
    %3127 = vmatprep.subr.mxu0 %v497
    %3128 = vmatpush1.msra.mxu0 %v496
    %3129 = vmatprep.subr.mxu0 %v493
    %3130 = vmatpush1.msra.mxu0 %v492
    %3131 = vmatprep.subr.mxu0 %v489
    %3132 = vmatpush1.msra.mxu0 %v488
    %3133 = vmatprep.subr.mxu0 %v485
    %3134 = vmatpush1.msra.mxu0 %v484
    %3135 = vmatprep.subr.mxu0 %v481
    %3136 = vmatpush1.msra.mxu0 %v480
    %3137 = vmatprep.subr.mxu0 %v477
    %3138 = vmatpush1.msra.mxu0 %v476
    %3139 = vmatprep.subr.mxu0 %v473
    %3140 = vmatpush1.msra.mxu0 %v472
    %3141 = vmatprep.subr.mxu0 0.0
    %3142 = vmatpush2.msra.mxu0 0.0
    %3143 = vmatprep.subr.mxu0 0.0
    %3144 = vmatpush2.msra.mxu0 0.0
    %3145 = vmatprep.subr.mxu0 0.0
    %3146 = vmatpush2.msra.mxu0 0.0
    %3147 = vmatprep.subr.mxu0 0.0
    %3148 = vmatpush2.msra.mxu0 0.0
    %3149 = vmatprep.subr.mxu0 0.0
    %3150 = vmatpush2.msra.mxu0 0.0
    %3151 = vmatprep.subr.mxu0 0.0
    %3152 = vmatpush2.msra.mxu0 0.0
    %3153 = vmatprep.subr.mxu0 0.0
    %3154 = vmatpush2.msra.mxu0 0.0
    %3155 = vmatprep.subr.mxu0 0.0
    %3156 = vmatpush2.msra.mxu0 0.0
    %3157 = vmatprep.subr.mxu0 0.0
    %3158 = vmatpush2.msra.mxu0 0.0
    %3159 = vmatprep.subr.mxu0 0.0
    %3160 = vmatpush2.msra.mxu0 0.0
    %3161 = vmatprep.subr.mxu0 0.0
    %3162 = vmatpush2.msra.mxu0 0.0
    %3163 = vmatprep.subr.mxu0 0.0
    %3164 = vmatpush2.msra.mxu0 0.0
    %3165 = vmatprep.subr.mxu0 0.0
    %3166 = vmatpush2.msra.mxu0 0.0
    %3167 = vmatprep.subr.mxu0 0.0
    %3168 = vmatpush2.msra.mxu0 0.0
    %3169 = vmatprep.subr.mxu0 0.0
    %3170 = vmatpush2.msra.mxu0 0.0
    %3171 = vmatprep.subr.mxu0 0.0
    %3172 = vmatpush2.msra.mxu0 0.0
    %3173 = vmatprep.mubr.f32.mxu0 0.0
    %3174 = vmatmul.mubr.f32.gmra.mxu0 %v2789
    %v3175 = vpop.f32.mrf.mxu0
    %v3176 = vadd.f32 0.0, %v3175
    %v3177 = vpop.f32.mrf.mxu0
    %v3178 = vadd.f32 0.0, %v3177
    %3179 = vdwg.mxu0
    %3180 = vmatprep.subr.mxu0 %v535
    %3181 = vmatpush1.msra.mxu0 %v534
    %3182 = vmatprep.subr.mxu0 %v531
    %3183 = vmatpush1.msra.mxu0 %v530
    %3184 = vmatprep.subr.mxu0 %v527
    %3185 = vmatpush1.msra.mxu0 %v526
    %3186 = vmatprep.subr.mxu0 %v523
    %3187 = vmatpush1.msra.mxu0 %v522
    %3188 = vmatprep.subr.mxu0 %v519
    %3189 = vmatpush1.msra.mxu0 %v518
    %3190 = vmatprep.subr.mxu0 %v515
    %3191 = vmatpush1.msra.mxu0 %v514
    %3192 = vmatprep.subr.mxu0 %v511
    %3193 = vmatpush1.msra.mxu0 %v510
    %3194 = vmatprep.subr.mxu0 %v507
    %3195 = vmatpush1.msra.mxu0 %v506
    %3196 = vmatprep.subr.mxu0 %v503
    %3197 = vmatpush1.msra.mxu0 %v502
    %3198 = vmatprep.subr.mxu0 %v499
    %3199 = vmatpush1.msra.mxu0 %v498
    %3200 = vmatprep.subr.mxu0 %v495
    %3201 = vmatpush1.msra.mxu0 %v494
    %3202 = vmatprep.subr.mxu0 %v491
    %3203 = vmatpush1.msra.mxu0 %v490
    %3204 = vmatprep.subr.mxu0 %v487
    %3205 = vmatpush1.msra.mxu0 %v486
    %3206 = vmatprep.subr.mxu0 %v483
    %3207 = vmatpush1.msra.mxu0 %v482
    %3208 = vmatprep.subr.mxu0 %v479
    %3209 = vmatpush1.msra.mxu0 %v478
    %3210 = vmatprep.subr.mxu0 %v475
    %3211 = vmatpush1.msra.mxu0 %v474
    %3212 = vmatprep.subr.mxu0 0.0
    %3213 = vmatpush2.msra.mxu0 0.0
    %3214 = vmatprep.subr.mxu0 0.0
    %3215 = vmatpush2.msra.mxu0 0.0
    %3216 = vmatprep.subr.mxu0 0.0
    %3217 = vmatpush2.msra.mxu0 0.0
    %3218 = vmatprep.subr.mxu0 0.0
    %3219 = vmatpush2.msra.mxu0 0.0
    %3220 = vmatprep.subr.mxu0 0.0
    %3221 = vmatpush2.msra.mxu0 0.0
    %3222 = vmatprep.subr.mxu0 0.0
    %3223 = vmatpush2.msra.mxu0 0.0
    %3224 = vmatprep.subr.mxu0 0.0
    %3225 = vmatpush2.msra.mxu0 0.0
    %3226 = vmatprep.subr.mxu0 0.0
    %3227 = vmatpush2.msra.mxu0 0.0
    %3228 = vmatprep.subr.mxu0 0.0
    %3229 = vmatpush2.msra.mxu0 0.0
    %3230 = vmatprep.subr.mxu0 0.0
    %3231 = vmatpush2.msra.mxu0 0.0
    %3232 = vmatprep.subr.mxu0 0.0
    %3233 = vmatpush2.msra.mxu0 0.0
    %3234 = vmatprep.subr.mxu0 0.0
    %3235 = vmatpush2.msra.mxu0 0.0
    %3236 = vmatprep.subr.mxu0 0.0
    %3237 = vmatpush2.msra.mxu0 0.0
    %3238 = vmatprep.subr.mxu0 0.0
    %3239 = vmatpush2.msra.mxu0 0.0
    %3240 = vmatprep.subr.mxu0 0.0
    %3241 = vmatpush2.msra.mxu0 0.0
    %3242 = vmatprep.subr.mxu0 0.0
    %3243 = vmatpush2.msra.mxu0 0.0
    %3244 = vmatprep.mubr.f32.mxu0 0.0
    %3245 = vmatmul.mubr.f32.gmra.mxu0 %v2789
    %v3246 = vpop.f32.mrf.mxu0
    %v3247 = vadd.f32 0.0, %v3246
    %v3248 = vpop.f32.mrf.mxu0
    %v3249 = vadd.f32 0.0, %v3248
    %3250 = vdwg.mxu0
    %v3251 = vadd.f32 %v3105, %v3176
    %v3252 = vadd.f32 %v3106, %v3178
    %v3253 = vadd.f32 %v3107, %v3247
    %v3254 = vadd.f32 %v3108, %v3249
    %v3255 = vxor.u32 %v3251, 2147483648
    %v3256 = vxor.u32 %v3252, 2147483648
    %v3257 = vxor.u32 %v3253, 2147483648
    %v3258 = vmul.f32 %v3255, 1.442695
    %v3259 = vpow.pop %v3258
    %v3260 = vmul.f32 %v3256, 1.442695
    %v3261 = vpow.pop %v3260
    %v3262 = vmul.f32 %v3257, 1.442695
    %v3263 = vpow.pop %v3262
    %v3264 = vadd.f32 %v3259, 1.0
    %v3265 = vadd.f32 %v3261, 1.0
    %v3266 = vadd.f32 %v3263, 1.0
    %v3267 = vrcp.pop %v3264
    %v3268 = vmul.f32 1.0, %v3267
    %v3269 = vrcp.pop %v3265
    %v3270 = vmul.f32 1.0, %v3269
    %v3271 = vrcp.pop %v3266
    %v3272 = vmul.f32 1.0, %v3271
    %v3273 = vtanh.pop %v3254
    %v3274 = vmul.f32 %v3270, %v2787
    %v3275 = vmul.f32 %v3268, %v3273
    %v3276 = vadd.f32 %v3274, %v3275
    %v3277 = vtanh.pop %v3276
    %v3278 = vmul.f32 %v3272, %v3277
    %3279 = vmatprep.subr.mxu0 %v831
    %3280 = vmatpush1.msra.mxu0 %v830
    %3281 = vmatprep.subr.mxu0 %v827
    %3282 = vmatpush1.msra.mxu0 %v826
    %3283 = vmatprep.subr.mxu0 %v823
    %3284 = vmatpush1.msra.mxu0 %v822
    %3285 = vmatprep.subr.mxu0 %v819
    %3286 = vmatpush1.msra.mxu0 %v818
    %3287 = vmatprep.subr.mxu0 %v815
    %3288 = vmatpush1.msra.mxu0 %v814
    %3289 = vmatprep.subr.mxu0 %v811
    %3290 = vmatpush1.msra.mxu0 %v810
    %3291 = vmatprep.subr.mxu0 %v807
    %3292 = vmatpush1.msra.mxu0 %v806
    %3293 = vmatprep.subr.mxu0 %v803
    %3294 = vmatpush1.msra.mxu0 %v802
    %3295 = vmatprep.subr.mxu0 %v799
    %3296 = vmatpush1.msra.mxu0 %v798
    %3297 = vmatprep.subr.mxu0 %v795
    %3298 = vmatpush1.msra.mxu0 %v794
    %3299 = vmatprep.subr.mxu0 %v791
    %3300 = vmatpush1.msra.mxu0 %v790
    %3301 = vmatprep.subr.mxu0 %v787
    %3302 = vmatpush1.msra.mxu0 %v786
    %3303 = vmatprep.subr.mxu0 %v783
    %3304 = vmatpush1.msra.mxu0 %v782
    %3305 = vmatprep.subr.mxu0 %v779
    %3306 = vmatpush1.msra.mxu0 %v778
    %3307 = vmatprep.subr.mxu0 %v775
    %3308 = vmatpush1.msra.mxu0 %v774
    %3309 = vmatprep.subr.mxu0 %v771
    %3310 = vmatpush1.msra.mxu0 %v770
    %3311 = vmatprep.subr.mxu0 0.0
    %3312 = vmatpush2.msra.mxu0 0.0
    %3313 = vmatprep.subr.mxu0 0.0
    %3314 = vmatpush2.msra.mxu0 0.0
    %3315 = vmatprep.subr.mxu0 0.0
    %3316 = vmatpush2.msra.mxu0 0.0
    %3317 = vmatprep.subr.mxu0 0.0
    %3318 = vmatpush2.msra.mxu0 0.0
    %3319 = vmatprep.subr.mxu0 0.0
    %3320 = vmatpush2.msra.mxu0 0.0
    %3321 = vmatprep.subr.mxu0 0.0
    %3322 = vmatpush2.msra.mxu0 0.0
    %3323 = vmatprep.subr.mxu0 0.0
    %3324 = vmatpush2.msra.mxu0 0.0
    %3325 = vmatprep.subr.mxu0 0.0
    %3326 = vmatpush2.msra.mxu0 0.0
    %3327 = vmatprep.subr.mxu0 0.0
    %3328 = vmatpush2.msra.mxu0 0.0
    %3329 = vmatprep.subr.mxu0 0.0
    %3330 = vmatpush2.msra.mxu0 0.0
    %3331 = vmatprep.subr.mxu0 0.0
    %3332 = vmatpush2.msra.mxu0 0.0
    %3333 = vmatprep.subr.mxu0 0.0
    %3334 = vmatpush2.msra.mxu0 0.0
    %3335 = vmatprep.subr.mxu0 0.0
    %3336 = vmatpush2.msra.mxu0 0.0
    %3337 = vmatprep.subr.mxu0 0.0
    %3338 = vmatpush2.msra.mxu0 0.0
    %3339 = vmatprep.subr.mxu0 0.0
    %3340 = vmatpush2.msra.mxu0 0.0
    %3341 = vmatprep.subr.mxu0 0.0
    %3342 = vmatpush2.msra.mxu0 0.0
    %3343 = vmatprep.mubr.f32.mxu0 0.0
    %3344 = vmatmul.mubr.f32.gmra.mxu0 %v3278
    %v3345 = vpop.f32.mrf.mxu0
    %v3346 = vadd.f32 0.0, %v3345
    %v3347 = vpop.f32.mrf.mxu0
    %v3348 = vadd.f32 0.0, %v3347
    %3349 = vdwg.mxu0
    %3350 = vmatprep.subr.mxu0 %v833
    %3351 = vmatpush1.msra.mxu0 %v832
    %3352 = vmatprep.subr.mxu0 %v829
    %3353 = vmatpush1.msra.mxu0 %v828
    %3354 = vmatprep.subr.mxu0 %v825
    %3355 = vmatpush1.msra.mxu0 %v824
    %3356 = vmatprep.subr.mxu0 %v821
    %3357 = vmatpush1.msra.mxu0 %v820
    %3358 = vmatprep.subr.mxu0 %v817
    %3359 = vmatpush1.msra.mxu0 %v816
    %3360 = vmatprep.subr.mxu0 %v813
    %3361 = vmatpush1.msra.mxu0 %v812
    %3362 = vmatprep.subr.mxu0 %v809
    %3363 = vmatpush1.msra.mxu0 %v808
    %3364 = vmatprep.subr.mxu0 %v805
    %3365 = vmatpush1.msra.mxu0 %v804
    %3366 = vmatprep.subr.mxu0 %v801
    %3367 = vmatpush1.msra.mxu0 %v800
    %3368 = vmatprep.subr.mxu0 %v797
    %3369 = vmatpush1.msra.mxu0 %v796
    %3370 = vmatprep.subr.mxu0 %v793
    %3371 = vmatpush1.msra.mxu0 %v792
    %3372 = vmatprep.subr.mxu0 %v789
    %3373 = vmatpush1.msra.mxu0 %v788
    %3374 = vmatprep.subr.mxu0 %v785
    %3375 = vmatpush1.msra.mxu0 %v784
    %3376 = vmatprep.subr.mxu0 %v781
    %3377 = vmatpush1.msra.mxu0 %v780
    %3378 = vmatprep.subr.mxu0 %v777
    %3379 = vmatpush1.msra.mxu0 %v776
    %3380 = vmatprep.subr.mxu0 %v773
    %3381 = vmatpush1.msra.mxu0 %v772
    %3382 = vmatprep.subr.mxu0 0.0
    %3383 = vmatpush2.msra.mxu0 0.0
    %3384 = vmatprep.subr.mxu0 0.0
    %3385 = vmatpush2.msra.mxu0 0.0
    %3386 = vmatprep.subr.mxu0 0.0
    %3387 = vmatpush2.msra.mxu0 0.0
    %3388 = vmatprep.subr.mxu0 0.0
    %3389 = vmatpush2.msra.mxu0 0.0
    %3390 = vmatprep.subr.mxu0 0.0
    %3391 = vmatpush2.msra.mxu0 0.0
    %3392 = vmatprep.subr.mxu0 0.0
    %3393 = vmatpush2.msra.mxu0 0.0
    %3394 = vmatprep.subr.mxu0 0.0
    %3395 = vmatpush2.msra.mxu0 0.0
    %3396 = vmatprep.subr.mxu0 0.0
    %3397 = vmatpush2.msra.mxu0 0.0
    %3398 = vmatprep.subr.mxu0 0.0
    %3399 = vmatpush2.msra.mxu0 0.0
    %3400 = vmatprep.subr.mxu0 0.0
    %3401 = vmatpush2.msra.mxu0 0.0
    %3402 = vmatprep.subr.mxu0 0.0
    %3403 = vmatpush2.msra.mxu0 0.0
    %3404 = vmatprep.subr.mxu0 0.0
    %3405 = vmatpush2.msra.mxu0 0.0
    %3406 = vmatprep.subr.mxu0 0.0
    %3407 = vmatpush2.msra.mxu0 0.0
    %3408 = vmatprep.subr.mxu0 0.0
    %3409 = vmatpush2.msra.mxu0 0.0
    %3410 = vmatprep.subr.mxu0 0.0
    %3411 = vmatpush2.msra.mxu0 0.0
    %3412 = vmatprep.subr.mxu0 0.0
    %3413 = vmatpush2.msra.mxu0 0.0
    %3414 = vmatprep.mubr.f32.mxu0 0.0
    %3415 = vmatmul.mubr.f32.gmra.mxu0 %v3278
    %v3416 = vpop.f32.mrf.mxu0
    %v3417 = vadd.f32 0.0, %v3416
    %v3418 = vpop.f32.mrf.mxu0
    %v3419 = vadd.f32 0.0, %v3418
    %3420 = vdwg.mxu0
    %3421 = vmatprep.subr.mxu0 %v767
    %3422 = vmatpush1.msra.mxu0 %v766
    %3423 = vmatprep.subr.mxu0 %v763
    %3424 = vmatpush1.msra.mxu0 %v762
    %3425 = vmatprep.subr.mxu0 %v759
    %3426 = vmatpush1.msra.mxu0 %v758
    %3427 = vmatprep.subr.mxu0 %v755
    %3428 = vmatpush1.msra.mxu0 %v754
    %3429 = vmatprep.subr.mxu0 %v751
    %3430 = vmatpush1.msra.mxu0 %v750
    %3431 = vmatprep.subr.mxu0 %v747
    %3432 = vmatpush1.msra.mxu0 %v746
    %3433 = vmatprep.subr.mxu0 %v743
    %3434 = vmatpush1.msra.mxu0 %v742
    %3435 = vmatprep.subr.mxu0 %v739
    %3436 = vmatpush1.msra.mxu0 %v738
    %3437 = vmatprep.subr.mxu0 %v735
    %3438 = vmatpush1.msra.mxu0 %v734
    %3439 = vmatprep.subr.mxu0 %v731
    %3440 = vmatpush1.msra.mxu0 %v730
    %3441 = vmatprep.subr.mxu0 %v727
    %3442 = vmatpush1.msra.mxu0 %v726
    %3443 = vmatprep.subr.mxu0 %v723
    %3444 = vmatpush1.msra.mxu0 %v722
    %3445 = vmatprep.subr.mxu0 %v719
    %3446 = vmatpush1.msra.mxu0 %v718
    %3447 = vmatprep.subr.mxu0 %v715
    %3448 = vmatpush1.msra.mxu0 %v714
    %3449 = vmatprep.subr.mxu0 %v711
    %3450 = vmatpush1.msra.mxu0 %v710
    %3451 = vmatprep.subr.mxu0 %v707
    %3452 = vmatpush1.msra.mxu0 %v706
    %3453 = vmatprep.subr.mxu0 0.0
    %3454 = vmatpush2.msra.mxu0 0.0
    %3455 = vmatprep.subr.mxu0 0.0
    %3456 = vmatpush2.msra.mxu0 0.0
    %3457 = vmatprep.subr.mxu0 0.0
    %3458 = vmatpush2.msra.mxu0 0.0
    %3459 = vmatprep.subr.mxu0 0.0
    %3460 = vmatpush2.msra.mxu0 0.0
    %3461 = vmatprep.subr.mxu0 0.0
    %3462 = vmatpush2.msra.mxu0 0.0
    %3463 = vmatprep.subr.mxu0 0.0
    %3464 = vmatpush2.msra.mxu0 0.0
    %3465 = vmatprep.subr.mxu0 0.0
    %3466 = vmatpush2.msra.mxu0 0.0
    %3467 = vmatprep.subr.mxu0 0.0
    %3468 = vmatpush2.msra.mxu0 0.0
    %3469 = vmatprep.subr.mxu0 0.0
    %3470 = vmatpush2.msra.mxu0 0.0
    %3471 = vmatprep.subr.mxu0 0.0
    %3472 = vmatpush2.msra.mxu0 0.0
    %3473 = vmatprep.subr.mxu0 0.0
    %3474 = vmatpush2.msra.mxu0 0.0
    %3475 = vmatprep.subr.mxu0 0.0
    %3476 = vmatpush2.msra.mxu0 0.0
    %3477 = vmatprep.subr.mxu0 0.0
    %3478 = vmatpush2.msra.mxu0 0.0
    %3479 = vmatprep.subr.mxu0 0.0
    %3480 = vmatpush2.msra.mxu0 0.0
    %3481 = vmatprep.subr.mxu0 0.0
    %3482 = vmatpush2.msra.mxu0 0.0
    %3483 = vmatprep.subr.mxu0 0.0
    %3484 = vmatpush2.msra.mxu0 0.0
    %3485 = vmatprep.mubr.f32.mxu0 0.0
    %3486 = vmatmul.mubr.f32.gmra.mxu0 %v3101
    %v3487 = vpop.f32.mrf.mxu0
    %v3488 = vadd.f32 %v3346, %v3487
    %v3489 = vpop.f32.mrf.mxu0
    %v3490 = vadd.f32 %v3348, %v3489
    %3491 = vdwg.mxu0
    %3492 = vmatprep.subr.mxu0 %v769
    %3493 = vmatpush1.msra.mxu0 %v768
    %3494 = vmatprep.subr.mxu0 %v765
    %3495 = vmatpush1.msra.mxu0 %v764
    %3496 = vmatprep.subr.mxu0 %v761
    %3497 = vmatpush1.msra.mxu0 %v760
    %3498 = vmatprep.subr.mxu0 %v757
    %3499 = vmatpush1.msra.mxu0 %v756
    %3500 = vmatprep.subr.mxu0 %v753
    %3501 = vmatpush1.msra.mxu0 %v752
    %3502 = vmatprep.subr.mxu0 %v749
    %3503 = vmatpush1.msra.mxu0 %v748
    %3504 = vmatprep.subr.mxu0 %v745
    %3505 = vmatpush1.msra.mxu0 %v744
    %3506 = vmatprep.subr.mxu0 %v741
    %3507 = vmatpush1.msra.mxu0 %v740
    %3508 = vmatprep.subr.mxu0 %v737
    %3509 = vmatpush1.msra.mxu0 %v736
    %3510 = vmatprep.subr.mxu0 %v733
    %3511 = vmatpush1.msra.mxu0 %v732
    %3512 = vmatprep.subr.mxu0 %v729
    %3513 = vmatpush1.msra.mxu0 %v728
    %3514 = vmatprep.subr.mxu0 %v725
    %3515 = vmatpush1.msra.mxu0 %v724
    %3516 = vmatprep.subr.mxu0 %v721
    %3517 = vmatpush1.msra.mxu0 %v720
    %3518 = vmatprep.subr.mxu0 %v717
    %3519 = vmatpush1.msra.mxu0 %v716
    %3520 = vmatprep.subr.mxu0 %v713
    %3521 = vmatpush1.msra.mxu0 %v712
    %3522 = vmatprep.subr.mxu0 %v709
    %3523 = vmatpush1.msra.mxu0 %v708
    %3524 = vmatprep.subr.mxu0 0.0
    %3525 = vmatpush2.msra.mxu0 0.0
    %3526 = vmatprep.subr.mxu0 0.0
    %3527 = vmatpush2.msra.mxu0 0.0
    %3528 = vmatprep.subr.mxu0 0.0
    %3529 = vmatpush2.msra.mxu0 0.0
    %3530 = vmatprep.subr.mxu0 0.0
    %3531 = vmatpush2.msra.mxu0 0.0
    %3532 = vmatprep.subr.mxu0 0.0
    %3533 = vmatpush2.msra.mxu0 0.0
    %3534 = vmatprep.subr.mxu0 0.0
    %3535 = vmatpush2.msra.mxu0 0.0
    %3536 = vmatprep.subr.mxu0 0.0
    %3537 = vmatpush2.msra.mxu0 0.0
    %3538 = vmatprep.subr.mxu0 0.0
    %3539 = vmatpush2.msra.mxu0 0.0
    %3540 = vmatprep.subr.mxu0 0.0
    %3541 = vmatpush2.msra.mxu0 0.0
    %3542 = vmatprep.subr.mxu0 0.0
    %3543 = vmatpush2.msra.mxu0 0.0
    %3544 = vmatprep.subr.mxu0 0.0
    %3545 = vmatpush2.msra.mxu0 0.0
    %3546 = vmatprep.subr.mxu0 0.0
    %3547 = vmatpush2.msra.mxu0 0.0
    %3548 = vmatprep.subr.mxu0 0.0
    %3549 = vmatpush2.msra.mxu0 0.0
    %3550 = vmatprep.subr.mxu0 0.0
    %3551 = vmatpush2.msra.mxu0 0.0
    %3552 = vmatprep.subr.mxu0 0.0
    %3553 = vmatpush2.msra.mxu0 0.0
    %3554 = vmatprep.subr.mxu0 0.0
    %3555 = vmatpush2.msra.mxu0 0.0
    %3556 = vmatprep.mubr.f32.mxu0 0.0
    %3557 = vmatmul.mubr.f32.gmra.mxu0 %v3101
    %v3558 = vpop.f32.mrf.mxu0
    %v3559 = vadd.f32 %v3417, %v3558
    %v3560 = vpop.f32.mrf.mxu0
    %v3561 = vadd.f32 %v3419, %v3560
    %3562 = vdwg.mxu0
    %v3563 = vadd.f32 %v3488, %v448
    %v3564 = vadd.f32 %v3490, %v452
    %v3565 = vadd.f32 %v3559, %v456
    %v3566 = vadd.f32 %v3561, %v460
    %v3567 = vxor.u32 %v3563, 2147483648
    %v3568 = vxor.u32 %v3564, 2147483648
    %v3569 = vxor.u32 %v3565, 2147483648
    %v3570 = vmul.f32 %v3567, 1.442695
    %v3571 = vpow.pop %v3570
    %v3572 = vmul.f32 %v3568, 1.442695
    %v3573 = vpow.pop %v3572
    %v3574 = vmul.f32 %v3569, 1.442695
    %v3575 = vpow.pop %v3574
    %v3576 = vadd.f32 %v3571, 1.0
    %v3577 = vadd.f32 %v3573, 1.0
    %v3578 = vadd.f32 %v3575, 1.0
    %v3579 = vrcp.pop %v3576
    %v3580 = vmul.f32 1.0, %v3579
    %v3581 = vrcp.pop %v3577
    %v3582 = vmul.f32 1.0, %v3581
    %v3583 = vrcp.pop %v3578
    %v3584 = vmul.f32 1.0, %v3583
    %v3585 = vtanh.pop %v3566
    %v3586 = vmul.f32 %v3582, %v3099
    %v3587 = vmul.f32 %v3580, %v3585
    %v3588 = vadd.f32 %v3586, %v3587
    %v3589 = vtanh.pop %v3588
    %v3590 = vmul.f32 %v3584, %v3589
    %s3591 = smul.u32 6, 4
    %s3592 = smul.addr %s3591, 8
    %s3593 = scalar_lea.vmem [#allocation2], %s3592
    %v3594 = vld [vmem:[%s3593] sm:$0xff]
    %v3595 = vld [vmem:[%s3593 + $0x8] sm:$0xff]
    %v3596 = vld [vmem:[%s3593 + $0x10] sm:$0xff]
    %v3597 = vld [vmem:[%s3593 + $0x18] sm:$0xff]
    %3598 = vmatprep.subr.mxu0 %v533
    %3599 = vmatpush1.msra.mxu0 %v532
    %3600 = vmatprep.subr.mxu0 %v529
    %3601 = vmatpush1.msra.mxu0 %v528
    %3602 = vmatprep.subr.mxu0 %v525
    %3603 = vmatpush1.msra.mxu0 %v524
    %3604 = vmatprep.subr.mxu0 %v521
    %3605 = vmatpush1.msra.mxu0 %v520
    %3606 = vmatprep.subr.mxu0 %v517
    %3607 = vmatpush1.msra.mxu0 %v516
    %3608 = vmatprep.subr.mxu0 %v513
    %3609 = vmatpush1.msra.mxu0 %v512
    %3610 = vmatprep.subr.mxu0 %v509
    %3611 = vmatpush1.msra.mxu0 %v508
    %3612 = vmatprep.subr.mxu0 %v505
    %3613 = vmatpush1.msra.mxu0 %v504
    %3614 = vmatprep.subr.mxu0 %v501
    %3615 = vmatpush1.msra.mxu0 %v500
    %3616 = vmatprep.subr.mxu0 %v497
    %3617 = vmatpush1.msra.mxu0 %v496
    %3618 = vmatprep.subr.mxu0 %v493
    %3619 = vmatpush1.msra.mxu0 %v492
    %3620 = vmatprep.subr.mxu0 %v489
    %3621 = vmatpush1.msra.mxu0 %v488
    %3622 = vmatprep.subr.mxu0 %v485
    %3623 = vmatpush1.msra.mxu0 %v484
    %3624 = vmatprep.subr.mxu0 %v481
    %3625 = vmatpush1.msra.mxu0 %v480
    %3626 = vmatprep.subr.mxu0 %v477
    %3627 = vmatpush1.msra.mxu0 %v476
    %3628 = vmatprep.subr.mxu0 %v473
    %3629 = vmatpush1.msra.mxu0 %v472
    %3630 = vmatprep.subr.mxu0 0.0
    %3631 = vmatpush2.msra.mxu0 0.0
    %3632 = vmatprep.subr.mxu0 0.0
    %3633 = vmatpush2.msra.mxu0 0.0
    %3634 = vmatprep.subr.mxu0 0.0
    %3635 = vmatpush2.msra.mxu0 0.0
    %3636 = vmatprep.subr.mxu0 0.0
    %3637 = vmatpush2.msra.mxu0 0.0
    %3638 = vmatprep.subr.mxu0 0.0
    %3639 = vmatpush2.msra.mxu0 0.0
    %3640 = vmatprep.subr.mxu0 0.0
    %3641 = vmatpush2.msra.mxu0 0.0
    %3642 = vmatprep.subr.mxu0 0.0
    %3643 = vmatpush2.msra.mxu0 0.0
    %3644 = vmatprep.subr.mxu0 0.0
    %3645 = vmatpush2.msra.mxu0 0.0
    %3646 = vmatprep.subr.mxu0 0.0
    %3647 = vmatpush2.msra.mxu0 0.0
    %3648 = vmatprep.subr.mxu0 0.0
    %3649 = vmatpush2.msra.mxu0 0.0
    %3650 = vmatprep.subr.mxu0 0.0
    %3651 = vmatpush2.msra.mxu0 0.0
    %3652 = vmatprep.subr.mxu0 0.0
    %3653 = vmatpush2.msra.mxu0 0.0
    %3654 = vmatprep.subr.mxu0 0.0
    %3655 = vmatpush2.msra.mxu0 0.0
    %3656 = vmatprep.subr.mxu0 0.0
    %3657 = vmatpush2.msra.mxu0 0.0
    %3658 = vmatprep.subr.mxu0 0.0
    %3659 = vmatpush2.msra.mxu0 0.0
    %3660 = vmatprep.subr.mxu0 0.0
    %3661 = vmatpush2.msra.mxu0 0.0
    %3662 = vmatprep.mubr.f32.mxu0 0.0
    %3663 = vmatmul.mubr.f32.gmra.mxu0 %v3278
    %v3664 = vpop.f32.mrf.mxu0
    %v3665 = vadd.f32 0.0, %v3664
    %v3666 = vpop.f32.mrf.mxu0
    %v3667 = vadd.f32 0.0, %v3666
    %3668 = vdwg.mxu0
    %3669 = vmatprep.subr.mxu0 %v535
    %3670 = vmatpush1.msra.mxu0 %v534
    %3671 = vmatprep.subr.mxu0 %v531
    %3672 = vmatpush1.msra.mxu0 %v530
    %3673 = vmatprep.subr.mxu0 %v527
    %3674 = vmatpush1.msra.mxu0 %v526
    %3675 = vmatprep.subr.mxu0 %v523
    %3676 = vmatpush1.msra.mxu0 %v522
    %3677 = vmatprep.subr.mxu0 %v519
    %3678 = vmatpush1.msra.mxu0 %v518
    %3679 = vmatprep.subr.mxu0 %v515
    %3680 = vmatpush1.msra.mxu0 %v514
    %3681 = vmatprep.subr.mxu0 %v511
    %3682 = vmatpush1.msra.mxu0 %v510
    %3683 = vmatprep.subr.mxu0 %v507
    %3684 = vmatpush1.msra.mxu0 %v506
    %3685 = vmatprep.subr.mxu0 %v503
    %3686 = vmatpush1.msra.mxu0 %v502
    %3687 = vmatprep.subr.mxu0 %v499
    %3688 = vmatpush1.msra.mxu0 %v498
    %3689 = vmatprep.subr.mxu0 %v495
    %3690 = vmatpush1.msra.mxu0 %v494
    %3691 = vmatprep.subr.mxu0 %v491
    %3692 = vmatpush1.msra.mxu0 %v490
    %3693 = vmatprep.subr.mxu0 %v487
    %3694 = vmatpush1.msra.mxu0 %v486
    %3695 = vmatprep.subr.mxu0 %v483
    %3696 = vmatpush1.msra.mxu0 %v482
    %3697 = vmatprep.subr.mxu0 %v479
    %3698 = vmatpush1.msra.mxu0 %v478
    %3699 = vmatprep.subr.mxu0 %v475
    %3700 = vmatpush1.msra.mxu0 %v474
    %3701 = vmatprep.subr.mxu0 0.0
    %3702 = vmatpush2.msra.mxu0 0.0
    %3703 = vmatprep.subr.mxu0 0.0
    %3704 = vmatpush2.msra.mxu0 0.0
    %3705 = vmatprep.subr.mxu0 0.0
    %3706 = vmatpush2.msra.mxu0 0.0
    %3707 = vmatprep.subr.mxu0 0.0
    %3708 = vmatpush2.msra.mxu0 0.0
    %3709 = vmatprep.subr.mxu0 0.0
    %3710 = vmatpush2.msra.mxu0 0.0
    %3711 = vmatprep.subr.mxu0 0.0
    %3712 = vmatpush2.msra.mxu0 0.0
    %3713 = vmatprep.subr.mxu0 0.0
    %3714 = vmatpush2.msra.mxu0 0.0
    %3715 = vmatprep.subr.mxu0 0.0
    %3716 = vmatpush2.msra.mxu0 0.0
    %3717 = vmatprep.subr.mxu0 0.0
    %3718 = vmatpush2.msra.mxu0 0.0
    %3719 = vmatprep.subr.mxu0 0.0
    %3720 = vmatpush2.msra.mxu0 0.0
    %3721 = vmatprep.subr.mxu0 0.0
    %3722 = vmatpush2.msra.mxu0 0.0
    %3723 = vmatprep.subr.mxu0 0.0
    %3724 = vmatpush2.msra.mxu0 0.0
    %3725 = vmatprep.subr.mxu0 0.0
    %3726 = vmatpush2.msra.mxu0 0.0
    %3727 = vmatprep.subr.mxu0 0.0
    %3728 = vmatpush2.msra.mxu0 0.0
    %3729 = vmatprep.subr.mxu0 0.0
    %3730 = vmatpush2.msra.mxu0 0.0
    %3731 = vmatprep.subr.mxu0 0.0
    %3732 = vmatpush2.msra.mxu0 0.0
    %3733 = vmatprep.mubr.f32.mxu0 0.0
    %3734 = vmatmul.mubr.f32.gmra.mxu0 %v3278
    %v3735 = vpop.f32.mrf.mxu0
    %v3736 = vadd.f32 0.0, %v3735
    %v3737 = vpop.f32.mrf.mxu0
    %v3738 = vadd.f32 0.0, %v3737
    %3739 = vdwg.mxu0
    %v3740 = vadd.f32 %v3594, %v3665
    %v3741 = vadd.f32 %v3595, %v3667
    %v3742 = vadd.f32 %v3596, %v3736
    %v3743 = vadd.f32 %v3597, %v3738
    %v3744 = vxor.u32 %v3740, 2147483648
    %v3745 = vxor.u32 %v3741, 2147483648
    %v3746 = vxor.u32 %v3742, 2147483648
    %v3747 = vmul.f32 %v3744, 1.442695
    %v3748 = vpow.pop %v3747
    %v3749 = vmul.f32 %v3745, 1.442695
    %v3750 = vpow.pop %v3749
    %v3751 = vmul.f32 %v3746, 1.442695
    %v3752 = vpow.pop %v3751
    %v3753 = vadd.f32 %v3748, 1.0
    %v3754 = vadd.f32 %v3750, 1.0
    %v3755 = vadd.f32 %v3752, 1.0
    %v3756 = vrcp.pop %v3753
    %v3757 = vmul.f32 1.0, %v3756
    %v3758 = vrcp.pop %v3754
    %v3759 = vmul.f32 1.0, %v3758
    %v3760 = vrcp.pop %v3755
    %v3761 = vmul.f32 1.0, %v3760
    %v3762 = vtanh.pop %v3743
    %v3763 = vmul.f32 %v3759, %v3276
    %v3764 = vmul.f32 %v3757, %v3762
    %v3765 = vadd.f32 %v3763, %v3764
    %v3766 = vtanh.pop %v3765
    %v3767 = vmul.f32 %v3761, %v3766
    %3768 = vmatprep.subr.mxu0 %v831
    %3769 = vmatpush1.msra.mxu0 %v830
    %3770 = vmatprep.subr.mxu0 %v827
    %3771 = vmatpush1.msra.mxu0 %v826
    %3772 = vmatprep.subr.mxu0 %v823
    %3773 = vmatpush1.msra.mxu0 %v822
    %3774 = vmatprep.subr.mxu0 %v819
    %3775 = vmatpush1.msra.mxu0 %v818
    %3776 = vmatprep.subr.mxu0 %v815
    %3777 = vmatpush1.msra.mxu0 %v814
    %3778 = vmatprep.subr.mxu0 %v811
    %3779 = vmatpush1.msra.mxu0 %v810
    %3780 = vmatprep.subr.mxu0 %v807
    %3781 = vmatpush1.msra.mxu0 %v806
    %3782 = vmatprep.subr.mxu0 %v803
    %3783 = vmatpush1.msra.mxu0 %v802
    %3784 = vmatprep.subr.mxu0 %v799
    %3785 = vmatpush1.msra.mxu0 %v798
    %3786 = vmatprep.subr.mxu0 %v795
    %3787 = vmatpush1.msra.mxu0 %v794
    %3788 = vmatprep.subr.mxu0 %v791
    %3789 = vmatpush1.msra.mxu0 %v790
    %3790 = vmatprep.subr.mxu0 %v787
    %3791 = vmatpush1.msra.mxu0 %v786
    %3792 = vmatprep.subr.mxu0 %v783
    %3793 = vmatpush1.msra.mxu0 %v782
    %3794 = vmatprep.subr.mxu0 %v779
    %3795 = vmatpush1.msra.mxu0 %v778
    %3796 = vmatprep.subr.mxu0 %v775
    %3797 = vmatpush1.msra.mxu0 %v774
    %3798 = vmatprep.subr.mxu0 %v771
    %3799 = vmatpush1.msra.mxu0 %v770
    %3800 = vmatprep.subr.mxu0 0.0
    %3801 = vmatpush2.msra.mxu0 0.0
    %3802 = vmatprep.subr.mxu0 0.0
    %3803 = vmatpush2.msra.mxu0 0.0
    %3804 = vmatprep.subr.mxu0 0.0
    %3805 = vmatpush2.msra.mxu0 0.0
    %3806 = vmatprep.subr.mxu0 0.0
    %3807 = vmatpush2.msra.mxu0 0.0
    %3808 = vmatprep.subr.mxu0 0.0
    %3809 = vmatpush2.msra.mxu0 0.0
    %3810 = vmatprep.subr.mxu0 0.0
    %3811 = vmatpush2.msra.mxu0 0.0
    %3812 = vmatprep.subr.mxu0 0.0
    %3813 = vmatpush2.msra.mxu0 0.0
    %3814 = vmatprep.subr.mxu0 0.0
    %3815 = vmatpush2.msra.mxu0 0.0
    %3816 = vmatprep.subr.mxu0 0.0
    %3817 = vmatpush2.msra.mxu0 0.0
    %3818 = vmatprep.subr.mxu0 0.0
    %3819 = vmatpush2.msra.mxu0 0.0
    %3820 = vmatprep.subr.mxu0 0.0
    %3821 = vmatpush2.msra.mxu0 0.0
    %3822 = vmatprep.subr.mxu0 0.0
    %3823 = vmatpush2.msra.mxu0 0.0
    %3824 = vmatprep.subr.mxu0 0.0
    %3825 = vmatpush2.msra.mxu0 0.0
    %3826 = vmatprep.subr.mxu0 0.0
    %3827 = vmatpush2.msra.mxu0 0.0
    %3828 = vmatprep.subr.mxu0 0.0
    %3829 = vmatpush2.msra.mxu0 0.0
    %3830 = vmatprep.subr.mxu0 0.0
    %3831 = vmatpush2.msra.mxu0 0.0
    %3832 = vmatprep.mubr.f32.mxu0 0.0
    %3833 = vmatmul.mubr.f32.gmra.mxu0 %v3767
    %v3834 = vpop.f32.mrf.mxu0
    %v3835 = vadd.f32 0.0, %v3834
    %v3836 = vpop.f32.mrf.mxu0
    %v3837 = vadd.f32 0.0, %v3836
    %3838 = vdwg.mxu0
    %3839 = vmatprep.subr.mxu0 %v833
    %3840 = vmatpush1.msra.mxu0 %v832
    %3841 = vmatprep.subr.mxu0 %v829
    %3842 = vmatpush1.msra.mxu0 %v828
    %3843 = vmatprep.subr.mxu0 %v825
    %3844 = vmatpush1.msra.mxu0 %v824
    %3845 = vmatprep.subr.mxu0 %v821
    %3846 = vmatpush1.msra.mxu0 %v820
    %3847 = vmatprep.subr.mxu0 %v817
    %3848 = vmatpush1.msra.mxu0 %v816
    %3849 = vmatprep.subr.mxu0 %v813
    %3850 = vmatpush1.msra.mxu0 %v812
    %3851 = vmatprep.subr.mxu0 %v809
    %3852 = vmatpush1.msra.mxu0 %v808
    %3853 = vmatprep.subr.mxu0 %v805
    %3854 = vmatpush1.msra.mxu0 %v804
    %3855 = vmatprep.subr.mxu0 %v801
    %3856 = vmatpush1.msra.mxu0 %v800
    %3857 = vmatprep.subr.mxu0 %v797
    %3858 = vmatpush1.msra.mxu0 %v796
    %3859 = vmatprep.subr.mxu0 %v793
    %3860 = vmatpush1.msra.mxu0 %v792
    %3861 = vmatprep.subr.mxu0 %v789
    %3862 = vmatpush1.msra.mxu0 %v788
    %3863 = vmatprep.subr.mxu0 %v785
    %3864 = vmatpush1.msra.mxu0 %v784
    %3865 = vmatprep.subr.mxu0 %v781
    %3866 = vmatpush1.msra.mxu0 %v780
    %3867 = vmatprep.subr.mxu0 %v777
    %3868 = vmatpush1.msra.mxu0 %v776
    %3869 = vmatprep.subr.mxu0 %v773
    %3870 = vmatpush1.msra.mxu0 %v772
    %3871 = vmatprep.subr.mxu0 0.0
    %3872 = vmatpush2.msra.mxu0 0.0
    %3873 = vmatprep.subr.mxu0 0.0
    %3874 = vmatpush2.msra.mxu0 0.0
    %3875 = vmatprep.subr.mxu0 0.0
    %3876 = vmatpush2.msra.mxu0 0.0
    %3877 = vmatprep.subr.mxu0 0.0
    %3878 = vmatpush2.msra.mxu0 0.0
    %3879 = vmatprep.subr.mxu0 0.0
    %3880 = vmatpush2.msra.mxu0 0.0
    %3881 = vmatprep.subr.mxu0 0.0
    %3882 = vmatpush2.msra.mxu0 0.0
    %3883 = vmatprep.subr.mxu0 0.0
    %3884 = vmatpush2.msra.mxu0 0.0
    %3885 = vmatprep.subr.mxu0 0.0
    %3886 = vmatpush2.msra.mxu0 0.0
    %3887 = vmatprep.subr.mxu0 0.0
    %3888 = vmatpush2.msra.mxu0 0.0
    %3889 = vmatprep.subr.mxu0 0.0
    %3890 = vmatpush2.msra.mxu0 0.0
    %3891 = vmatprep.subr.mxu0 0.0
    %3892 = vmatpush2.msra.mxu0 0.0
    %3893 = vmatprep.subr.mxu0 0.0
    %3894 = vmatpush2.msra.mxu0 0.0
    %3895 = vmatprep.subr.mxu0 0.0
    %3896 = vmatpush2.msra.mxu0 0.0
    %3897 = vmatprep.subr.mxu0 0.0
    %3898 = vmatpush2.msra.mxu0 0.0
    %3899 = vmatprep.subr.mxu0 0.0
    %3900 = vmatpush2.msra.mxu0 0.0
    %3901 = vmatprep.subr.mxu0 0.0
    %3902 = vmatpush2.msra.mxu0 0.0
    %3903 = vmatprep.mubr.f32.mxu0 0.0
    %3904 = vmatmul.mubr.f32.gmra.mxu0 %v3767
    %v3905 = vpop.f32.mrf.mxu0
    %v3906 = vadd.f32 0.0, %v3905
    %v3907 = vpop.f32.mrf.mxu0
    %v3908 = vadd.f32 0.0, %v3907
    %3909 = vdwg.mxu0
    %3910 = vmatprep.subr.mxu0 %v767
    %3911 = vmatpush1.msra.mxu0 %v766
    %3912 = vmatprep.subr.mxu0 %v763
    %3913 = vmatpush1.msra.mxu0 %v762
    %3914 = vmatprep.subr.mxu0 %v759
    %3915 = vmatpush1.msra.mxu0 %v758
    %3916 = vmatprep.subr.mxu0 %v755
    %3917 = vmatpush1.msra.mxu0 %v754
    %3918 = vmatprep.subr.mxu0 %v751
    %3919 = vmatpush1.msra.mxu0 %v750
    %3920 = vmatprep.subr.mxu0 %v747
    %3921 = vmatpush1.msra.mxu0 %v746
    %3922 = vmatprep.subr.mxu0 %v743
    %3923 = vmatpush1.msra.mxu0 %v742
    %3924 = vmatprep.subr.mxu0 %v739
    %3925 = vmatpush1.msra.mxu0 %v738
    %3926 = vmatprep.subr.mxu0 %v735
    %3927 = vmatpush1.msra.mxu0 %v734
    %3928 = vmatprep.subr.mxu0 %v731
    %3929 = vmatpush1.msra.mxu0 %v730
    %3930 = vmatprep.subr.mxu0 %v727
    %3931 = vmatpush1.msra.mxu0 %v726
    %3932 = vmatprep.subr.mxu0 %v723
    %3933 = vmatpush1.msra.mxu0 %v722
    %3934 = vmatprep.subr.mxu0 %v719
    %3935 = vmatpush1.msra.mxu0 %v718
    %3936 = vmatprep.subr.mxu0 %v715
    %3937 = vmatpush1.msra.mxu0 %v714
    %3938 = vmatprep.subr.mxu0 %v711
    %3939 = vmatpush1.msra.mxu0 %v710
    %3940 = vmatprep.subr.mxu0 %v707
    %3941 = vmatpush1.msra.mxu0 %v706
    %3942 = vmatprep.subr.mxu0 0.0
    %3943 = vmatpush2.msra.mxu0 0.0
    %3944 = vmatprep.subr.mxu0 0.0
    %3945 = vmatpush2.msra.mxu0 0.0
    %3946 = vmatprep.subr.mxu0 0.0
    %3947 = vmatpush2.msra.mxu0 0.0
    %3948 = vmatprep.subr.mxu0 0.0
    %3949 = vmatpush2.msra.mxu0 0.0
    %3950 = vmatprep.subr.mxu0 0.0
    %3951 = vmatpush2.msra.mxu0 0.0
    %3952 = vmatprep.subr.mxu0 0.0
    %3953 = vmatpush2.msra.mxu0 0.0
    %3954 = vmatprep.subr.mxu0 0.0
    %3955 = vmatpush2.msra.mxu0 0.0
    %3956 = vmatprep.subr.mxu0 0.0
    %3957 = vmatpush2.msra.mxu0 0.0
    %3958 = vmatprep.subr.mxu0 0.0
    %3959 = vmatpush2.msra.mxu0 0.0
    %3960 = vmatprep.subr.mxu0 0.0
    %3961 = vmatpush2.msra.mxu0 0.0
    %3962 = vmatprep.subr.mxu0 0.0
    %3963 = vmatpush2.msra.mxu0 0.0
    %3964 = vmatprep.subr.mxu0 0.0
    %3965 = vmatpush2.msra.mxu0 0.0
    %3966 = vmatprep.subr.mxu0 0.0
    %3967 = vmatpush2.msra.mxu0 0.0
    %3968 = vmatprep.subr.mxu0 0.0
    %3969 = vmatpush2.msra.mxu0 0.0
    %3970 = vmatprep.subr.mxu0 0.0
    %3971 = vmatpush2.msra.mxu0 0.0
    %3972 = vmatprep.subr.mxu0 0.0
    %3973 = vmatpush2.msra.mxu0 0.0
    %3974 = vmatprep.mubr.f32.mxu0 0.0
    %3975 = vmatmul.mubr.f32.gmra.mxu0 %v3590
    %v3976 = vpop.f32.mrf.mxu0
    %v3977 = vadd.f32 %v3835, %v3976
    %v3978 = vpop.f32.mrf.mxu0
    %v3979 = vadd.f32 %v3837, %v3978
    %3980 = vdwg.mxu0
    %3981 = vmatprep.subr.mxu0 %v769
    %3982 = vmatpush1.msra.mxu0 %v768
    %3983 = vmatprep.subr.mxu0 %v765
    %3984 = vmatpush1.msra.mxu0 %v764
    %3985 = vmatprep.subr.mxu0 %v761
    %3986 = vmatpush1.msra.mxu0 %v760
    %3987 = vmatprep.subr.mxu0 %v757
    %3988 = vmatpush1.msra.mxu0 %v756
    %3989 = vmatprep.subr.mxu0 %v753
    %3990 = vmatpush1.msra.mxu0 %v752
    %3991 = vmatprep.subr.mxu0 %v749
    %3992 = vmatpush1.msra.mxu0 %v748
    %3993 = vmatprep.subr.mxu0 %v745
    %3994 = vmatpush1.msra.mxu0 %v744
    %3995 = vmatprep.subr.mxu0 %v741
    %3996 = vmatpush1.msra.mxu0 %v740
    %3997 = vmatprep.subr.mxu0 %v737
    %3998 = vmatpush1.msra.mxu0 %v736
    %3999 = vmatprep.subr.mxu0 %v733
    %4000 = vmatpush1.msra.mxu0 %v732
    %4001 = vmatprep.subr.mxu0 %v729
    %4002 = vmatpush1.msra.mxu0 %v728
    %4003 = vmatprep.subr.mxu0 %v725
    %4004 = vmatpush1.msra.mxu0 %v724
    %4005 = vmatprep.subr.mxu0 %v721
    %4006 = vmatpush1.msra.mxu0 %v720
    %4007 = vmatprep.subr.mxu0 %v717
    %4008 = vmatpush1.msra.mxu0 %v716
    %4009 = vmatprep.subr.mxu0 %v713
    %4010 = vmatpush1.msra.mxu0 %v712
    %4011 = vmatprep.subr.mxu0 %v709
    %4012 = vmatpush1.msra.mxu0 %v708
    %4013 = vmatprep.subr.mxu0 0.0
    %4014 = vmatpush2.msra.mxu0 0.0
    %4015 = vmatprep.subr.mxu0 0.0
    %4016 = vmatpush2.msra.mxu0 0.0
    %4017 = vmatprep.subr.mxu0 0.0
    %4018 = vmatpush2.msra.mxu0 0.0
    %4019 = vmatprep.subr.mxu0 0.0
    %4020 = vmatpush2.msra.mxu0 0.0
    %4021 = vmatprep.subr.mxu0 0.0
    %4022 = vmatpush2.msra.mxu0 0.0
    %4023 = vmatprep.subr.mxu0 0.0
    %4024 = vmatpush2.msra.mxu0 0.0
    %4025 = vmatprep.subr.mxu0 0.0
    %4026 = vmatpush2.msra.mxu0 0.0
    %4027 = vmatprep.subr.mxu0 0.0
    %4028 = vmatpush2.msra.mxu0 0.0
    %4029 = vmatprep.subr.mxu0 0.0
    %4030 = vmatpush2.msra.mxu0 0.0
    %4031 = vmatprep.subr.mxu0 0.0
    %4032 = vmatpush2.msra.mxu0 0.0
    %4033 = vmatprep.subr.mxu0 0.0
    %4034 = vmatpush2.msra.mxu0 0.0
    %4035 = vmatprep.subr.mxu0 0.0
    %4036 = vmatpush2.msra.mxu0 0.0
    %4037 = vmatprep.subr.mxu0 0.0
    %4038 = vmatpush2.msra.mxu0 0.0
    %4039 = vmatprep.subr.mxu0 0.0
    %4040 = vmatpush2.msra.mxu0 0.0
    %4041 = vmatprep.subr.mxu0 0.0
    %4042 = vmatpush2.msra.mxu0 0.0
    %4043 = vmatprep.subr.mxu0 0.0
    %4044 = vmatpush2.msra.mxu0 0.0
    %4045 = vmatprep.mubr.f32.mxu0 0.0
    %4046 = vmatmul.mubr.f32.gmra.mxu0 %v3590
    %v4047 = vpop.f32.mrf.mxu0
    %v4048 = vadd.f32 %v3906, %v4047
    %v4049 = vpop.f32.mrf.mxu0
    %v4050 = vadd.f32 %v3908, %v4049
    %4051 = vdwg.mxu0
    %v4052 = vadd.f32 %v3977, %v448
    %v4053 = vadd.f32 %v3979, %v452
    %v4054 = vadd.f32 %v4048, %v456
    %v4055 = vadd.f32 %v4050, %v460
    %v4056 = vxor.u32 %v4052, 2147483648
    %v4057 = vxor.u32 %v4053, 2147483648
    %v4058 = vxor.u32 %v4054, 2147483648
    %v4059 = vmul.f32 %v4056, 1.442695
    %v4060 = vpow.pop %v4059
    %v4061 = vmul.f32 %v4057, 1.442695
    %v4062 = vpow.pop %v4061
    %v4063 = vmul.f32 %v4058, 1.442695
    %v4064 = vpow.pop %v4063
    %v4065 = vadd.f32 %v4060, 1.0
    %v4066 = vadd.f32 %v4062, 1.0
    %v4067 = vadd.f32 %v4064, 1.0
    %v4068 = vrcp.pop %v4065
    %v4069 = vmul.f32 1.0, %v4068
    %v4070 = vrcp.pop %v4066
    %v4071 = vmul.f32 1.0, %v4070
    %v4072 = vrcp.pop %v4067
    %v4073 = vmul.f32 1.0, %v4072
    %v4074 = vtanh.pop %v4055
    %v4075 = vmul.f32 %v4071, %v3588
    %v4076 = vmul.f32 %v4069, %v4074
    %v4077 = vadd.f32 %v4075, %v4076
    %v4078 = vtanh.pop %v4077
    %v4079 = vmul.f32 %v4073, %v4078
    %s4080 = smul.u32 7, 4
    %s4081 = smul.addr %s4080, 8
    %s4082 = scalar_lea.vmem [#allocation2], %s4081
    %v4083 = vld [vmem:[%s4082] sm:$0xff]
    %v4084 = vld [vmem:[%s4082 + $0x8] sm:$0xff]
    %v4085 = vld [vmem:[%s4082 + $0x10] sm:$0xff]
    %v4086 = vld [vmem:[%s4082 + $0x18] sm:$0xff]
    %4087 = vmatprep.subr.mxu0 %v533
    %4088 = vmatpush1.msra.mxu0 %v532
    %4089 = vmatprep.subr.mxu0 %v529
    %4090 = vmatpush1.msra.mxu0 %v528
    %4091 = vmatprep.subr.mxu0 %v525
    %4092 = vmatpush1.msra.mxu0 %v524
    %4093 = vmatprep.subr.mxu0 %v521
    %4094 = vmatpush1.msra.mxu0 %v520
    %4095 = vmatprep.subr.mxu0 %v517
    %4096 = vmatpush1.msra.mxu0 %v516
    %4097 = vmatprep.subr.mxu0 %v513
    %4098 = vmatpush1.msra.mxu0 %v512
    %4099 = vmatprep.subr.mxu0 %v509
    %4100 = vmatpush1.msra.mxu0 %v508
    %4101 = vmatprep.subr.mxu0 %v505
    %4102 = vmatpush1.msra.mxu0 %v504
    %4103 = vmatprep.subr.mxu0 %v501
    %4104 = vmatpush1.msra.mxu0 %v500
    %4105 = vmatprep.subr.mxu0 %v497
    %4106 = vmatpush1.msra.mxu0 %v496
    %4107 = vmatprep.subr.mxu0 %v493
    %4108 = vmatpush1.msra.mxu0 %v492
    %4109 = vmatprep.subr.mxu0 %v489
    %4110 = vmatpush1.msra.mxu0 %v488
    %4111 = vmatprep.subr.mxu0 %v485
    %4112 = vmatpush1.msra.mxu0 %v484
    %4113 = vmatprep.subr.mxu0 %v481
    %4114 = vmatpush1.msra.mxu0 %v480
    %4115 = vmatprep.subr.mxu0 %v477
    %4116 = vmatpush1.msra.mxu0 %v476
    %4117 = vmatprep.subr.mxu0 %v473
    %4118 = vmatpush1.msra.mxu0 %v472
    %4119 = vmatprep.subr.mxu0 0.0
    %4120 = vmatpush2.msra.mxu0 0.0
    %4121 = vmatprep.subr.mxu0 0.0
    %4122 = vmatpush2.msra.mxu0 0.0
    %4123 = vmatprep.subr.mxu0 0.0
    %4124 = vmatpush2.msra.mxu0 0.0
    %4125 = vmatprep.subr.mxu0 0.0
    %4126 = vmatpush2.msra.mxu0 0.0
    %4127 = vmatprep.subr.mxu0 0.0
    %4128 = vmatpush2.msra.mxu0 0.0
    %4129 = vmatprep.subr.mxu0 0.0
    %4130 = vmatpush2.msra.mxu0 0.0
    %4131 = vmatprep.subr.mxu0 0.0
    %4132 = vmatpush2.msra.mxu0 0.0
    %4133 = vmatprep.subr.mxu0 0.0
    %4134 = vmatpush2.msra.mxu0 0.0
    %4135 = vmatprep.subr.mxu0 0.0
    %4136 = vmatpush2.msra.mxu0 0.0
    %4137 = vmatprep.subr.mxu0 0.0
    %4138 = vmatpush2.msra.mxu0 0.0
    %4139 = vmatprep.subr.mxu0 0.0
    %4140 = vmatpush2.msra.mxu0 0.0
    %4141 = vmatprep.subr.mxu0 0.0
    %4142 = vmatpush2.msra.mxu0 0.0
    %4143 = vmatprep.subr.mxu0 0.0
    %4144 = vmatpush2.msra.mxu0 0.0
    %4145 = vmatprep.subr.mxu0 0.0
    %4146 = vmatpush2.msra.mxu0 0.0
    %4147 = vmatprep.subr.mxu0 0.0
    %4148 = vmatpush2.msra.mxu0 0.0
    %4149 = vmatprep.subr.mxu0 0.0
    %4150 = vmatpush2.msra.mxu0 0.0
    %4151 = vmatprep.mubr.f32.mxu0 0.0
    %4152 = vmatmul.mubr.f32.gmra.mxu0 %v3767
    %v4153 = vpop.f32.mrf.mxu0
    %v4154 = vadd.f32 0.0, %v4153
    %v4155 = vpop.f32.mrf.mxu0
    %v4156 = vadd.f32 0.0, %v4155
    %4157 = vdwg.mxu0
    %4158 = vmatprep.subr.mxu0 %v535
    %4159 = vmatpush1.msra.mxu0 %v534
    %4160 = vmatprep.subr.mxu0 %v531
    %4161 = vmatpush1.msra.mxu0 %v530
    %4162 = vmatprep.subr.mxu0 %v527
    %4163 = vmatpush1.msra.mxu0 %v526
    %4164 = vmatprep.subr.mxu0 %v523
    %4165 = vmatpush1.msra.mxu0 %v522
    %4166 = vmatprep.subr.mxu0 %v519
    %4167 = vmatpush1.msra.mxu0 %v518
    %4168 = vmatprep.subr.mxu0 %v515
    %4169 = vmatpush1.msra.mxu0 %v514
    %4170 = vmatprep.subr.mxu0 %v511
    %4171 = vmatpush1.msra.mxu0 %v510
    %4172 = vmatprep.subr.mxu0 %v507
    %4173 = vmatpush1.msra.mxu0 %v506
    %4174 = vmatprep.subr.mxu0 %v503
    %4175 = vmatpush1.msra.mxu0 %v502
    %4176 = vmatprep.subr.mxu0 %v499
    %4177 = vmatpush1.msra.mxu0 %v498
    %4178 = vmatprep.subr.mxu0 %v495
    %4179 = vmatpush1.msra.mxu0 %v494
    %4180 = vmatprep.subr.mxu0 %v491
    %4181 = vmatpush1.msra.mxu0 %v490
    %4182 = vmatprep.subr.mxu0 %v487
    %4183 = vmatpush1.msra.mxu0 %v486
    %4184 = vmatprep.subr.mxu0 %v483
    %4185 = vmatpush1.msra.mxu0 %v482
    %4186 = vmatprep.subr.mxu0 %v479
    %4187 = vmatpush1.msra.mxu0 %v478
    %4188 = vmatprep.subr.mxu0 %v475
    %4189 = vmatpush1.msra.mxu0 %v474
    %4190 = vmatprep.subr.mxu0 0.0
    %4191 = vmatpush2.msra.mxu0 0.0
    %4192 = vmatprep.subr.mxu0 0.0
    %4193 = vmatpush2.msra.mxu0 0.0
    %4194 = vmatprep.subr.mxu0 0.0
    %4195 = vmatpush2.msra.mxu0 0.0
    %4196 = vmatprep.subr.mxu0 0.0
    %4197 = vmatpush2.msra.mxu0 0.0
    %4198 = vmatprep.subr.mxu0 0.0
    %4199 = vmatpush2.msra.mxu0 0.0
    %4200 = vmatprep.subr.mxu0 0.0
    %4201 = vmatpush2.msra.mxu0 0.0
    %4202 = vmatprep.subr.mxu0 0.0
    %4203 = vmatpush2.msra.mxu0 0.0
    %4204 = vmatprep.subr.mxu0 0.0
    %4205 = vmatpush2.msra.mxu0 0.0
    %4206 = vmatprep.subr.mxu0 0.0
    %4207 = vmatpush2.msra.mxu0 0.0
    %4208 = vmatprep.subr.mxu0 0.0
    %4209 = vmatpush2.msra.mxu0 0.0
    %4210 = vmatprep.subr.mxu0 0.0
    %4211 = vmatpush2.msra.mxu0 0.0
    %4212 = vmatprep.subr.mxu0 0.0
    %4213 = vmatpush2.msra.mxu0 0.0
    %4214 = vmatprep.subr.mxu0 0.0
    %4215 = vmatpush2.msra.mxu0 0.0
    %4216 = vmatprep.subr.mxu0 0.0
    %4217 = vmatpush2.msra.mxu0 0.0
    %4218 = vmatprep.subr.mxu0 0.0
    %4219 = vmatpush2.msra.mxu0 0.0
    %4220 = vmatprep.subr.mxu0 0.0
    %4221 = vmatpush2.msra.mxu0 0.0
    %4222 = vmatprep.mubr.f32.mxu0 0.0
    %4223 = vmatmul.mubr.f32.gmra.mxu0 %v3767
    %v4224 = vpop.f32.mrf.mxu0
    %v4225 = vadd.f32 0.0, %v4224
    %v4226 = vpop.f32.mrf.mxu0
    %v4227 = vadd.f32 0.0, %v4226
    %4228 = vdwg.mxu0
    %v4229 = vadd.f32 %v4083, %v4154
    %v4230 = vadd.f32 %v4084, %v4156
    %v4231 = vadd.f32 %v4085, %v4225
    %v4232 = vadd.f32 %v4086, %v4227
    %v4233 = vxor.u32 %v4229, 2147483648
    %v4234 = vxor.u32 %v4230, 2147483648
    %v4235 = vxor.u32 %v4231, 2147483648
    %v4236 = vmul.f32 %v4233, 1.442695
    %v4237 = vpow.pop %v4236
    %v4238 = vmul.f32 %v4234, 1.442695
    %v4239 = vpow.pop %v4238
    %v4240 = vmul.f32 %v4235, 1.442695
    %v4241 = vpow.pop %v4240
    %v4242 = vadd.f32 %v4237, 1.0
    %v4243 = vadd.f32 %v4239, 1.0
    %v4244 = vadd.f32 %v4241, 1.0
    %v4245 = vrcp.pop %v4242
    %v4246 = vmul.f32 1.0, %v4245
    %v4247 = vrcp.pop %v4243
    %v4248 = vmul.f32 1.0, %v4247
    %v4249 = vrcp.pop %v4244
    %v4250 = vmul.f32 1.0, %v4249
    %v4251 = vtanh.pop %v4232
    %v4252 = vmul.f32 %v4248, %v3765
    %v4253 = vmul.f32 %v4246, %v4251
    %v4254 = vadd.f32 %v4252, %v4253
    %v4255 = vtanh.pop %v4254
    %v4256 = vmul.f32 %v4250, %v4255
    %4257 = vmatprep.subr.mxu0 %v831
    %4258 = vmatpush1.msra.mxu0 %v830
    %4259 = vmatprep.subr.mxu0 %v827
    %4260 = vmatpush1.msra.mxu0 %v826
    %4261 = vmatprep.subr.mxu0 %v823
    %4262 = vmatpush1.msra.mxu0 %v822
    %4263 = vmatprep.subr.mxu0 %v819
    %4264 = vmatpush1.msra.mxu0 %v818
    %4265 = vmatprep.subr.mxu0 %v815
    %4266 = vmatpush1.msra.mxu0 %v814
    %4267 = vmatprep.subr.mxu0 %v811
    %4268 = vmatpush1.msra.mxu0 %v810
    %4269 = vmatprep.subr.mxu0 %v807
    %4270 = vmatpush1.msra.mxu0 %v806
    %4271 = vmatprep.subr.mxu0 %v803
    %4272 = vmatpush1.msra.mxu0 %v802
    %4273 = vmatprep.subr.mxu0 %v799
    %4274 = vmatpush1.msra.mxu0 %v798
    %4275 = vmatprep.subr.mxu0 %v795
    %4276 = vmatpush1.msra.mxu0 %v794
    %4277 = vmatprep.subr.mxu0 %v791
    %4278 = vmatpush1.msra.mxu0 %v790
    %4279 = vmatprep.subr.mxu0 %v787
    %4280 = vmatpush1.msra.mxu0 %v786
    %4281 = vmatprep.subr.mxu0 %v783
    %4282 = vmatpush1.msra.mxu0 %v782
    %4283 = vmatprep.subr.mxu0 %v779
    %4284 = vmatpush1.msra.mxu0 %v778
    %4285 = vmatprep.subr.mxu0 %v775
    %4286 = vmatpush1.msra.mxu0 %v774
    %4287 = vmatprep.subr.mxu0 %v771
    %4288 = vmatpush1.msra.mxu0 %v770
    %4289 = vmatprep.subr.mxu0 0.0
    %4290 = vmatpush2.msra.mxu0 0.0
    %4291 = vmatprep.subr.mxu0 0.0
    %4292 = vmatpush2.msra.mxu0 0.0
    %4293 = vmatprep.subr.mxu0 0.0
    %4294 = vmatpush2.msra.mxu0 0.0
    %4295 = vmatprep.subr.mxu0 0.0
    %4296 = vmatpush2.msra.mxu0 0.0
    %4297 = vmatprep.subr.mxu0 0.0
    %4298 = vmatpush2.msra.mxu0 0.0
    %4299 = vmatprep.subr.mxu0 0.0
    %4300 = vmatpush2.msra.mxu0 0.0
    %4301 = vmatprep.subr.mxu0 0.0
    %4302 = vmatpush2.msra.mxu0 0.0
    %4303 = vmatprep.subr.mxu0 0.0
    %4304 = vmatpush2.msra.mxu0 0.0
    %4305 = vmatprep.subr.mxu0 0.0
    %4306 = vmatpush2.msra.mxu0 0.0
    %4307 = vmatprep.subr.mxu0 0.0
    %4308 = vmatpush2.msra.mxu0 0.0
    %4309 = vmatprep.subr.mxu0 0.0
    %4310 = vmatpush2.msra.mxu0 0.0
    %4311 = vmatprep.subr.mxu0 0.0
    %4312 = vmatpush2.msra.mxu0 0.0
    %4313 = vmatprep.subr.mxu0 0.0
    %4314 = vmatpush2.msra.mxu0 0.0
    %4315 = vmatprep.subr.mxu0 0.0
    %4316 = vmatpush2.msra.mxu0 0.0
    %4317 = vmatprep.subr.mxu0 0.0
    %4318 = vmatpush2.msra.mxu0 0.0
    %4319 = vmatprep.subr.mxu0 0.0
    %4320 = vmatpush2.msra.mxu0 0.0
    %4321 = vmatprep.mubr.f32.mxu0 0.0
    %4322 = vmatmul.mubr.f32.gmra.mxu0 %v4256
    %v4323 = vpop.f32.mrf.mxu0
    %v4324 = vadd.f32 0.0, %v4323
    %v4325 = vpop.f32.mrf.mxu0
    %v4326 = vadd.f32 0.0, %v4325
    %4327 = vdwg.mxu0
    %4328 = vmatprep.subr.mxu0 %v833
    %4329 = vmatpush1.msra.mxu0 %v832
    %4330 = vmatprep.subr.mxu0 %v829
    %4331 = vmatpush1.msra.mxu0 %v828
    %4332 = vmatprep.subr.mxu0 %v825
    %4333 = vmatpush1.msra.mxu0 %v824
    %4334 = vmatprep.subr.mxu0 %v821
    %4335 = vmatpush1.msra.mxu0 %v820
    %4336 = vmatprep.subr.mxu0 %v817
    %4337 = vmatpush1.msra.mxu0 %v816
    %4338 = vmatprep.subr.mxu0 %v813
    %4339 = vmatpush1.msra.mxu0 %v812
    %4340 = vmatprep.subr.mxu0 %v809
    %4341 = vmatpush1.msra.mxu0 %v808
    %4342 = vmatprep.subr.mxu0 %v805
    %4343 = vmatpush1.msra.mxu0 %v804
    %4344 = vmatprep.subr.mxu0 %v801
    %4345 = vmatpush1.msra.mxu0 %v800
    %4346 = vmatprep.subr.mxu0 %v797
    %4347 = vmatpush1.msra.mxu0 %v796
    %4348 = vmatprep.subr.mxu0 %v793
    %4349 = vmatpush1.msra.mxu0 %v792
    %4350 = vmatprep.subr.mxu0 %v789
    %4351 = vmatpush1.msra.mxu0 %v788
    %4352 = vmatprep.subr.mxu0 %v785
    %4353 = vmatpush1.msra.mxu0 %v784
    %4354 = vmatprep.subr.mxu0 %v781
    %4355 = vmatpush1.msra.mxu0 %v780
    %4356 = vmatprep.subr.mxu0 %v777
    %4357 = vmatpush1.msra.mxu0 %v776
    %4358 = vmatprep.subr.mxu0 %v773
    %4359 = vmatpush1.msra.mxu0 %v772
    %4360 = vmatprep.subr.mxu0 0.0
    %4361 = vmatpush2.msra.mxu0 0.0
    %4362 = vmatprep.subr.mxu0 0.0
    %4363 = vmatpush2.msra.mxu0 0.0
    %4364 = vmatprep.subr.mxu0 0.0
    %4365 = vmatpush2.msra.mxu0 0.0
    %4366 = vmatprep.subr.mxu0 0.0
    %4367 = vmatpush2.msra.mxu0 0.0
    %4368 = vmatprep.subr.mxu0 0.0
    %4369 = vmatpush2.msra.mxu0 0.0
    %4370 = vmatprep.subr.mxu0 0.0
    %4371 = vmatpush2.msra.mxu0 0.0
    %4372 = vmatprep.subr.mxu0 0.0
    %4373 = vmatpush2.msra.mxu0 0.0
    %4374 = vmatprep.subr.mxu0 0.0
    %4375 = vmatpush2.msra.mxu0 0.0
    %4376 = vmatprep.subr.mxu0 0.0
    %4377 = vmatpush2.msra.mxu0 0.0
    %4378 = vmatprep.subr.mxu0 0.0
    %4379 = vmatpush2.msra.mxu0 0.0
    %4380 = vmatprep.subr.mxu0 0.0
    %4381 = vmatpush2.msra.mxu0 0.0
    %4382 = vmatprep.subr.mxu0 0.0
    %4383 = vmatpush2.msra.mxu0 0.0
    %4384 = vmatprep.subr.mxu0 0.0
    %4385 = vmatpush2.msra.mxu0 0.0
    %4386 = vmatprep.subr.mxu0 0.0
    %4387 = vmatpush2.msra.mxu0 0.0
    %4388 = vmatprep.subr.mxu0 0.0
    %4389 = vmatpush2.msra.mxu0 0.0
    %4390 = vmatprep.subr.mxu0 0.0
    %4391 = vmatpush2.msra.mxu0 0.0
    %4392 = vmatprep.mubr.f32.mxu0 0.0
    %4393 = vmatmul.mubr.f32.gmra.mxu0 %v4256
    %v4394 = vpop.f32.mrf.mxu0
    %v4395 = vadd.f32 0.0, %v4394
    %v4396 = vpop.f32.mrf.mxu0
    %v4397 = vadd.f32 0.0, %v4396
    %4398 = vdwg.mxu0
    %4399 = vmatprep.subr.mxu0 %v767
    %4400 = vmatpush1.msra.mxu0 %v766
    %4401 = vmatprep.subr.mxu0 %v763
    %4402 = vmatpush1.msra.mxu0 %v762
    %4403 = vmatprep.subr.mxu0 %v759
    %4404 = vmatpush1.msra.mxu0 %v758
    %4405 = vmatprep.subr.mxu0 %v755
    %4406 = vmatpush1.msra.mxu0 %v754
    %4407 = vmatprep.subr.mxu0 %v751
    %4408 = vmatpush1.msra.mxu0 %v750
    %4409 = vmatprep.subr.mxu0 %v747
    %4410 = vmatpush1.msra.mxu0 %v746
    %4411 = vmatprep.subr.mxu0 %v743
    %4412 = vmatpush1.msra.mxu0 %v742
    %4413 = vmatprep.subr.mxu0 %v739
    %4414 = vmatpush1.msra.mxu0 %v738
    %4415 = vmatprep.subr.mxu0 %v735
    %4416 = vmatpush1.msra.mxu0 %v734
    %4417 = vmatprep.subr.mxu0 %v731
    %4418 = vmatpush1.msra.mxu0 %v730
    %4419 = vmatprep.subr.mxu0 %v727
    %4420 = vmatpush1.msra.mxu0 %v726
    %4421 = vmatprep.subr.mxu0 %v723
    %4422 = vmatpush1.msra.mxu0 %v722
    %4423 = vmatprep.subr.mxu0 %v719
    %4424 = vmatpush1.msra.mxu0 %v718
    %4425 = vmatprep.subr.mxu0 %v715
    %4426 = vmatpush1.msra.mxu0 %v714
    %4427 = vmatprep.subr.mxu0 %v711
    %4428 = vmatpush1.msra.mxu0 %v710
    %4429 = vmatprep.subr.mxu0 %v707
    %4430 = vmatpush1.msra.mxu0 %v706
    %4431 = vmatprep.subr.mxu0 0.0
    %4432 = vmatpush2.msra.mxu0 0.0
    %4433 = vmatprep.subr.mxu0 0.0
    %4434 = vmatpush2.msra.mxu0 0.0
    %4435 = vmatprep.subr.mxu0 0.0
    %4436 = vmatpush2.msra.mxu0 0.0
    %4437 = vmatprep.subr.mxu0 0.0
    %4438 = vmatpush2.msra.mxu0 0.0
    %4439 = vmatprep.subr.mxu0 0.0
    %4440 = vmatpush2.msra.mxu0 0.0
    %4441 = vmatprep.subr.mxu0 0.0
    %4442 = vmatpush2.msra.mxu0 0.0
    %4443 = vmatprep.subr.mxu0 0.0
    %4444 = vmatpush2.msra.mxu0 0.0
    %4445 = vmatprep.subr.mxu0 0.0
    %4446 = vmatpush2.msra.mxu0 0.0
    %4447 = vmatprep.subr.mxu0 0.0
    %4448 = vmatpush2.msra.mxu0 0.0
    %4449 = vmatprep.subr.mxu0 0.0
    %4450 = vmatpush2.msra.mxu0 0.0
    %4451 = vmatprep.subr.mxu0 0.0
    %4452 = vmatpush2.msra.mxu0 0.0
    %4453 = vmatprep.subr.mxu0 0.0
    %4454 = vmatpush2.msra.mxu0 0.0
    %4455 = vmatprep.subr.mxu0 0.0
    %4456 = vmatpush2.msra.mxu0 0.0
    %4457 = vmatprep.subr.mxu0 0.0
    %4458 = vmatpush2.msra.mxu0 0.0
    %4459 = vmatprep.subr.mxu0 0.0
    %4460 = vmatpush2.msra.mxu0 0.0
    %4461 = vmatprep.subr.mxu0 0.0
    %4462 = vmatpush2.msra.mxu0 0.0
    %4463 = vmatprep.mubr.f32.mxu0 0.0
    %4464 = vmatmul.mubr.f32.gmra.mxu0 %v4079
    %v4465 = vpop.f32.mrf.mxu0
    %v4466 = vadd.f32 %v4324, %v4465
    %v4467 = vpop.f32.mrf.mxu0
    %v4468 = vadd.f32 %v4326, %v4467
    %4469 = vdwg.mxu0
    %4470 = vmatprep.subr.mxu0 %v769
    %4471 = vmatpush1.msra.mxu0 %v768
    %4472 = vmatprep.subr.mxu0 %v765
    %4473 = vmatpush1.msra.mxu0 %v764
    %4474 = vmatprep.subr.mxu0 %v761
    %4475 = vmatpush1.msra.mxu0 %v760
    %4476 = vmatprep.subr.mxu0 %v757
    %4477 = vmatpush1.msra.mxu0 %v756
    %4478 = vmatprep.subr.mxu0 %v753
    %4479 = vmatpush1.msra.mxu0 %v752
    %4480 = vmatprep.subr.mxu0 %v749
    %4481 = vmatpush1.msra.mxu0 %v748
    %4482 = vmatprep.subr.mxu0 %v745
    %4483 = vmatpush1.msra.mxu0 %v744
    %4484 = vmatprep.subr.mxu0 %v741
    %4485 = vmatpush1.msra.mxu0 %v740
    %4486 = vmatprep.subr.mxu0 %v737
    %4487 = vmatpush1.msra.mxu0 %v736
    %4488 = vmatprep.subr.mxu0 %v733
    %4489 = vmatpush1.msra.mxu0 %v732
    %4490 = vmatprep.subr.mxu0 %v729
    %4491 = vmatpush1.msra.mxu0 %v728
    %4492 = vmatprep.subr.mxu0 %v725
    %4493 = vmatpush1.msra.mxu0 %v724
    %4494 = vmatprep.subr.mxu0 %v721
    %4495 = vmatpush1.msra.mxu0 %v720
    %4496 = vmatprep.subr.mxu0 %v717
    %4497 = vmatpush1.msra.mxu0 %v716
    %4498 = vmatprep.subr.mxu0 %v713
    %4499 = vmatpush1.msra.mxu0 %v712
    %4500 = vmatprep.subr.mxu0 %v709
    %4501 = vmatpush1.msra.mxu0 %v708
    %4502 = vmatprep.subr.mxu0 0.0
    %4503 = vmatpush2.msra.mxu0 0.0
    %4504 = vmatprep.subr.mxu0 0.0
    %4505 = vmatpush2.msra.mxu0 0.0
    %4506 = vmatprep.subr.mxu0 0.0
    %4507 = vmatpush2.msra.mxu0 0.0
    %4508 = vmatprep.subr.mxu0 0.0
    %4509 = vmatpush2.msra.mxu0 0.0
    %4510 = vmatprep.subr.mxu0 0.0
    %4511 = vmatpush2.msra.mxu0 0.0
    %4512 = vmatprep.subr.mxu0 0.0
    %4513 = vmatpush2.msra.mxu0 0.0
    %4514 = vmatprep.subr.mxu0 0.0
    %4515 = vmatpush2.msra.mxu0 0.0
    %4516 = vmatprep.subr.mxu0 0.0
    %4517 = vmatpush2.msra.mxu0 0.0
    %4518 = vmatprep.subr.mxu0 0.0
    %4519 = vmatpush2.msra.mxu0 0.0
    %4520 = vmatprep.subr.mxu0 0.0
    %4521 = vmatpush2.msra.mxu0 0.0
    %4522 = vmatprep.subr.mxu0 0.0
    %4523 = vmatpush2.msra.mxu0 0.0
    %4524 = vmatprep.subr.mxu0 0.0
    %4525 = vmatpush2.msra.mxu0 0.0
    %4526 = vmatprep.subr.mxu0 0.0
    %4527 = vmatpush2.msra.mxu0 0.0
    %4528 = vmatprep.subr.mxu0 0.0
    %4529 = vmatpush2.msra.mxu0 0.0
    %4530 = vmatprep.subr.mxu0 0.0
    %4531 = vmatpush2.msra.mxu0 0.0
    %4532 = vmatprep.subr.mxu0 0.0
    %4533 = vmatpush2.msra.mxu0 0.0
    %4534 = vmatprep.mubr.f32.mxu0 0.0
    %4535 = vmatmul.mubr.f32.gmra.mxu0 %v4079
    %v4536 = vpop.f32.mrf.mxu0
    %v4537 = vadd.f32 %v4395, %v4536
    %v4538 = vpop.f32.mrf.mxu0
    %v4539 = vadd.f32 %v4397, %v4538
    %4540 = vdwg.mxu0
    %v4541 = vadd.f32 %v4466, %v448
    %v4542 = vadd.f32 %v4468, %v452
    %v4543 = vadd.f32 %v4537, %v456
    %v4544 = vadd.f32 %v4539, %v460
    %v4545 = vxor.u32 %v4541, 2147483648
    %v4546 = vxor.u32 %v4542, 2147483648
    %v4547 = vxor.u32 %v4543, 2147483648
    %v4548 = vmul.f32 %v4545, 1.442695
    %v4549 = vpow.pop %v4548
    %v4550 = vmul.f32 %v4546, 1.442695
    %v4551 = vpow.pop %v4550
    %v4552 = vmul.f32 %v4547, 1.442695
    %v4553 = vpow.pop %v4552
    %v4554 = vadd.f32 %v4549, 1.0
    %v4555 = vadd.f32 %v4551, 1.0
    %v4556 = vadd.f32 %v4553, 1.0
    %v4557 = vrcp.pop %v4554
    %v4558 = vmul.f32 1.0, %v4557
    %v4559 = vrcp.pop %v4555
    %v4560 = vmul.f32 1.0, %v4559
    %v4561 = vrcp.pop %v4556
    %v4562 = vmul.f32 1.0, %v4561
    %v4563 = vtanh.pop %v4544
    %v4564 = vmul.f32 %v4560, %v4077
    %v4565 = vmul.f32 %v4558, %v4563
    %v4566 = vadd.f32 %v4564, %v4565
    %v4567 = vtanh.pop %v4566
    %v4568 = vmul.f32 %v4562, %v4567
    %v4569 = vld [vmem:[#allocation11] sm:$0xff]
    %v4570 = vld [vmem:[#allocation11 + $0x8] sm:$0xff]
    %v4571 = vld [vmem:[#allocation11 + $0x10] sm:$0xff]
    %v4572 = vld [vmem:[#allocation11 + $0x18] sm:$0xff]
    %v4573 = vld [vmem:[#allocation11 + $0x20] sm:$0xff]
    %v4574 = vld [vmem:[#allocation11 + $0x28] sm:$0xff]
    %v4575 = vld [vmem:[#allocation11 + $0x30] sm:$0xff]
    %v4576 = vld [vmem:[#allocation11 + $0x38] sm:$0xff]
    %v4577 = vld [vmem:[#allocation11 + $0x40] sm:$0xff]
    %v4578 = vld [vmem:[#allocation11 + $0x48] sm:$0xff]
    %v4579 = vld [vmem:[#allocation11 + $0x50] sm:$0xff]
    %v4580 = vld [vmem:[#allocation11 + $0x58] sm:$0xff]
    %v4581 = vld [vmem:[#allocation11 + $0x60] sm:$0xff]
    %v4582 = vld [vmem:[#allocation11 + $0x68] sm:$0xff]
    %v4583 = vld [vmem:[#allocation11 + $0x70] sm:$0xff]
    %v4584 = vld [vmem:[#allocation11 + $0x78] sm:$0xff]
    %v4585 = vld [vmem:[%s8] sm:$0x1]
    %v4587 = vlaneseq
    %v4588 = vshrl.u32 %v4587, 7
    %v4589 = vsub.s32 0, %v4588
    %v4590 = vrot.slane %v4585, %v4589
    %4592 = vmatprep.subr.mxu0 0.0
    %4593 = vmatpush1.msra.mxu0 %v4584
    %4594 = vmatprep.subr.mxu0 0.0
    %4595 = vmatpush1.msra.mxu0 %v4583
    %4596 = vmatprep.subr.mxu0 0.0
    %4597 = vmatpush1.msra.mxu0 %v4582
    %4598 = vmatprep.subr.mxu0 0.0
    %4599 = vmatpush1.msra.mxu0 %v4581
    %4600 = vmatprep.subr.mxu0 0.0
    %4601 = vmatpush1.msra.mxu0 %v4580
    %4602 = vmatprep.subr.mxu0 0.0
    %4603 = vmatpush1.msra.mxu0 %v4579
    %4604 = vmatprep.subr.mxu0 0.0
    %4605 = vmatpush1.msra.mxu0 %v4578
    %4606 = vmatprep.subr.mxu0 0.0
    %4607 = vmatpush1.msra.mxu0 %v4577
    %4608 = vmatprep.subr.mxu0 0.0
    %4609 = vmatpush1.msra.mxu0 %v4576
    %4610 = vmatprep.subr.mxu0 0.0
    %4611 = vmatpush1.msra.mxu0 %v4575
    %4612 = vmatprep.subr.mxu0 0.0
    %4613 = vmatpush1.msra.mxu0 %v4574
    %4614 = vmatprep.subr.mxu0 0.0
    %4615 = vmatpush1.msra.mxu0 %v4573
    %4616 = vmatprep.subr.mxu0 0.0
    %4617 = vmatpush1.msra.mxu0 %v4572
    %4618 = vmatprep.subr.mxu0 0.0
    %4619 = vmatpush1.msra.mxu0 %v4571
    %4620 = vmatprep.subr.mxu0 0.0
    %4621 = vmatpush1.msra.mxu0 %v4570
    %4622 = vmatprep.subr.mxu0 0.0
    %4623 = vmatpush1.msra.mxu0 %v4569
    %4624 = vmatprep.subr.mxu0 0.0
    %4625 = vmatpush2.msra.mxu0 0.0
    %4626 = vmatprep.subr.mxu0 0.0
    %4627 = vmatpush2.msra.mxu0 0.0
    %4628 = vmatprep.subr.mxu0 0.0
    %4629 = vmatpush2.msra.mxu0 0.0
    %4630 = vmatprep.subr.mxu0 0.0
    %4631 = vmatpush2.msra.mxu0 0.0
    %4632 = vmatprep.subr.mxu0 0.0
    %4633 = vmatpush2.msra.mxu0 0.0
    %4634 = vmatprep.subr.mxu0 0.0
    %4635 = vmatpush2.msra.mxu0 0.0
    %4636 = vmatprep.subr.mxu0 0.0
    %4637 = vmatpush2.msra.mxu0 0.0
    %4638 = vmatprep.subr.mxu0 0.0
    %4639 = vmatpush2.msra.mxu0 0.0
    %4640 = vmatprep.subr.mxu0 0.0
    %4641 = vmatpush2.msra.mxu0 0.0
    %4642 = vmatprep.subr.mxu0 0.0
    %4643 = vmatpush2.msra.mxu0 0.0
    %4644 = vmatprep.subr.mxu0 0.0
    %4645 = vmatpush2.msra.mxu0 0.0
    %4646 = vmatprep.subr.mxu0 0.0
    %4647 = vmatpush2.msra.mxu0 0.0
    %4648 = vmatprep.subr.mxu0 0.0
    %4649 = vmatpush2.msra.mxu0 0.0
    %4650 = vmatprep.subr.mxu0 0.0
    %4651 = vmatpush2.msra.mxu0 0.0
    %4652 = vmatprep.subr.mxu0 0.0
    %4653 = vmatpush2.msra.mxu0 0.0
    %4654 = vmatprep.subr.mxu0 0.0
    %4655 = vmatpush2.msra.mxu0 0.0
    %4656 = vmatprep.mubr.f32.mxu0 0.0
    %4657 = vmatmul.mubr.f32.gmra.mxu0 %v4568
    %v4658 = vpop.f32.mrf.mxu0
    %v4659 = vadd.f32 %v4590, %v4658
    %v4660 = vpop.f32.mrf.mxu0
    %4661 = vdwg.mxu0
    %4662 = vst [vmem:[#allocation12] sm:$0xff] %v4659
    // Predicated region
    $region58: #{tpu_custom_call.1} parent=1 // pred_check
      _
    $region59: #{tpu_custom_call.1} parent=1 // pred_check_branch
      %4664 = sbr.rel (0) target = $region61
    $region60: #{tpu_custom_call.1} parent=1 // pred_region
      %s4666 = ssub.s32 128, 128
      %4667 = vsyncadd [#allocation5], %s4666
      %s4669 = sshll.u32 [#allocation12], 4
      %s4670 = int_to_ptr.vmem [resolvable:$true] %s4669
      %4672 = dma.vmem_to_hbm [thread:$0]  %s4670, 128, %s9, [#allocation5]
    $region61: #{tpu_custom_call.1} parent=1 // pred_fallthru
      _
    // Predicated region
    $region62: #{tpu_custom_call.1} parent=1 // pred_check
      _
    $region63: #{tpu_custom_call.1} parent=1 // pred_check_branch
      %4674 = sbr.rel (0) target = $region65
    $region64: #{tpu_custom_call.1} parent=1 // pred_region
      %4675 = dma.done [#allocation5], 128
    $region65: #{tpu_custom_call.1} parent=1 // pred_fallthru
      _
    %4676 = vsyncpa [#allocation4], 1
    %4677 = vsyncpa [#allocation7], 1
    %4678 = vsyncpa [#allocation10], 1
    %4679 = vsyncpa [#allocation5], 1

</llo_original>
